<compile_context>
chip_gen: v7x
topology: tpu7x:2x2x1
jax: 0.10.0
libtpu: 0.0.40
codegen_flags: <defaults>
</compile_context>

<pallas_src>
import numpy as np
import jax
import jax.numpy as jnp
from jax import lax
from jax.experimental import pallas as pl
from jax.experimental.pallas import tpu as pltpu

# ------------------------- configuration -------------------------
B = 2
C_IN = 4
H = W = 16
HW = H * W
CONV_DIMS = 32
NUM_CLASSES = 8
COMMON_STRIDE = 4
OH, OW = H * COMMON_STRIDE, W * COMMON_STRIDE
OHW = OH * OW


# ------------------------- fused Pallas kernel -------------------------

def _danet_fused_kernel(pt_ref, wc_ref, bc_ref, wp_ref, bp_ref, kron_ref, out_ref):
    """conv3x3(PAM)+conv3x3(CAM) -> PAM & CAM attention -> 1x1 predictor -> 4x bilinear.

    Everything is channel-major: (channels, HW) with HW=256 on lanes.
    """
    # ---- both 3x3 convs as one matmul (weights stacked on the Cout axis) ----
    conv = jnp.maximum(
        jnp.dot(wc_ref[...], pt_ref[...], preferred_element_type=jnp.float32)
        + bc_ref[...], 0.0)                                   # (2C, HW) = (64, 256)
    pam = conv[:CONV_DIMS, :]                                 # (C, HW)
    cam = conv[CONV_DIMS:, :]                                 # (C, HW)

    # ---- position attention (PAM): softmax_q(P^T P) applied to pam ----
    s_pp = lax.dot_general(pam, pam, (((0,), (0,)), ((), ())),
                           preferred_element_type=jnp.float32)      # (HW, HW)
    # Global-max stabilizer keeps e_pp symmetric -> its row sums equal its column
    # sums, which come out lane-oriented (1, HW) for free (deferred normalization).
    m_all = jnp.max(jnp.max(s_pp, axis=1, keepdims=True), axis=0, keepdims=True)
    e_pp = jnp.exp(s_pp - m_all)                                     # (HW, HW)
    denom_p = jnp.sum(e_pp, axis=0, keepdims=True)                   # (1, HW) row sums
    acc_p = lax.dot_general(pam, e_pp, (((1,), (1,)), ((), ())),
                            preferred_element_type=jnp.float32)      # (C, HW)
    sum_pam = pam + acc_p * pl.reciprocal(denom_p, approx=True)

    # ---- channel attention (CAM): softmax_cj(A A^T) applied to cam ----
    s_cc = lax.dot_general(cam, cam, (((1,), (1,)), ((), ())),
                           preferred_element_type=jnp.float32)       # (C, C)
    e_cc = jnp.exp(s_cc - jnp.max(s_cc, axis=1, keepdims=True))
    denom_c = jnp.sum(e_cc, axis=1, keepdims=True)                   # (C, 1)
    acc_c = jnp.dot(e_cc, cam, preferred_element_type=jnp.float32)   # (C, HW)
    sum_cam = cam + acc_c * pl.reciprocal(denom_c, approx=True)

    feat = sum_pam + sum_cam                                         # (C, HW)

    # ---- 1x1 predictor conv ----
    logits = jnp.dot(wp_ref[...], feat,
                     preferred_element_type=jnp.float32) + bp_ref[...]   # (K, HW)

    # ---- bilinear 4x upsample == one matmul against Kronecker(Mh, Mw) ----
    # Output block is (K, OH*OW) = (8, 4096): lane-dense and already NCHW-flat.
    out_ref[...] = jnp.dot(logits.astype(jnp.bfloat16), kron_ref[...],
                           preferred_element_type=jnp.float32)


def danet_head_fused(patches_t, w_conv, b_conv, w_pred, b_pred, kron_bf16):
    """patches_t: (B, 9*Cin, HW); w_conv: (2C, 9*Cin); b_conv: (2C, 1);
    w_pred: (K, C); b_pred: (K, 1); kron_bf16: (HW, OH*OW) -> (B, K, OH, OW)."""
    b = patches_t.shape[0]
    out = pl.pallas_call(
        _danet_fused_kernel,
        out_shape=jax.ShapeDtypeStruct((b, NUM_CLASSES, OHW), jnp.float32),
        grid=(b,),
        in_specs=[
            pl.BlockSpec((None, 9 * C_IN, HW), lambda i: (i, 0, 0)),
            pl.BlockSpec((2 * CONV_DIMS, 9 * C_IN), lambda i: (0, 0)),
            pl.BlockSpec((2 * CONV_DIMS, 1), lambda i: (0, 0)),
            pl.BlockSpec((NUM_CLASSES, CONV_DIMS), lambda i: (0, 0)),
            pl.BlockSpec((NUM_CLASSES, 1), lambda i: (0, 0)),
            pl.BlockSpec((HW, OHW), lambda i: (0, 0)),
        ],
        out_specs=pl.BlockSpec((None, NUM_CLASSES, OHW), lambda i: (i, 0, 0)),
        compiler_params=pltpu.CompilerParams(
            dimension_semantics=("parallel",)),
    )(patches_t, w_conv, b_conv, w_pred, b_pred, kron_bf16)
    return out.reshape(b, NUM_CLASSES, OH, OW)   # already NCHW order: free reshape


# ------------------------- glue (plain JAX / numpy) -------------------------

def im2col_channel_major(x_nchw):
    """(B, Cin, H, W) -> (B, 9*Cin, H*W) patches for a stride-1, pad-1, 3x3 conv.

    Row index = (kh*3 + kw)*Cin + ci ; column index p = h*W + w.
    """
    b, c, h, w = x_nchw.shape
    xp = jnp.pad(x_nchw, ((0, 0), (0, 0), (1, 1), (1, 1)))
    cols = [xp[:, :, kh:kh + h, kw:kw + w] for kh in range(3) for kw in range(3)]
    return jnp.concatenate(cols, axis=1).reshape(b, 9 * c, h * w)


def bilinear_matrix(in_size, out_size):
    """PyTorch F.interpolate(mode='bilinear', align_corners=False) as a matrix."""
    m = np.zeros((out_size, in_size), dtype=np.float32)
    scale = in_size / out_size
    for o in range(out_size):
        src = max((o + 0.5) * scale - 0.5, 0.0)
        i0 = min(int(np.floor(src)), in_size - 1)
        i1 = min(i0 + 1, in_size - 1)
        w1 = src - i0
        m[o, i0] += 1.0 - w1
        m[o, i1] += w1
    return m


def make_upsample_kron(mh, mw):
    """Kron[h*W+w, oh*OW+ow] = Mh[oh,h] * Mw[ow,w]; entries are exact in bf16."""
    k4 = np.einsum('Oh,Pw->hwOP', mh, mw).astype(np.float32)
    return jnp.asarray(k4.reshape(H * W, OH * OW), jnp.bfloat16)


@jax.jit
def danet_head_forward(x_nchw, w_conv, b_conv, w_pred, b_pred, kron_bf16):
    patches_t = im2col_channel_major(x_nchw)                  # (B, 36, HW)
    return danet_head_fused(patches_t, w_conv, b_conv, w_pred, b_pred, kron_bf16)


def reference_forward(x_nchw, w_conv, b_conv, w_pred, b_pred, mh, mw):
    """Pure-jnp reference mirroring the PyTorch forward (eval path)."""
    pt = im2col_channel_major(x_nchw)                                   # (B, 36, HW)
    conv = jnp.maximum(jnp.einsum('oc,bcp->bop', w_conv, pt) + b_conv[None], 0.0)
    pam, cam = conv[:, :CONV_DIMS], conv[:, CONV_DIMS:]                 # (B, C, HW)
    wp = jax.nn.softmax(jnp.einsum('bcp,bcq->bpq', pam, pam), axis=-1)
    sum_pam = pam + jnp.einsum('bpq,bcq->bcp', wp, pam)
    wc = jax.nn.softmax(jnp.einsum('bip,bjp->bij', cam, cam), axis=-1)
    sum_cam = cam + jnp.einsum('bij,bjp->bip', wc, cam)
    feat = sum_pam + sum_cam
    logits = jnp.einsum('kc,bcp->bkp', w_pred, feat) + b_pred[None]     # (B, K, HW)
    y = logits.reshape(x_nchw.shape[0], NUM_CLASSES, H, W)
    return jnp.einsum('Oh,bkhw,Pw->bkOP', mh, y, mw)


# ------------------------- main -------------------------

if __name__ == "__main__":
    key = jax.random.PRNGKey(0)
    ks = jax.random.split(key, 5)

    # PyTorch-convention NCHW input feature map.
    x = jax.random.normal(ks[0], (B, C_IN, H, W), jnp.float32)

    # Deterministic synthetic parameters (msra-style scale; biases small).
    # 3x3 conv weights for the PAM head (rows 0..31) and CAM head (rows 32..63)
    # are stacked and stored directly in im2col layout (Cout_total, 9*Cin);
    # the 1x1 predictor is (num_classes, Cout) -- the PyTorch (out, in) layout.
    w_conv = 0.10 * jax.random.normal(ks[1], (2 * CONV_DIMS, 9 * C_IN), jnp.float32)
    b_conv = 0.01 * jax.random.normal(ks[2], (2 * CONV_DIMS, 1), jnp.float32)
    w_pred = 0.15 * jax.random.normal(ks[3], (NUM_CLASSES, CONV_DIMS), jnp.float32)
    b_pred = 0.01 * jax.random.normal(ks[4], (NUM_CLASSES, 1), jnp.float32)

    mh = bilinear_matrix(H, OH)
    mw = bilinear_matrix(W, OW)
    kron_bf16 = make_upsample_kron(mh, mw)                    # (HW, OH*OW) bf16

    out = danet_head_forward(x, w_conv, b_conv, w_pred, b_pred, kron_bf16)
    out = jax.block_until_ready(out)
    assert out.shape == (B, NUM_CLASSES, OH, OW) and out.dtype == jnp.float32

    ref = jax.block_until_ready(
        reference_forward(x, w_conv, b_conv, w_pred, b_pred,
                          jnp.asarray(mh), jnp.asarray(mw)))
    np.testing.assert_allclose(np.asarray(out), np.asarray(ref), rtol=3e-2, atol=3e-2)

    # TODO(synk): training-mode branch (F.cross_entropy w/ ignore_index) not implemented;
    # only the eval forward (x, {}) path is reproduced.
    print("KERNEL_OK")
</pallas_src>

<mosaic_0001>
module attributes {stable_mosaic.version = 11 : i64} {
  func.func @_danet_fused_kernel(%arg0: i32, %arg1: memref<1x36x256xf32, #tpu.memory_space<vmem>>, %arg2: memref<64x36xf32, #tpu.memory_space<vmem>>, %arg3: memref<64x1xf32, #tpu.memory_space<vmem>>, %arg4: memref<8x32xf32, #tpu.memory_space<vmem>>, %arg5: memref<8x1xf32, #tpu.memory_space<vmem>>, %arg6: memref<256x4096xbf16, #tpu.memory_space<vmem>>, %arg7: memref<1x8x4096xf32, #tpu.memory_space<vmem>>) attributes {dimension_semantics = [#tpu.dimension_semantics<parallel>], iteration_bounds = array<i64: 2>, scalar_prefetch = 0 : i64, scratch_operands = 0 : i64, tpu.core_type = #tpu.core_type<tc>, window_params = [{transform_indices = @transform_0, window_bounds = array<i64: 1, 36, 256>}, {pipeline_mode = #tpu.pipeline_mode<synchronous>, transform_indices = @transform_1, window_bounds = array<i64: 64, 36>}, {pipeline_mode = #tpu.pipeline_mode<synchronous>, transform_indices = @transform_2, window_bounds = array<i64: 64, 1>}, {pipeline_mode = #tpu.pipeline_mode<synchronous>, transform_indices = @transform_3, window_bounds = array<i64: 8, 32>}, {pipeline_mode = #tpu.pipeline_mode<synchronous>, transform_indices = @transform_4, window_bounds = array<i64: 8, 1>}, {pipeline_mode = #tpu.pipeline_mode<synchronous>, transform_indices = @transform_5, window_bounds = array<i64: 256, 4096>}, {transform_indices = @transform_6, window_bounds = array<i64: 1, 8, 4096>}]} {
    %c0 = arith.constant 0 : index
    %c0_0 = arith.constant 0 : index
    %0 = vector.load %arg2[%c0, %c0_0] : memref<64x36xf32, #tpu.memory_space<vmem>>, vector<64x36xf32>
    %c0_1 = arith.constant 0 : index
    %c0_2 = arith.constant 0 : index
    %c0_3 = arith.constant 0 : index
    %1 = vector.load %arg1[%c0_1, %c0_2, %c0_3] : memref<1x36x256xf32, #tpu.memory_space<vmem>>, vector<1x36x256xf32>
    %2 = vector.shape_cast %1 : vector<1x36x256xf32> to vector<36x256xf32>
    %cst = arith.constant dense<0.000000e+00> : vector<64x256xf32>
    %3 = tpu.matmul %0, %2, %cst {dimension_numbers = #tpu.dot_dimension_numbers<[1], [0], [0], [1], [0, 0, 1, 1], [], []>} : vector<64x36xf32>, vector<36x256xf32>, vector<64x256xf32> -> vector<64x256xf32>
    %c0_4 = arith.constant 0 : index
    %c0_5 = arith.constant 0 : index
    %4 = vector.load %arg3[%c0_4, %c0_5] : memref<64x1xf32, #tpu.memory_space<vmem>>, vector<64x1xf32>
    %5 = vector.broadcast %4 : vector<64x1xf32> to vector<64x256xf32>
    %6 = arith.addf %3, %5 : vector<64x256xf32>
    %cst_6 = arith.constant 0.000000e+00 : f32
    %7 = vector.broadcast %cst_6 : f32 to vector<64x256xf32>
    %8 = arith.maximumf %6, %7 : vector<64x256xf32>
    %9 = vector.extract_strided_slice %8 {offsets = [0, 0], sizes = [32, 256], strides = [1, 1]} : vector<64x256xf32> to vector<32x256xf32>
    %10 = vector.extract_strided_slice %8 {offsets = [32, 0], sizes = [32, 256], strides = [1, 1]} : vector<64x256xf32> to vector<32x256xf32>
    %cst_7 = arith.constant dense<0.000000e+00> : vector<256x256xf32>
    %11 = tpu.matmul %9, %9, %cst_7 {dimension_numbers = #tpu.dot_dimension_numbers<[0], [0], [1], [1], [0, 1, 1, 1], [], []>} : vector<32x256xf32>, vector<32x256xf32>, vector<256x256xf32> -> vector<256x256xf32>
    %cst_8 = arith.constant dense<0xFF800000> : vector<256xf32>
    %12 = vector.multi_reduction <maximumf>, %11, %cst_8 [1] : vector<256x256xf32> to vector<256xf32>
    %13 = vector.shape_cast %12 : vector<256xf32> to vector<256x1xf32>
    %cst_9 = arith.constant dense<0xFF800000> : vector<1xf32>
    %14 = vector.multi_reduction <maximumf>, %13, %cst_9 [0] : vector<256x1xf32> to vector<1xf32>
    %15 = vector.shape_cast %14 : vector<1xf32> to vector<1x1xf32>
    %16 = vector.broadcast %15 : vector<1x1xf32> to vector<256x256xf32>
    %17 = arith.subf %11, %16 : vector<256x256xf32>
    %18 = math.exp %17 : vector<256x256xf32>
    %cst_10 = arith.constant dense<0.000000e+00> : vector<256xf32>
    %19 = vector.multi_reduction <add>, %18, %cst_10 [0] : vector<256x256xf32> to vector<256xf32>
    %20 = vector.shape_cast %19 : vector<256xf32> to vector<1x256xf32>
    %cst_11 = arith.constant dense<0.000000e+00> : vector<32x256xf32>
    %21 = tpu.matmul %9, %18, %cst_11 {dimension_numbers = #tpu.dot_dimension_numbers<[1], [1], [0], [0], [0, 0, 1, 0], [], []>} : vector<32x256xf32>, vector<256x256xf32>, vector<32x256xf32> -> vector<32x256xf32>
    %22 = tpu.reciprocal %20 {approx = true} : vector<1x256xf32> -> vector<1x256xf32>
    %23 = vector.broadcast %22 : vector<1x256xf32> to vector<32x256xf32>
    %24 = arith.mulf %21, %23 : vector<32x256xf32>
    %25 = arith.addf %9, %24 : vector<32x256xf32>
    %cst_12 = arith.constant dense<0.000000e+00> : vector<32x32xf32>
    %26 = tpu.matmul %10, %10, %cst_12 {dimension_numbers = #tpu.dot_dimension_numbers<[1], [1], [0], [0], [0, 0, 1, 0], [], []>} : vector<32x256xf32>, vector<32x256xf32>, vector<32x32xf32> -> vector<32x32xf32>
    %cst_13 = arith.constant dense<0xFF800000> : vector<32xf32>
    %27 = vector.multi_reduction <maximumf>, %26, %cst_13 [1] : vector<32x32xf32> to vector<32xf32>
    %28 = vector.shape_cast %27 : vector<32xf32> to vector<32x1xf32>
    %29 = vector.broadcast %28 : vector<32x1xf32> to vector<32x32xf32>
    %30 = arith.subf %26, %29 : vector<32x32xf32>
    %31 = math.exp %30 : vector<32x32xf32>
    %cst_14 = arith.constant dense<0.000000e+00> : vector<32xf32>
    %32 = vector.multi_reduction <add>, %31, %cst_14 [1] : vector<32x32xf32> to vector<32xf32>
    %33 = vector.shape_cast %32 : vector<32xf32> to vector<32x1xf32>
    %cst_15 = arith.constant dense<0.000000e+00> : vector<32x256xf32>
    %34 = tpu.matmul %31, %10, %cst_15 {dimension_numbers = #tpu.dot_dimension_numbers<[1], [0], [0], [1], [0, 0, 1, 1], [], []>} : vector<32x32xf32>, vector<32x256xf32>, vector<32x256xf32> -> vector<32x256xf32>
    %35 = tpu.reciprocal %33 {approx = true} : vector<32x1xf32> -> vector<32x1xf32>
    %36 = vector.broadcast %35 : vector<32x1xf32> to vector<32x256xf32>
    %37 = arith.mulf %34, %36 : vector<32x256xf32>
    %38 = arith.addf %10, %37 : vector<32x256xf32>
    %39 = arith.addf %25, %38 : vector<32x256xf32>
    %c0_16 = arith.constant 0 : index
    %c0_17 = arith.constant 0 : index
    %40 = vector.load %arg4[%c0_16, %c0_17] : memref<8x32xf32, #tpu.memory_space<vmem>>, vector<8x32xf32>
    %cst_18 = arith.constant dense<0.000000e+00> : vector<8x256xf32>
    %41 = tpu.matmul %40, %39, %cst_18 {dimension_numbers = #tpu.dot_dimension_numbers<[1], [0], [0], [1], [0, 0, 1, 1], [], []>} : vector<8x32xf32>, vector<32x256xf32>, vector<8x256xf32> -> vector<8x256xf32>
    %c0_19 = arith.constant 0 : index
    %c0_20 = arith.constant 0 : index
    %42 = vector.load %arg5[%c0_19, %c0_20] : memref<8x1xf32, #tpu.memory_space<vmem>>, vector<8x1xf32>
    %43 = vector.broadcast %42 : vector<8x1xf32> to vector<8x256xf32>
    %44 = arith.addf %41, %43 : vector<8x256xf32>
    %45 = arith.truncf %44 : vector<8x256xf32> to vector<8x256xbf16>
    %c0_21 = arith.constant 0 : index
    %c0_22 = arith.constant 0 : index
    %46 = vector.load %arg6[%c0_21, %c0_22] : memref<256x4096xbf16, #tpu.memory_space<vmem>>, vector<256x4096xbf16>
    %cst_23 = arith.constant dense<0.000000e+00> : vector<8x4096xf32>
    %47 = tpu.matmul %45, %46, %cst_23 {dimension_numbers = #tpu.dot_dimension_numbers<[1], [0], [0], [1], [0, 0, 1, 1], [], []>} : vector<8x256xbf16>, vector<256x4096xbf16>, vector<8x4096xf32> -> vector<8x4096xf32>
    %c0_24 = arith.constant 0 : index
    %c0_25 = arith.constant 0 : index
    %c0_26 = arith.constant 0 : index
    %48 = vector.load %arg7[%c0_24, %c0_25, %c0_26] : memref<1x8x4096xf32, #tpu.memory_space<vmem>>, vector<1x8x4096xf32>
    %49 = vector.shape_cast %48 : vector<1x8x4096xf32> to vector<8x4096xf32>
    %50 = vector.shape_cast %47 : vector<8x4096xf32> to vector<1x8x4096xf32>
    tpu.vector_store %arg7[%c0_24, %c0_25, %c0_26], %50 {strides = array<i32>} : memref<1x8x4096xf32, #tpu.memory_space<vmem>>, vector<1x8x4096xf32>,
    return
  }
  func.func @transform_0(%arg0: i32) -> (i32, i32, i32) {
    %c0_i32 = arith.constant 0 : i32
    %c0_i32_0 = arith.constant 0 : i32
    %c0_i32_1 = arith.constant 0 : i32
    return %arg0, %c0_i32, %c0_i32_0 : i32, i32, i32
  }
  func.func @transform_1(%arg0: i32) -> (i32, i32) {
    %c0_i32 = arith.constant 0 : i32
    %c0_i32_0 = arith.constant 0 : i32
    %c0_i32_1 = arith.constant 0 : i32
    return %c0_i32, %c0_i32_0 : i32, i32
  }
  func.func @transform_2(%arg0: i32) -> (i32, i32) {
    %c0_i32 = arith.constant 0 : i32
    %c0_i32_0 = arith.constant 0 : i32
    %c0_i32_1 = arith.constant 0 : i32
    return %c0_i32, %c0_i32_0 : i32, i32
  }
  func.func @transform_3(%arg0: i32) -> (i32, i32) {
    %c0_i32 = arith.constant 0 : i32
    %c0_i32_0 = arith.constant 0 : i32
    %c0_i32_1 = arith.constant 0 : i32
    return %c0_i32, %c0_i32_0 : i32, i32
  }
  func.func @transform_4(%arg0: i32) -> (i32, i32) {
    %c0_i32 = arith.constant 0 : i32
    %c0_i32_0 = arith.constant 0 : i32
    %c0_i32_1 = arith.constant 0 : i32
    return %c0_i32, %c0_i32_0 : i32, i32
  }
  func.func @transform_5(%arg0: i32) -> (i32, i32) {
    %c0_i32 = arith.constant 0 : i32
    %c0_i32_0 = arith.constant 0 : i32
    %c0_i32_1 = arith.constant 0 : i32
    return %c0_i32, %c0_i32_0 : i32, i32
  }
  func.func @transform_6(%arg0: i32) -> (i32, i32, i32) {
    %c0_i32 = arith.constant 0 : i32
    %c0_i32_0 = arith.constant 0 : i32
    %c0_i32_1 = arith.constant 0 : i32
    return %arg0, %c0_i32, %c0_i32_0 : i32, i32, i32
  }
}

</mosaic_0001>

<llo_original>
// kernel: danet_head_forward.1
$region0: #{danet_head_forward.1}
  #allocation0 [shape = 'u32[]', space=smem, size = 0x4, offset = 0x4, fixed_abs, tag = 'smem constant byte address 0x4 - core index']
  #allocation1 [shape = 'u32[144,128]{1,0:T(1,128)}', space=vmem, size = 0x12000, scoped, tag = 'internal scratch']
  %s0 = inlined_call_operand.vmem [shape: f32[2,36,256], index: 0, kind: input, shape index: {}]
  %s1 = inlined_call_operand.vmem [shape: f32[64,36], index: 1, kind: input, shape index: {}]
  %s2 = inlined_call_operand.vmem [shape: f32[64,1], index: 2, kind: input, shape index: {}]
  %s3 = inlined_call_operand.vmem [shape: f32[8,32], index: 3, kind: input, shape index: {}]
  %s4 = inlined_call_operand.vmem [shape: f32[8,1], index: 4, kind: input, shape index: {}]
  %s5 = inlined_call_operand.vmem [shape: bf16[256,4096], index: 5, kind: input, shape index: {}]
  %s6 = inlined_call_operand.vmem [shape: f32[2,8,4096], index: 6, kind: output, shape index: {}]
  %s7 = sld [smem:[#allocation0]]
  $region57: #{danet_head_forward.1} parent=0
    _
  %s9 = ssub.s32 1, %s7
  %s10 = scalar_select 0, %s9, %s7
  loop: start=0, step=1, limit=4
  $region2: #{danet_head_forward.1} parent=0 // loop_pre_header
    _
  $region3: #{danet_head_forward.1} parent=0 // loop_header
    %s12 = sphi 0, %s16
    %p13 = scmp.ge.s32.totalorder %s12, 4
    %s22 = sphi 0, %s24
    %s25 = sphi 0, %s22
    %s26 = sphi 0, %s25
    %s42 = sphi 0, %s26
    %s46 = sphi 0, %s46
    %s48 = sphi 0, %s46
    %s49 = sphi 0, %s48
    %s63 = sphi 0, %s49
    %s67 = sphi 0, %s67
    %s69 = sphi 0, %s67
    %s70 = sphi 0, %s69
    %s84 = sphi 0, %s70
    %s88 = sphi 0, %s88
    %s90 = sphi 0, %s88
    %s91 = sphi 0, %s90
    %s105 = sphi 0, %s91
    %s109 = sphi 0, %s109
    %s111 = sphi 0, %s109
    %s112 = sphi 0, %s111
    %s126 = sphi 0, %s112
    %s130 = sphi 0, %s130
    %s132 = sphi 0, %s130
    %s133 = sphi 0, %s132
    %s147 = sphi 0, %s133
    %s153 = sphi 0, %s155
    %s156 = sphi 0, %s153
    %s157 = sphi 0, %s156
    %s173 = sphi 0, %s157
  $region4: #{danet_head_forward.1} parent=0 // loop_header_branch
    %15 = sbr.rel (%p13) target = $region8
  $region5: #{danet_head_forward.1} parent=0 // loop_body
    %s17 = ssub.s32 %s12, 1
    %s18 = ssub.s32 %s12, 2
    %s19 = sadd.s32 %s12, 1
    %s20 = ssub.s32 %s12, %s19
    %p21 = scmp.eq.s32.totalorder %s20, 0
    %s23 = sadd.s32 %s22, 1
    %s24 = scalar_select %p21, %s22, %s23
    %p27 = pneg %p21
    %p28 = scmp.eq.s32.totalorder %s12, 1
    %p29 = por %p27, %p28
    %p30 = scmp.ne.s32.totalorder %s22, %s25
    %p31 = scmp.eq.s32.totalorder %s12, 0
    %p32 = por %p30, %p31
    %p33 = scmp.ne.s32.totalorder %s22, %s25
    %p34 = scmp.eq.s32.totalorder %s17, 1
    %p35 = por %p33, %p34
    %p36 = scmp.ne.s32.totalorder %s25, %s26
    %p37 = scmp.eq.s32.totalorder %s17, 0
    %p38 = por %p36, %p37
    %p39 = scmp.ne.s32.totalorder %s25, %s26
    %p40 = scmp.eq.s32.totalorder %s18, 1
    %p41 = por %p39, %p40
    %p43 = scmp.ne.s32.totalorder %s26, %s42
    %p44 = scmp.eq.s32.totalorder %s18, 0
    %p45 = por %p43, %p44
    %s47 = sadd.s32 %s46, 1
    %p50 = scmp.eq.s32.totalorder %s12, 1
    %p51 = scmp.ne.s32.totalorder %s46, %s48
    %p52 = scmp.eq.s32.totalorder %s12, 0
    %p53 = por %p51, %p52
    %p54 = scmp.ne.s32.totalorder %s46, %s48
    %p55 = scmp.eq.s32.totalorder %s17, 1
    %p56 = por %p54, %p55
    %p57 = scmp.ne.s32.totalorder %s48, %s49
    %p58 = scmp.eq.s32.totalorder %s17, 0
    %p59 = por %p57, %p58
    %p60 = scmp.ne.s32.totalorder %s48, %s49
    %p61 = scmp.eq.s32.totalorder %s18, 1
    %p62 = por %p60, %p61
    %p64 = scmp.ne.s32.totalorder %s49, %s63
    %p65 = scmp.eq.s32.totalorder %s18, 0
    %p66 = por %p64, %p65
    %s68 = sadd.s32 %s67, 1
    %p71 = scmp.eq.s32.totalorder %s12, 1
    %p72 = scmp.ne.s32.totalorder %s67, %s69
    %p73 = scmp.eq.s32.totalorder %s12, 0
    %p74 = por %p72, %p73
    %p75 = scmp.ne.s32.totalorder %s67, %s69
    %p76 = scmp.eq.s32.totalorder %s17, 1
    %p77 = por %p75, %p76
    %p78 = scmp.ne.s32.totalorder %s69, %s70
    %p79 = scmp.eq.s32.totalorder %s17, 0
    %p80 = por %p78, %p79
    %p81 = scmp.ne.s32.totalorder %s69, %s70
    %p82 = scmp.eq.s32.totalorder %s18, 1
    %p83 = por %p81, %p82
    %p85 = scmp.ne.s32.totalorder %s70, %s84
    %p86 = scmp.eq.s32.totalorder %s18, 0
    %p87 = por %p85, %p86
    %s89 = sadd.s32 %s88, 1
    %p92 = scmp.eq.s32.totalorder %s12, 1
    %p93 = scmp.ne.s32.totalorder %s88, %s90
    %p94 = scmp.eq.s32.totalorder %s12, 0
    %p95 = por %p93, %p94
    %p96 = scmp.ne.s32.totalorder %s88, %s90
    %p97 = scmp.eq.s32.totalorder %s17, 1
    %p98 = por %p96, %p97
    %p99 = scmp.ne.s32.totalorder %s90, %s91
    %p100 = scmp.eq.s32.totalorder %s17, 0
    %p101 = por %p99, %p100
    %p102 = scmp.ne.s32.totalorder %s90, %s91
    %p103 = scmp.eq.s32.totalorder %s18, 1
    %p104 = por %p102, %p103
    %p106 = scmp.ne.s32.totalorder %s91, %s105
    %p107 = scmp.eq.s32.totalorder %s18, 0
    %p108 = por %p106, %p107
    %s110 = sadd.s32 %s109, 1
    %p113 = scmp.eq.s32.totalorder %s12, 1
    %p114 = scmp.ne.s32.totalorder %s109, %s111
    %p115 = scmp.eq.s32.totalorder %s12, 0
    %p116 = por %p114, %p115
    %p117 = scmp.ne.s32.totalorder %s109, %s111
    %p118 = scmp.eq.s32.totalorder %s17, 1
    %p119 = por %p117, %p118
    %p120 = scmp.ne.s32.totalorder %s111, %s112
    %p121 = scmp.eq.s32.totalorder %s17, 0
    %p122 = por %p120, %p121
    %p123 = scmp.ne.s32.totalorder %s111, %s112
    %p124 = scmp.eq.s32.totalorder %s18, 1
    %p125 = por %p123, %p124
    %p127 = scmp.ne.s32.totalorder %s112, %s126
    %p128 = scmp.eq.s32.totalorder %s18, 0
    %p129 = por %p127, %p128
    %s131 = sadd.s32 %s130, 1
    %p134 = scmp.eq.s32.totalorder %s12, 1
    %p135 = scmp.ne.s32.totalorder %s130, %s132
    %p136 = scmp.eq.s32.totalorder %s12, 0
    %p137 = por %p135, %p136
    %p138 = scmp.ne.s32.totalorder %s130, %s132
    %p139 = scmp.eq.s32.totalorder %s17, 1
    %p140 = por %p138, %p139
    %p141 = scmp.ne.s32.totalorder %s132, %s133
    %p142 = scmp.eq.s32.totalorder %s17, 0
    %p143 = por %p141, %p142
    %p144 = scmp.ne.s32.totalorder %s132, %s133
    %p145 = scmp.eq.s32.totalorder %s18, 1
    %p146 = por %p144, %p145
    %p148 = scmp.ne.s32.totalorder %s133, %s147
    %p149 = scmp.eq.s32.totalorder %s18, 0
    %p150 = por %p148, %p149
    %s151 = ssub.s32 %s12, %s19
    %p152 = scmp.eq.s32.totalorder %s151, 0
    %s154 = sadd.s32 %s153, 1
    %s155 = scalar_select %p152, %s153, %s154
    %p158 = pneg %p152
    %p159 = scmp.eq.s32.totalorder %s12, 1
    %p160 = por %p158, %p159
    %p161 = scmp.ne.s32.totalorder %s153, %s156
    %p162 = scmp.eq.s32.totalorder %s12, 0
    %p163 = por %p161, %p162
    %p164 = scmp.ne.s32.totalorder %s153, %s156
    %p165 = scmp.eq.s32.totalorder %s17, 1
    %p166 = por %p164, %p165
    %p167 = scmp.ne.s32.totalorder %s156, %s157
    %p168 = scmp.eq.s32.totalorder %s17, 0
    %p169 = por %p167, %p168
    %p170 = scmp.ne.s32.totalorder %s156, %s157
    %p171 = scmp.eq.s32.totalorder %s18, 1
    %p172 = por %p170, %p171
    %p174 = scmp.ne.s32.totalorder %s157, %s173
    %p175 = scmp.eq.s32.totalorder %s18, 0
    %p176 = por %p174, %p175
    %p177 = scmp.le.s32.totalorder 1, %s12
    %p178 = scmp.lt.s32.totalorder %s12, 3
    %p179 = pnand %p177, %p178
    %p180 = pneg %p179
    // Predicated region
    $region9: #{danet_head_forward.1} parent=5 // pred_check
      _
    $region10: #{danet_head_forward.1} parent=5 // pred_check_branch
      %182 = sbr.rel (%p179) target = $region12
    $region11: #{danet_head_forward.1} parent=5 // pred_region
      %s183 = ssub.s32 %s12, 1
      // Predicated region
      $region13: #{danet_head_forward.1} parent=11 // pred_check
        %p184 = pneg %p59
      $region14: #{danet_head_forward.1} parent=11 // pred_check_branch
        %186 = sbr.rel (%p184) target = $region16
      $region15: #{danet_head_forward.1} parent=11 // pred_region
        _
      $region16: #{danet_head_forward.1} parent=11 // pred_fallthru
        _
      // Predicated region
      $region17: #{danet_head_forward.1} parent=11 // pred_check
        %p187 = pneg %p80
      $region18: #{danet_head_forward.1} parent=11 // pred_check_branch
        %189 = sbr.rel (%p187) target = $region20
      $region19: #{danet_head_forward.1} parent=11 // pred_region
        _
      $region20: #{danet_head_forward.1} parent=11 // pred_fallthru
        _
      // Predicated region
      $region21: #{danet_head_forward.1} parent=11 // pred_check
        %p190 = pneg %p101
      $region22: #{danet_head_forward.1} parent=11 // pred_check_branch
        %192 = sbr.rel (%p190) target = $region24
      $region23: #{danet_head_forward.1} parent=11 // pred_region
        _
      $region24: #{danet_head_forward.1} parent=11 // pred_fallthru
        _
      // Predicated region
      $region25: #{danet_head_forward.1} parent=11 // pred_check
        %p193 = pneg %p122
      $region26: #{danet_head_forward.1} parent=11 // pred_check_branch
        %195 = sbr.rel (%p193) target = $region28
      $region27: #{danet_head_forward.1} parent=11 // pred_region
        _
      $region28: #{danet_head_forward.1} parent=11 // pred_fallthru
        _
      // Predicated region
      $region29: #{danet_head_forward.1} parent=11 // pred_check
        %p196 = pneg %p143
      $region30: #{danet_head_forward.1} parent=11 // pred_check_branch
        %198 = sbr.rel (%p196) target = $region32
      $region31: #{danet_head_forward.1} parent=11 // pred_region
        _
      $region32: #{danet_head_forward.1} parent=11 // pred_fallthru
        _
    $region12: #{danet_head_forward.1} parent=5 // pred_fallthru
      _
    %p199 = scmp.lt.s32.totalorder %s12, 2
    // Predicated region
    $region33: #{danet_head_forward.1} parent=5 // pred_check
      %p200 = pneg %p199
    $region34: #{danet_head_forward.1} parent=5 // pred_check_branch
      %202 = sbr.rel (%p200) target = $region36
    $region35: #{danet_head_forward.1} parent=5 // pred_region
      // Predicated region
      $region37: #{danet_head_forward.1} parent=35 // pred_check
        %p203 = pneg %p32
      $region38: #{danet_head_forward.1} parent=35 // pred_check_branch
        %205 = sbr.rel (%p203) target = $region40
      $region39: #{danet_head_forward.1} parent=35 // pred_region
        %p206 = scmp.lt.s32.totalorder %s12, 1
        %s207 = scalar_select %p206, %s12, 1
        %s208 = smul.addr %s207, 10
        %s209 = smul.addr %s208, 8
        %s210 = scalar_lea.vmem %s0, %s209
      $region40: #{danet_head_forward.1} parent=35 // pred_fallthru
        _
    $region36: #{danet_head_forward.1} parent=5 // pred_fallthru
      _
    %p211 = scmp.le.s32.totalorder 1, %s12
    %p212 = scmp.lt.s32.totalorder %s12, 3
    %p213 = pnand %p211, %p212
    %p214 = pneg %p213
    // Predicated region
    $region41: #{danet_head_forward.1} parent=5 // pred_check
      _
    $region42: #{danet_head_forward.1} parent=5 // pred_check_branch
      %216 = sbr.rel (%p213) target = $region44
    $region43: #{danet_head_forward.1} parent=5 // pred_region
      %s217 = ssub.s32 %s12, 1
      %p218 = scmp.lt.s32.totalorder %s17, 1
      %s219 = scalar_select %p218, %s17, 1
      %s220 = smul.addr %s219, 10
      %s221 = smul.addr %s220, 8
      %s222 = scalar_lea.vmem %s0, %s221
      %p223 = pneg %p38
      %p224 = pneg %p35
      %p225 = pneg %p59
      %p226 = pneg %p56
      %p227 = pneg %p80
      %p228 = pneg %p77
      %p229 = pneg %p101
      %p230 = pneg %p98
      %p231 = pneg %p122
      %p232 = pneg %p119
      %p233 = pneg %p143
      %p234 = pneg %p140
      %p235 = pneg %p169
      %p236 = pneg %p166
      %p237 = scmp.lt.s32.totalorder %s17, 1
      %s238 = scalar_select %p237, %s17, 1
      %s239 = smul.addr %s238, 32
      %s240 = smul.addr %s239, 8
      %s241 = scalar_lea.vmem %s6, %s240
      %p242 = scmp.lt.s32.totalorder %s17, 1
      %s243 = scalar_select %p242, %s17, 1
      %s244 = smul.addr %s243, 10
      %s245 = smul.addr %s244, 8
      %s246 = scalar_lea.vmem %s0, %s245
      %p247 = scmp.lt.s32.totalorder %s17, 1
      %s248 = scalar_select %p247, %s17, 1
      %s249 = smul.addr %s248, 32
      %s250 = smul.addr %s249, 8
      %s251 = scalar_lea.vmem %s6, %s250
      %v252 = vld [vmem:[%s1] sm:$0xff]
      %v253 = vld [vmem:[%s1 + $0x8] sm:$0xff]
      %v254 = vld [vmem:[%s1 + $0x10] sm:$0xff]
      %v255 = vld [vmem:[%s1 + $0x18] sm:$0xff]
      %v256 = vld [vmem:[%s1 + $0x20] sm:$0xff]
      %v257 = vld [vmem:[%s1 + $0x28] sm:$0xff]
      %v258 = vld [vmem:[%s1 + $0x30] sm:$0xff]
      %v259 = vld [vmem:[%s1 + $0x38] sm:$0xff]
      %v260 = vld [vmem:[%s246] sm:$0xff]
      %v261 = vld [vmem:[%s246 + $0x8] sm:$0xff]
      %v262 = vld [vmem:[%s246 + $0x10] sm:$0xff]
      %v263 = vld [vmem:[%s246 + $0x18] sm:$0xff]
      %v264 = vld [vmem:[%s246 + $0x20] sm:$0xff]
      %v265 = vld [vmem:[%s246 + $0x28] sm:$0xff]
      %v266 = vld [vmem:[%s246 + $0x30] sm:$0xff]
      %v267 = vld [vmem:[%s246 + $0x38] sm:$0xff]
      %v268 = vld [vmem:[%s246 + $0x40] sm:$0xf]
      %v269 = vld [vmem:[%s246 + $0x48] sm:$0xf]
      %v270 = vld [vmem:[%s2] sm:$0xff]
      %v271 = vld [vmem:[%s2 + $0x8] sm:$0xff]
      %v272 = vld [vmem:[%s2 + $0x10] sm:$0xff]
      %v273 = vld [vmem:[%s2 + $0x18] sm:$0xff]
      %v274 = vld [vmem:[%s2 + $0x20] sm:$0xff]
      %v275 = vld [vmem:[%s2 + $0x28] sm:$0xff]
      %v276 = vld [vmem:[%s2 + $0x30] sm:$0xff]
      %v277 = vld [vmem:[%s2 + $0x38] sm:$0xff]
      %279 = vset.pattern.permute.xlu0 0
      %280 = vperm.xlu0 %279, %v270
      %v281 = vpop.permute.xlu0 %280
      %284 = vset.pattern.permute.xlu0 0
      %285 = vperm.xlu0 %284, %v271
      %v286 = vpop.permute.xlu0 %285
      %289 = vset.pattern.permute.xlu0 0
      %290 = vperm.xlu0 %289, %v272
      %v291 = vpop.permute.xlu0 %290
      %294 = vset.pattern.permute.xlu0 0
      %295 = vperm.xlu0 %294, %v273
      %v296 = vpop.permute.xlu0 %295
      %299 = vset.pattern.permute.xlu0 0
      %300 = vperm.xlu0 %299, %v274
      %v301 = vpop.permute.xlu0 %300
      %304 = vset.pattern.permute.xlu0 0
      %305 = vperm.xlu0 %304, %v275
      %v306 = vpop.permute.xlu0 %305
      %309 = vset.pattern.permute.xlu0 0
      %310 = vperm.xlu0 %309, %v276
      %v311 = vpop.permute.xlu0 %310
      %314 = vset.pattern.permute.xlu0 0
      %315 = vperm.xlu0 %314, %v277
      %v316 = vpop.permute.xlu0 %315
      %vm318 = vcmask 293888
      %v320 = vsel %vm318, %v252, 0
      %v323 = vsel %vm318, %v253, 0
      %v326 = vsel %vm318, %v254, 0
      %v329 = vsel %vm318, %v255, 0
      %v332 = vsel %vm318, %v256, 0
      %v335 = vsel %vm318, %v257, 0
      %v338 = vsel %vm318, %v258, 0
      %v341 = vsel %vm318, %v259, 0
      %vm343 = vcmask 1043456
      %v345 = vsel %vm343, %v268, 0
      %v348 = vsel %vm343, %v269, 0
      %350 = vmatprep.subr.mxu0 %v261
      %351 = vmatpush1.msra.mxu0 %v260
      %352 = vmatprep.subr.mxu0 %v263
      %353 = vmatpush1.msra.mxu0 %v262
      %354 = vmatprep.subr.mxu0 %v265
      %355 = vmatpush1.msra.mxu0 %v264
      %356 = vmatprep.subr.mxu0 %v267
      %357 = vmatpush1.msra.mxu0 %v266
      %358 = vmatprep.subr.mxu0 %v348
      %359 = vmatpush1.msra.mxu0 %v345
      %360 = vmatprep.subr.mxu0 0.0
      %361 = vmatpush1.msra.mxu0 0.0
      %362 = vmatprep.subr.mxu0 0.0
      %363 = vmatpush1.msra.mxu0 0.0
      %364 = vmatprep.subr.mxu0 0.0
      %365 = vmatpush1.msra.mxu0 0.0
      %366 = vmatprep.subr.mxu0 0.0
      %367 = vmatpush1.msra.mxu0 0.0
      %368 = vmatprep.subr.mxu0 0.0
      %369 = vmatpush1.msra.mxu0 0.0
      %370 = vmatprep.subr.mxu0 0.0
      %371 = vmatpush1.msra.mxu0 0.0
      %372 = vmatprep.subr.mxu0 0.0
      %373 = vmatpush1.msra.mxu0 0.0
      %374 = vmatprep.subr.mxu0 0.0
      %375 = vmatpush1.msra.mxu0 0.0
      %376 = vmatprep.subr.mxu0 0.0
      %377 = vmatpush1.msra.mxu0 0.0
      %378 = vmatprep.subr.mxu0 0.0
      %379 = vmatpush1.msra.mxu0 0.0
      %380 = vmatprep.subr.mxu0 0.0
      %381 = vmatpush1.msra.mxu0 0.0
      %382 = vmatprep.subr.mxu0 0.0
      %383 = vmatpush1.msra.mxu0 0.0
      %384 = vmatprep.subr.mxu0 0.0
      %385 = vmatpush1.msra.mxu0 0.0
      %386 = vmatprep.subr.mxu0 0.0
      %387 = vmatpush1.msra.mxu0 0.0
      %388 = vmatprep.subr.mxu0 0.0
      %389 = vmatpush1.msra.mxu0 0.0
      %390 = vmatprep.subr.mxu0 0.0
      %391 = vmatpush1.msra.mxu0 0.0
      %392 = vmatprep.subr.mxu0 0.0
      %393 = vmatpush1.msra.mxu0 0.0
      %394 = vmatprep.subr.mxu0 0.0
      %395 = vmatpush1.msra.mxu0 0.0
      %396 = vmatprep.subr.mxu0 0.0
      %397 = vmatpush1.msra.mxu0 0.0
      %398 = vmatprep.subr.mxu0 0.0
      %399 = vmatpush1.msra.mxu0 0.0
      %400 = vmatprep.subr.mxu0 0.0
      %401 = vmatpush1.msra.mxu0 0.0
      %402 = vmatprep.subr.mxu0 0.0
      %403 = vmatpush1.msra.mxu0 0.0
      %404 = vmatprep.subr.mxu0 0.0
      %405 = vmatpush1.msra.mxu0 0.0
      %406 = vmatprep.subr.mxu0 0.0
      %407 = vmatpush1.msra.mxu0 0.0
      %408 = vmatprep.subr.mxu0 0.0
      %409 = vmatpush1.msra.mxu0 0.0
      %410 = vmatprep.subr.mxu0 0.0
      %411 = vmatpush1.msra.mxu0 0.0
      %412 = vmatprep.subr.mxu0 0.0
      %413 = vmatpush1.msra.mxu0 0.0
      %414 = vmatprep.mubr.f32.mxu0 0.0
      %415 = vmatmul.mubr.f32.gmra.mrb[0].mxu0 %v320
      %v416 = vpop.f32.mrb[0].mxu0
      %v417 = vadd.f32 %v281, %v416
      %v418 = vpop.f32.mrb[0].mxu0
      %v419 = vadd.f32 %v281, %v418
      %420 = vmatprep.mubr.f32.mxu0 0.0
      %421 = vmatmul.mubr.f32.gmra.mrb[0].mxu0 %v323
      %v422 = vpop.f32.mrb[0].mxu0
      %v423 = vadd.f32 %v286, %v422
      %v424 = vpop.f32.mrb[0].mxu0
      %v425 = vadd.f32 %v286, %v424
      %426 = vmatprep.mubr.f32.mxu0 0.0
      %427 = vmatmul.mubr.f32.gmra.mrb[0].mxu0 %v326
      %v428 = vpop.f32.mrb[0].mxu0
      %v429 = vadd.f32 %v291, %v428
      %v430 = vpop.f32.mrb[0].mxu0
      %v431 = vadd.f32 %v291, %v430
      %432 = vmatprep.mubr.f32.mxu0 0.0
      %433 = vmatmul.mubr.f32.gmra.mrb[0].mxu0 %v329
      %v434 = vpop.f32.mrb[0].mxu0
      %v435 = vadd.f32 %v296, %v434
      %v436 = vpop.f32.mrb[0].mxu0
      %v437 = vadd.f32 %v296, %v436
      %438 = vmatprep.mubr.f32.mxu0 0.0
      %439 = vmatmul.mubr.f32.gmra.mrb[0].mxu0 %v332
      %v440 = vpop.f32.mrb[0].mxu0
      %v441 = vadd.f32 %v301, %v440
      %v442 = vpop.f32.mrb[0].mxu0
      %v443 = vadd.f32 %v301, %v442
      %444 = vmatprep.mubr.f32.mxu0 0.0
      %445 = vmatmul.mubr.f32.gmra.mrb[0].mxu0 %v335
      %v446 = vpop.f32.mrb[0].mxu0
      %v447 = vadd.f32 %v306, %v446
      %v448 = vpop.f32.mrb[0].mxu0
      %v449 = vadd.f32 %v306, %v448
      %450 = vmatprep.mubr.f32.mxu0 0.0
      %451 = vmatmul.mubr.f32.gmra.mrb[0].mxu0 %v338
      %v452 = vpop.f32.mrb[0].mxu0
      %v453 = vadd.f32 %v311, %v452
      %v454 = vpop.f32.mrb[0].mxu0
      %v455 = vadd.f32 %v311, %v454
      %456 = vmatprep.mubr.f32.mxu0 0.0
      %457 = vmatmul.mubr.f32.gmra.mrb[0].mxu0 %v341
      %v458 = vpop.f32.mrb[0].mxu0
      %v459 = vadd.f32 %v316, %v458
      %v460 = vpop.f32.mrb[0].mxu0
      %v461 = vadd.f32 %v316, %v460
      %462 = vdwg.mxu0
      %v463 = vmax.f32 %v417, 0.0
      %v464 = vmax.f32 %v419, 0.0
      %v465 = vmax.f32 %v423, 0.0
      %v466 = vmax.f32 %v425, 0.0
      %v467 = vmax.f32 %v429, 0.0
      %v468 = vmax.f32 %v431, 0.0
      %v469 = vmax.f32 %v435, 0.0
      %v470 = vmax.f32 %v437, 0.0
      %v471 = vmax.f32 %v441, 0.0
      %v472 = vmax.f32 %v443, 0.0
      %v473 = vmax.f32 %v447, 0.0
      %v474 = vmax.f32 %v449, 0.0
      %v475 = vmax.f32 %v453, 0.0
      %v476 = vmax.f32 %v455, 0.0
      %v477 = vmax.f32 %v459, 0.0
      %v478 = vmax.f32 %v461, 0.0
      %479 = vxpose.xlu0.b32.start [1/16] %v463, 128
      %480 = vxpose.xlu0.b32.cont [2/16] %v465, 128
      %481 = vxpose.xlu0.b32.cont [3/16] %v467, 128
      %482 = vxpose.xlu0.b32.cont [4/16] %v469, 128
      %483 = vxpose.xlu0.b32.cont [5/16] 0.0, 128
      %484 = vxpose.xlu0.b32.cont [6/16] 0.0, 128
      %485 = vxpose.xlu0.b32.cont [7/16] 0.0, 128
      %486 = vxpose.xlu0.b32.cont [8/16] 0.0, 128
      %487 = vxpose.xlu0.b32.cont [9/16] 0.0, 128
      %488 = vxpose.xlu0.b32.cont [10/16] 0.0, 128
      %489 = vxpose.xlu0.b32.cont [11/16] 0.0, 128
      %490 = vxpose.xlu0.b32.cont [12/16] 0.0, 128
      %491 = vxpose.xlu0.b32.cont [13/16] 0.0, 128
      %492 = vxpose.xlu0.b32.cont [14/16] 0.0, 128
      %493 = vxpose.xlu0.b32.cont [15/16] 0.0, 128
      %494 = vxpose.xlu0.b32.end [16/16] 0.0, 128
      %v495 = vpop.trf.xlu0
      %v496 = vpop.trf.xlu0
      %v497 = vpop.trf.xlu0
      %v498 = vpop.trf.xlu0
      %v499 = vpop.trf.xlu0
      %v500 = vpop.trf.xlu0
      %v501 = vpop.trf.xlu0
      %v502 = vpop.trf.xlu0
      %v503 = vpop.trf.xlu0
      %v504 = vpop.trf.xlu0
      %v505 = vpop.trf.xlu0
      %v506 = vpop.trf.xlu0
      %v507 = vpop.trf.xlu0
      %v508 = vpop.trf.xlu0
      %v509 = vpop.trf.xlu0
      %v510 = vpop.trf.xlu0
      %511 = vxpose.xlu0.b32.start [1/16] %v464, 128
      %512 = vxpose.xlu0.b32.cont [2/16] %v466, 128
      %513 = vxpose.xlu0.b32.cont [3/16] %v468, 128
      %514 = vxpose.xlu0.b32.cont [4/16] %v470, 128
      %515 = vxpose.xlu0.b32.cont [5/16] 0.0, 128
      %516 = vxpose.xlu0.b32.cont [6/16] 0.0, 128
      %517 = vxpose.xlu0.b32.cont [7/16] 0.0, 128
      %518 = vxpose.xlu0.b32.cont [8/16] 0.0, 128
      %519 = vxpose.xlu0.b32.cont [9/16] 0.0, 128
      %520 = vxpose.xlu0.b32.cont [10/16] 0.0, 128
      %521 = vxpose.xlu0.b32.cont [11/16] 0.0, 128
      %522 = vxpose.xlu0.b32.cont [12/16] 0.0, 128
      %523 = vxpose.xlu0.b32.cont [13/16] 0.0, 128
      %524 = vxpose.xlu0.b32.cont [14/16] 0.0, 128
      %525 = vxpose.xlu0.b32.cont [15/16] 0.0, 128
      %526 = vxpose.xlu0.b32.end [16/16] 0.0, 128
      %v527 = vpop.trf.xlu0
      %v528 = vpop.trf.xlu0
      %v529 = vpop.trf.xlu0
      %v530 = vpop.trf.xlu0
      %v531 = vpop.trf.xlu0
      %v532 = vpop.trf.xlu0
      %v533 = vpop.trf.xlu0
      %v534 = vpop.trf.xlu0
      %v535 = vpop.trf.xlu0
      %v536 = vpop.trf.xlu0
      %v537 = vpop.trf.xlu0
      %v538 = vpop.trf.xlu0
      %v539 = vpop.trf.xlu0
      %v540 = vpop.trf.xlu0
      %v541 = vpop.trf.xlu0
      %v542 = vpop.trf.xlu0
      %vm543 = vcmask 261120
      %v545 = vsel %vm543, %v495, 0
      %v548 = vsel %vm543, %v496, 0
      %v551 = vsel %vm543, %v497, 0
      %v554 = vsel %vm543, %v498, 0
      %v557 = vsel %vm543, %v499, 0
      %v560 = vsel %vm543, %v500, 0
      %v563 = vsel %vm543, %v501, 0
      %v566 = vsel %vm543, %v502, 0
      %v569 = vsel %vm543, %v503, 0
      %v572 = vsel %vm543, %v504, 0
      %v575 = vsel %vm543, %v505, 0
      %v578 = vsel %vm543, %v506, 0
      %v581 = vsel %vm543, %v507, 0
      %v584 = vsel %vm543, %v508, 0
      %v587 = vsel %vm543, %v509, 0
      %v590 = vsel %vm543, %v510, 0
      %v593 = vsel %vm543, %v527, 0
      %v596 = vsel %vm543, %v528, 0
      %v599 = vsel %vm543, %v529, 0
      %v602 = vsel %vm543, %v530, 0
      %v605 = vsel %vm543, %v531, 0
      %v608 = vsel %vm543, %v532, 0
      %v611 = vsel %vm543, %v533, 0
      %v614 = vsel %vm543, %v534, 0
      %v617 = vsel %vm543, %v535, 0
      %v620 = vsel %vm543, %v536, 0
      %v623 = vsel %vm543, %v537, 0
      %v626 = vsel %vm543, %v538, 0
      %v629 = vsel %vm543, %v539, 0
      %v632 = vsel %vm543, %v540, 0
      %v635 = vsel %vm543, %v541, 0
      %v638 = vsel %vm543, %v542, 0
      %640 = vmatprep.subr.mxu0 %v464
      %641 = vmatpush1.msra.mxu0 %v463
      %642 = vmatprep.subr.mxu0 %v466
      %643 = vmatpush1.msra.mxu0 %v465
      %644 = vmatprep.subr.mxu0 %v468
      %645 = vmatpush1.msra.mxu0 %v467
      %646 = vmatprep.subr.mxu0 %v470
      %647 = vmatpush1.msra.mxu0 %v469
      %648 = vmatprep.subr.mxu0 0.0
      %649 = vmatpush1.msra.mxu0 0.0
      %650 = vmatprep.subr.mxu0 0.0
      %651 = vmatpush1.msra.mxu0 0.0
      %652 = vmatprep.subr.mxu0 0.0
      %653 = vmatpush1.msra.mxu0 0.0
      %654 = vmatprep.subr.mxu0 0.0
      %655 = vmatpush1.msra.mxu0 0.0
      %656 = vmatprep.subr.mxu0 0.0
      %657 = vmatpush1.msra.mxu0 0.0
      %658 = vmatprep.subr.mxu0 0.0
      %659 = vmatpush1.msra.mxu0 0.0
      %660 = vmatprep.subr.mxu0 0.0
      %661 = vmatpush1.msra.mxu0 0.0
      %662 = vmatprep.subr.mxu0 0.0
      %663 = vmatpush1.msra.mxu0 0.0
      %664 = vmatprep.subr.mxu0 0.0
      %665 = vmatpush1.msra.mxu0 0.0
      %666 = vmatprep.subr.mxu0 0.0
      %667 = vmatpush1.msra.mxu0 0.0
      %668 = vmatprep.subr.mxu0 0.0
      %669 = vmatpush1.msra.mxu0 0.0
      %670 = vmatprep.subr.mxu0 0.0
      %671 = vmatpush1.msra.mxu0 0.0
      %672 = vmatprep.subr.mxu0 0.0
      %673 = vmatpush1.msra.mxu0 0.0
      %674 = vmatprep.subr.mxu0 0.0
      %675 = vmatpush1.msra.mxu0 0.0
      %676 = vmatprep.subr.mxu0 0.0
      %677 = vmatpush1.msra.mxu0 0.0
      %678 = vmatprep.subr.mxu0 0.0
      %679 = vmatpush1.msra.mxu0 0.0
      %680 = vmatprep.subr.mxu0 0.0
      %681 = vmatpush1.msra.mxu0 0.0
      %682 = vmatprep.subr.mxu0 0.0
      %683 = vmatpush1.msra.mxu0 0.0
      %684 = vmatprep.subr.mxu0 0.0
      %685 = vmatpush1.msra.mxu0 0.0
      %686 = vmatprep.subr.mxu0 0.0
      %687 = vmatpush1.msra.mxu0 0.0
      %688 = vmatprep.subr.mxu0 0.0
      %689 = vmatpush1.msra.mxu0 0.0
      %690 = vmatprep.subr.mxu0 0.0
      %691 = vmatpush1.msra.mxu0 0.0
      %692 = vmatprep.subr.mxu0 0.0
      %693 = vmatpush1.msra.mxu0 0.0
      %694 = vmatprep.subr.mxu0 0.0
      %695 = vmatpush1.msra.mxu0 0.0
      %696 = vmatprep.subr.mxu0 0.0
      %697 = vmatpush1.msra.mxu0 0.0
      %698 = vmatprep.subr.mxu0 0.0
      %699 = vmatpush1.msra.mxu0 0.0
      %700 = vmatprep.subr.mxu0 0.0
      %701 = vmatpush1.msra.mxu0 0.0
      %702 = vmatprep.subr.mxu0 0.0
      %703 = vmatpush1.msra.mxu0 0.0
      %704 = vmatprep.mubr.f32.mxu0 0.0
      %705 = vmatmul.mubr.f32.gmra.mrb[0].mxu0 %v545
      %v706 = vpop.f32.mrb[0].mxu0
      %v707 = vadd.f32 0.0, %v706
      %v708 = vpop.f32.mrb[0].mxu0
      %v709 = vadd.f32 0.0, %v708
      %710 = vmatprep.mubr.f32.mxu0 0.0
      %711 = vmatmul.mubr.f32.gmra.mrb[0].mxu0 %v548
      %v712 = vpop.f32.mrb[0].mxu0
      %v713 = vadd.f32 0.0, %v712
      %v714 = vpop.f32.mrb[0].mxu0
      %v715 = vadd.f32 0.0, %v714
      %716 = vmatprep.mubr.f32.mxu0 0.0
      %717 = vmatmul.mubr.f32.gmra.mrb[0].mxu0 %v551
      %v718 = vpop.f32.mrb[0].mxu0
      %v719 = vadd.f32 0.0, %v718
      %v720 = vpop.f32.mrb[0].mxu0
      %v721 = vadd.f32 0.0, %v720
      %722 = vmatprep.mubr.f32.mxu0 0.0
      %723 = vmatmul.mubr.f32.gmra.mrb[0].mxu0 %v554
      %v724 = vpop.f32.mrb[0].mxu0
      %v725 = vadd.f32 0.0, %v724
      %v726 = vpop.f32.mrb[0].mxu0
      %v727 = vadd.f32 0.0, %v726
      %728 = vmatprep.mubr.f32.mxu0 0.0
      %729 = vmatmul.mubr.f32.gmra.mrb[0].mxu0 %v557
      %v730 = vpop.f32.mrb[0].mxu0
      %v731 = vadd.f32 0.0, %v730
      %v732 = vpop.f32.mrb[0].mxu0
      %v733 = vadd.f32 0.0, %v732
      %734 = vmatprep.mubr.f32.mxu0 0.0
      %735 = vmatmul.mubr.f32.gmra.mrb[0].mxu0 %v560
      %v736 = vpop.f32.mrb[0].mxu0
      %v737 = vadd.f32 0.0, %v736
      %v738 = vpop.f32.mrb[0].mxu0
      %v739 = vadd.f32 0.0, %v738
      %740 = vmatprep.mubr.f32.mxu0 0.0
      %741 = vmatmul.mubr.f32.gmra.mrb[0].mxu0 %v563
      %v742 = vpop.f32.mrb[0].mxu0
      %v743 = vadd.f32 0.0, %v742
      %v744 = vpop.f32.mrb[0].mxu0
      %v745 = vadd.f32 0.0, %v744
      %746 = vmatprep.mubr.f32.mxu0 0.0
      %747 = vmatmul.mubr.f32.gmra.mrb[0].mxu0 %v566
      %v748 = vpop.f32.mrb[0].mxu0
      %v749 = vadd.f32 0.0, %v748
      %v750 = vpop.f32.mrb[0].mxu0
      %v751 = vadd.f32 0.0, %v750
      %752 = vmatprep.mubr.f32.mxu0 0.0
      %753 = vmatmul.mubr.f32.gmra.mrb[0].mxu0 %v569
      %v754 = vpop.f32.mrb[0].mxu0
      %v755 = vadd.f32 0.0, %v754
      %v756 = vpop.f32.mrb[0].mxu0
      %v757 = vadd.f32 0.0, %v756
      %758 = vmatprep.mubr.f32.mxu0 0.0
      %759 = vmatmul.mubr.f32.gmra.mrb[0].mxu0 %v572
      %v760 = vpop.f32.mrb[0].mxu0
      %v761 = vadd.f32 0.0, %v760
      %v762 = vpop.f32.mrb[0].mxu0
      %v763 = vadd.f32 0.0, %v762
      %764 = vmatprep.mubr.f32.mxu0 0.0
      %765 = vmatmul.mubr.f32.gmra.mrb[0].mxu0 %v575
      %v766 = vpop.f32.mrb[0].mxu0
      %v767 = vadd.f32 0.0, %v766
      %v768 = vpop.f32.mrb[0].mxu0
      %v769 = vadd.f32 0.0, %v768
      %770 = vmatprep.mubr.f32.mxu0 0.0
      %771 = vmatmul.mubr.f32.gmra.mrb[0].mxu0 %v578
      %v772 = vpop.f32.mrb[0].mxu0
      %v773 = vadd.f32 0.0, %v772
      %v774 = vpop.f32.mrb[0].mxu0
      %v775 = vadd.f32 0.0, %v774
      %776 = vmatprep.mubr.f32.mxu0 0.0
      %777 = vmatmul.mubr.f32.gmra.mrb[0].mxu0 %v581
      %v778 = vpop.f32.mrb[0].mxu0
      %v779 = vadd.f32 0.0, %v778
      %v780 = vpop.f32.mrb[0].mxu0
      %v781 = vadd.f32 0.0, %v780
      %782 = vmatprep.mubr.f32.mxu0 0.0
      %783 = vmatmul.mubr.f32.gmra.mrb[0].mxu0 %v584
      %v784 = vpop.f32.mrb[0].mxu0
      %v785 = vadd.f32 0.0, %v784
      %v786 = vpop.f32.mrb[0].mxu0
      %v787 = vadd.f32 0.0, %v786
      %788 = vmatprep.mubr.f32.mxu0 0.0
      %789 = vmatmul.mubr.f32.gmra.mrb[0].mxu0 %v587
      %v790 = vpop.f32.mrb[0].mxu0
      %v791 = vadd.f32 0.0, %v790
      %v792 = vpop.f32.mrb[0].mxu0
      %v793 = vadd.f32 0.0, %v792
      %794 = vmatprep.mubr.f32.mxu0 0.0
      %795 = vmatmul.mubr.f32.gmra.mrb[0].mxu0 %v590
      %v796 = vpop.f32.mrb[0].mxu0
      %v797 = vadd.f32 0.0, %v796
      %v798 = vpop.f32.mrb[0].mxu0
      %v799 = vadd.f32 0.0, %v798
      %800 = vmatprep.mubr.f32.mxu0 0.0
      %801 = vmatmul.mubr.f32.gmra.mrb[0].mxu0 %v593
      %v802 = vpop.f32.mrb[0].mxu0
      %v803 = vadd.f32 0.0, %v802
      %v804 = vpop.f32.mrb[0].mxu0
      %v805 = vadd.f32 0.0, %v804
      %806 = vmatprep.mubr.f32.mxu0 0.0
      %807 = vmatmul.mubr.f32.gmra.mrb[0].mxu0 %v596
      %v808 = vpop.f32.mrb[0].mxu0
      %v809 = vadd.f32 0.0, %v808
      %v810 = vpop.f32.mrb[0].mxu0
      %v811 = vadd.f32 0.0, %v810
      %812 = vmatprep.mubr.f32.mxu0 0.0
      %813 = vmatmul.mubr.f32.gmra.mrb[0].mxu0 %v599
      %v814 = vpop.f32.mrb[0].mxu0
      %v815 = vadd.f32 0.0, %v814
      %v816 = vpop.f32.mrb[0].mxu0
      %v817 = vadd.f32 0.0, %v816
      %818 = vmatprep.mubr.f32.mxu0 0.0
      %819 = vmatmul.mubr.f32.gmra.mrb[0].mxu0 %v602
      %v820 = vpop.f32.mrb[0].mxu0
      %v821 = vadd.f32 0.0, %v820
      %v822 = vpop.f32.mrb[0].mxu0
      %v823 = vadd.f32 0.0, %v822
      %824 = vmatprep.mubr.f32.mxu0 0.0
      %825 = vmatmul.mubr.f32.gmra.mrb[0].mxu0 %v605
      %v826 = vpop.f32.mrb[0].mxu0
      %v827 = vadd.f32 0.0, %v826
      %v828 = vpop.f32.mrb[0].mxu0
      %v829 = vadd.f32 0.0, %v828
      %830 = vmatprep.mubr.f32.mxu0 0.0
      %831 = vmatmul.mubr.f32.gmra.mrb[0].mxu0 %v608
      %v832 = vpop.f32.mrb[0].mxu0
      %v833 = vadd.f32 0.0, %v832
      %v834 = vpop.f32.mrb[0].mxu0
      %v835 = vadd.f32 0.0, %v834
      %836 = vmatprep.mubr.f32.mxu0 0.0
      %837 = vmatmul.mubr.f32.gmra.mrb[0].mxu0 %v611
      %v838 = vpop.f32.mrb[0].mxu0
      %v839 = vadd.f32 0.0, %v838
      %v840 = vpop.f32.mrb[0].mxu0
      %v841 = vadd.f32 0.0, %v840
      %842 = vmatprep.mubr.f32.mxu0 0.0
      %843 = vmatmul.mubr.f32.gmra.mrb[0].mxu0 %v614
      %v844 = vpop.f32.mrb[0].mxu0
      %v845 = vadd.f32 0.0, %v844
      %v846 = vpop.f32.mrb[0].mxu0
      %v847 = vadd.f32 0.0, %v846
      %848 = vmatprep.mubr.f32.mxu0 0.0
      %849 = vmatmul.mubr.f32.gmra.mrb[0].mxu0 %v617
      %v850 = vpop.f32.mrb[0].mxu0
      %v851 = vadd.f32 0.0, %v850
      %v852 = vpop.f32.mrb[0].mxu0
      %v853 = vadd.f32 0.0, %v852
      %854 = vmatprep.mubr.f32.mxu0 0.0
      %855 = vmatmul.mubr.f32.gmra.mrb[0].mxu0 %v620
      %v856 = vpop.f32.mrb[0].mxu0
      %v857 = vadd.f32 0.0, %v856
      %v858 = vpop.f32.mrb[0].mxu0
      %v859 = vadd.f32 0.0, %v858
      %860 = vmatprep.mubr.f32.mxu0 0.0
      %861 = vmatmul.mubr.f32.gmra.mrb[0].mxu0 %v623
      %v862 = vpop.f32.mrb[0].mxu0
      %v863 = vadd.f32 0.0, %v862
      %v864 = vpop.f32.mrb[0].mxu0
      %v865 = vadd.f32 0.0, %v864
      %866 = vmatprep.mubr.f32.mxu0 0.0
      %867 = vmatmul.mubr.f32.gmra.mrb[0].mxu0 %v626
      %v868 = vpop.f32.mrb[0].mxu0
      %v869 = vadd.f32 0.0, %v868
      %v870 = vpop.f32.mrb[0].mxu0
      %v871 = vadd.f32 0.0, %v870
      %872 = vmatprep.mubr.f32.mxu0 0.0
      %873 = vmatmul.mubr.f32.gmra.mrb[0].mxu0 %v629
      %v874 = vpop.f32.mrb[0].mxu0
      %v875 = vadd.f32 0.0, %v874
      %v876 = vpop.f32.mrb[0].mxu0
      %v877 = vadd.f32 0.0, %v876
      %878 = vmatprep.mubr.f32.mxu0 0.0
      %879 = vmatmul.mubr.f32.gmra.mrb[0].mxu0 %v632
      %v880 = vpop.f32.mrb[0].mxu0
      %v881 = vadd.f32 0.0, %v880
      %v882 = vpop.f32.mrb[0].mxu0
      %v883 = vadd.f32 0.0, %v882
      %884 = vmatprep.mubr.f32.mxu0 0.0
      %885 = vmatmul.mubr.f32.gmra.mrb[0].mxu0 %v635
      %v886 = vpop.f32.mrb[0].mxu0
      %v887 = vadd.f32 0.0, %v886
      %v888 = vpop.f32.mrb[0].mxu0
      %v889 = vadd.f32 0.0, %v888
      %890 = vmatprep.mubr.f32.mxu0 0.0
      %891 = vmatmul.mubr.f32.gmra.mrb[0].mxu0 %v638
      %v892 = vpop.f32.mrb[0].mxu0
      %v893 = vadd.f32 0.0, %v892
      %v894 = vpop.f32.mrb[0].mxu0
      %v895 = vadd.f32 0.0, %v894
      %896 = vdwg.mxu0
      %v897 = vmax.f32 %v707, %v709
      %898 = vmax.xlane.f32.xlu0 %v897
      %v899 = vpop.xlane.xlu0 %898
      %v900 = vmax.f32 %v713, %v715
      %901 = vmax.xlane.f32.xlu0 %v900
      %v902 = vpop.xlane.xlu0 %901
      %v903 = vmax.f32 %v719, %v721
      %904 = vmax.xlane.f32.xlu0 %v903
      %v905 = vpop.xlane.xlu0 %904
      %v906 = vmax.f32 %v725, %v727
      %907 = vmax.xlane.f32.xlu0 %v906
      %v908 = vpop.xlane.xlu0 %907
      %v909 = vmax.f32 %v731, %v733
      %910 = vmax.xlane.f32.xlu0 %v909
      %v911 = vpop.xlane.xlu0 %910
      %v912 = vmax.f32 %v737, %v739
      %913 = vmax.xlane.f32.xlu0 %v912
      %v914 = vpop.xlane.xlu0 %913
      %v915 = vmax.f32 %v743, %v745
      %916 = vmax.xlane.f32.xlu0 %v915
      %v917 = vpop.xlane.xlu0 %916
      %v918 = vmax.f32 %v749, %v751
      %919 = vmax.xlane.f32.xlu0 %v918
      %v920 = vpop.xlane.xlu0 %919
      %v921 = vmax.f32 %v755, %v757
      %922 = vmax.xlane.f32.xlu0 %v921
      %v923 = vpop.xlane.xlu0 %922
      %v924 = vmax.f32 %v761, %v763
      %925 = vmax.xlane.f32.xlu0 %v924
      %v926 = vpop.xlane.xlu0 %925
      %v927 = vmax.f32 %v767, %v769
      %928 = vmax.xlane.f32.xlu0 %v927
      %v929 = vpop.xlane.xlu0 %928
      %v930 = vmax.f32 %v773, %v775
      %931 = vmax.xlane.f32.xlu0 %v930
      %v932 = vpop.xlane.xlu0 %931
      %v933 = vmax.f32 %v779, %v781
      %934 = vmax.xlane.f32.xlu0 %v933
      %v935 = vpop.xlane.xlu0 %934
      %v936 = vmax.f32 %v785, %v787
      %937 = vmax.xlane.f32.xlu0 %v936
      %v938 = vpop.xlane.xlu0 %937
      %v939 = vmax.f32 %v791, %v793
      %940 = vmax.xlane.f32.xlu0 %v939
      %v941 = vpop.xlane.xlu0 %940
      %v942 = vmax.f32 %v797, %v799
      %943 = vmax.xlane.f32.xlu0 %v942
      %v944 = vpop.xlane.xlu0 %943
      %v945 = vmax.f32 %v803, %v805
      %946 = vmax.xlane.f32.xlu0 %v945
      %v947 = vpop.xlane.xlu0 %946
      %v948 = vmax.f32 %v809, %v811
      %949 = vmax.xlane.f32.xlu0 %v948
      %v950 = vpop.xlane.xlu0 %949
      %v951 = vmax.f32 %v815, %v817
      %952 = vmax.xlane.f32.xlu0 %v951
      %v953 = vpop.xlane.xlu0 %952
      %v954 = vmax.f32 %v821, %v823
      %955 = vmax.xlane.f32.xlu0 %v954
      %v956 = vpop.xlane.xlu0 %955
      %v957 = vmax.f32 %v827, %v829
      %958 = vmax.xlane.f32.xlu0 %v957
      %v959 = vpop.xlane.xlu0 %958
      %v960 = vmax.f32 %v833, %v835
      %961 = vmax.xlane.f32.xlu0 %v960
      %v962 = vpop.xlane.xlu0 %961
      %v963 = vmax.f32 %v839, %v841
      %964 = vmax.xlane.f32.xlu0 %v963
      %v965 = vpop.xlane.xlu0 %964
      %v966 = vmax.f32 %v845, %v847
      %967 = vmax.xlane.f32.xlu0 %v966
      %v968 = vpop.xlane.xlu0 %967
      %v969 = vmax.f32 %v851, %v853
      %970 = vmax.xlane.f32.xlu0 %v969
      %v971 = vpop.xlane.xlu0 %970
      %v972 = vmax.f32 %v857, %v859
      %973 = vmax.xlane.f32.xlu0 %v972
      %v974 = vpop.xlane.xlu0 %973
      %v975 = vmax.f32 %v863, %v865
      %976 = vmax.xlane.f32.xlu0 %v975
      %v977 = vpop.xlane.xlu0 %976
      %v978 = vmax.f32 %v869, %v871
      %979 = vmax.xlane.f32.xlu0 %v978
      %v980 = vpop.xlane.xlu0 %979
      %v981 = vmax.f32 %v875, %v877
      %982 = vmax.xlane.f32.xlu0 %v981
      %v983 = vpop.xlane.xlu0 %982
      %v984 = vmax.f32 %v881, %v883
      %985 = vmax.xlane.f32.xlu0 %v984
      %v986 = vpop.xlane.xlu0 %985
      %v987 = vmax.f32 %v887, %v889
      %988 = vmax.xlane.f32.xlu0 %v987
      %v989 = vpop.xlane.xlu0 %988
      %v990 = vmax.f32 %v893, %v895
      %991 = vmax.xlane.f32.xlu0 %v990
      %v992 = vpop.xlane.xlu0 %991
      %v993 = vmax.f32 %v899, %v911
      %v994 = vmax.f32 %v902, %v914
      %v995 = vmax.f32 %v905, %v917
      %v996 = vmax.f32 %v908, %v920
      %v997 = vmax.f32 %v993, %v923
      %v998 = vmax.f32 %v994, %v926
      %v999 = vmax.f32 %v995, %v929
      %v1000 = vmax.f32 %v996, %v932
      %v1001 = vmax.f32 %v997, %v935
      %v1002 = vmax.f32 %v998, %v938
      %v1003 = vmax.f32 %v999, %v941
      %v1004 = vmax.f32 %v1000, %v944
      %v1005 = vmax.f32 %v1001, %v947
      %v1006 = vmax.f32 %v1002, %v950
      %v1007 = vmax.f32 %v1003, %v953
      %v1008 = vmax.f32 %v1004, %v956
      %v1009 = vmax.f32 %v1005, %v959
      %v1010 = vmax.f32 %v1006, %v962
      %v1011 = vmax.f32 %v1007, %v965
      %v1012 = vmax.f32 %v1008, %v968
      %v1013 = vmax.f32 %v1009, %v971
      %v1014 = vmax.f32 %v1010, %v974
      %v1015 = vmax.f32 %v1011, %v977
      %v1016 = vmax.f32 %v1012, %v980
      %v1017 = vmax.f32 %v1013, %v983
      %v1018 = vmax.f32 %v1014, %v986
      %v1019 = vmax.f32 %v1015, %v989
      %v1020 = vmax.f32 %v1016, %v992
      %v1021 = vmax.f32 %v1017, %v1018
      %v1022 = vmax.f32 %v1019, %v1020
      %v1023 = vmax.f32 %v1021, %v1022
      %v1024 = vrot.slane %v1023, 4
      %v1025 = vmax.f32 %v1023, %v1024
      %v1026 = vrot.slane %v1025, 2
      %v1027 = vmax.f32 %v1025, %v1026
      %v1028 = vrot.slane %v1027, 1
      %v1029 = vmax.f32 %v1027, %v1028
      %v1030 = vsub.f32 %v707, %v1029
      %v1031 = vsub.f32 %v709, %v1029
      %v1032 = vsub.f32 %v713, %v1029
      %v1033 = vsub.f32 %v715, %v1029
      %v1034 = vsub.f32 %v719, %v1029
      %v1035 = vsub.f32 %v721, %v1029
      %v1036 = vsub.f32 %v725, %v1029
      %v1037 = vsub.f32 %v727, %v1029
      %v1038 = vsub.f32 %v731, %v1029
      %v1039 = vsub.f32 %v733, %v1029
      %v1040 = vsub.f32 %v737, %v1029
      %v1041 = vsub.f32 %v739, %v1029
      %v1042 = vsub.f32 %v743, %v1029
      %v1043 = vsub.f32 %v745, %v1029
      %v1044 = vsub.f32 %v749, %v1029
      %v1045 = vsub.f32 %v751, %v1029
      %v1046 = vsub.f32 %v755, %v1029
      %v1047 = vsub.f32 %v757, %v1029
      %v1048 = vsub.f32 %v761, %v1029
      %v1049 = vsub.f32 %v763, %v1029
      %v1050 = vsub.f32 %v767, %v1029
      %v1051 = vsub.f32 %v769, %v1029
      %v1052 = vsub.f32 %v773, %v1029
      %v1053 = vsub.f32 %v775, %v1029
      %v1054 = vsub.f32 %v779, %v1029
      %v1055 = vsub.f32 %v781, %v1029
      %v1056 = vsub.f32 %v785, %v1029
      %v1057 = vsub.f32 %v787, %v1029
      %v1058 = vsub.f32 %v791, %v1029
      %v1059 = vsub.f32 %v793, %v1029
      %v1060 = vsub.f32 %v797, %v1029
      %v1061 = vsub.f32 %v799, %v1029
      %v1062 = vsub.f32 %v803, %v1029
      %v1063 = vsub.f32 %v805, %v1029
      %v1064 = vsub.f32 %v809, %v1029
      %v1065 = vsub.f32 %v811, %v1029
      %v1066 = vsub.f32 %v815, %v1029
      %v1067 = vsub.f32 %v817, %v1029
      %v1068 = vsub.f32 %v821, %v1029
      %v1069 = vsub.f32 %v823, %v1029
      %v1070 = vsub.f32 %v827, %v1029
      %v1071 = vsub.f32 %v829, %v1029
      %v1072 = vsub.f32 %v833, %v1029
      %v1073 = vsub.f32 %v835, %v1029
      %v1074 = vsub.f32 %v839, %v1029
      %v1075 = vsub.f32 %v841, %v1029
      %v1076 = vsub.f32 %v845, %v1029
      %v1077 = vsub.f32 %v847, %v1029
      %v1078 = vsub.f32 %v851, %v1029
      %v1079 = vsub.f32 %v853, %v1029
      %v1080 = vsub.f32 %v857, %v1029
      %v1081 = vsub.f32 %v859, %v1029
      %v1082 = vsub.f32 %v863, %v1029
      %v1083 = vsub.f32 %v865, %v1029
      %v1084 = vsub.f32 %v869, %v1029
      %v1085 = vsub.f32 %v871, %v1029
      %v1086 = vsub.f32 %v875, %v1029
      %v1087 = vsub.f32 %v877, %v1029
      %v1088 = vsub.f32 %v881, %v1029
      %v1089 = vsub.f32 %v883, %v1029
      %v1090 = vsub.f32 %v887, %v1029
      %v1091 = vsub.f32 %v889, %v1029
      %v1092 = vsub.f32 %v893, %v1029
      %v1093 = vsub.f32 %v895, %v1029
      %v1094 = vmul.f32 %v1030, 1.442695
      %v1095 = vpow.pop %v1094
      %v1096 = vmul.f32 %v1031, 1.442695
      %v1097 = vpow.pop %v1096
      %v1098 = vmul.f32 %v1032, 1.442695
      %v1099 = vpow.pop %v1098
      %v1100 = vmul.f32 %v1033, 1.442695
      %v1101 = vpow.pop %v1100
      %v1102 = vmul.f32 %v1034, 1.442695
      %v1103 = vpow.pop %v1102
      %v1104 = vmul.f32 %v1035, 1.442695
      %v1105 = vpow.pop %v1104
      %v1106 = vmul.f32 %v1036, 1.442695
      %v1107 = vpow.pop %v1106
      %v1108 = vmul.f32 %v1037, 1.442695
      %v1109 = vpow.pop %v1108
      %v1110 = vmul.f32 %v1038, 1.442695
      %v1111 = vpow.pop %v1110
      %v1112 = vmul.f32 %v1039, 1.442695
      %v1113 = vpow.pop %v1112
      %v1114 = vmul.f32 %v1040, 1.442695
      %v1115 = vpow.pop %v1114
      %v1116 = vmul.f32 %v1041, 1.442695
      %v1117 = vpow.pop %v1116
      %v1118 = vmul.f32 %v1042, 1.442695
      %v1119 = vpow.pop %v1118
      %v1120 = vmul.f32 %v1043, 1.442695
      %v1121 = vpow.pop %v1120
      %v1122 = vmul.f32 %v1044, 1.442695
      %v1123 = vpow.pop %v1122
      %v1124 = vmul.f32 %v1045, 1.442695
      %v1125 = vpow.pop %v1124
      %v1126 = vmul.f32 %v1046, 1.442695
      %v1127 = vpow.pop %v1126
      %v1128 = vmul.f32 %v1047, 1.442695
      %v1129 = vpow.pop %v1128
      %v1130 = vmul.f32 %v1048, 1.442695
      %v1131 = vpow.pop %v1130
      %v1132 = vmul.f32 %v1049, 1.442695
      %v1133 = vpow.pop %v1132
      %v1134 = vmul.f32 %v1050, 1.442695
      %v1135 = vpow.pop %v1134
      %v1136 = vmul.f32 %v1051, 1.442695
      %v1137 = vpow.pop %v1136
      %v1138 = vmul.f32 %v1052, 1.442695
      %v1139 = vpow.pop %v1138
      %v1140 = vmul.f32 %v1053, 1.442695
      %v1141 = vpow.pop %v1140
      %v1142 = vmul.f32 %v1054, 1.442695
      %v1143 = vpow.pop %v1142
      %v1144 = vmul.f32 %v1055, 1.442695
      %v1145 = vpow.pop %v1144
      %v1146 = vmul.f32 %v1056, 1.442695
      %v1147 = vpow.pop %v1146
      %v1148 = vmul.f32 %v1057, 1.442695
      %v1149 = vpow.pop %v1148
      %v1150 = vmul.f32 %v1058, 1.442695
      %v1151 = vpow.pop %v1150
      %v1152 = vmul.f32 %v1059, 1.442695
      %v1153 = vpow.pop %v1152
      %v1154 = vmul.f32 %v1060, 1.442695
      %v1155 = vpow.pop %v1154
      %v1156 = vmul.f32 %v1061, 1.442695
      %v1157 = vpow.pop %v1156
      %v1158 = vmul.f32 %v1062, 1.442695
      %v1159 = vpow.pop %v1158
      %v1160 = vmul.f32 %v1063, 1.442695
      %v1161 = vpow.pop %v1160
      %v1162 = vmul.f32 %v1064, 1.442695
      %v1163 = vpow.pop %v1162
      %v1164 = vmul.f32 %v1065, 1.442695
      %v1165 = vpow.pop %v1164
      %v1166 = vmul.f32 %v1066, 1.442695
      %v1167 = vpow.pop %v1166
      %v1168 = vmul.f32 %v1067, 1.442695
      %v1169 = vpow.pop %v1168
      %v1170 = vmul.f32 %v1068, 1.442695
      %v1171 = vpow.pop %v1170
      %v1172 = vmul.f32 %v1069, 1.442695
      %v1173 = vpow.pop %v1172
      %v1174 = vmul.f32 %v1070, 1.442695
      %v1175 = vpow.pop %v1174
      %v1176 = vmul.f32 %v1071, 1.442695
      %v1177 = vpow.pop %v1176
      %v1178 = vmul.f32 %v1072, 1.442695
      %v1179 = vpow.pop %v1178
      %v1180 = vmul.f32 %v1073, 1.442695
      %v1181 = vpow.pop %v1180
      %v1182 = vmul.f32 %v1074, 1.442695
      %v1183 = vpow.pop %v1182
      %v1184 = vmul.f32 %v1075, 1.442695
      %v1185 = vpow.pop %v1184
      %v1186 = vmul.f32 %v1076, 1.442695
      %v1187 = vpow.pop %v1186
      %v1188 = vmul.f32 %v1077, 1.442695
      %v1189 = vpow.pop %v1188
      %v1190 = vmul.f32 %v1078, 1.442695
      %v1191 = vpow.pop %v1190
      %v1192 = vmul.f32 %v1079, 1.442695
      %v1193 = vpow.pop %v1192
      %v1194 = vmul.f32 %v1080, 1.442695
      %v1195 = vpow.pop %v1194
      %v1196 = vmul.f32 %v1081, 1.442695
      %v1197 = vpow.pop %v1196
      %v1198 = vmul.f32 %v1082, 1.442695
      %v1199 = vpow.pop %v1198
      %v1200 = vmul.f32 %v1083, 1.442695
      %v1201 = vpow.pop %v1200
      %v1202 = vmul.f32 %v1084, 1.442695
      %v1203 = vpow.pop %v1202
      %v1204 = vmul.f32 %v1085, 1.442695
      %v1205 = vpow.pop %v1204
      %v1206 = vmul.f32 %v1086, 1.442695
      %v1207 = vpow.pop %v1206
      %v1208 = vmul.f32 %v1087, 1.442695
      %v1209 = vpow.pop %v1208
      %v1210 = vmul.f32 %v1088, 1.442695
      %v1211 = vpow.pop %v1210
      %v1212 = vmul.f32 %v1089, 1.442695
      %v1213 = vpow.pop %v1212
      %v1214 = vmul.f32 %v1090, 1.442695
      %v1215 = vpow.pop %v1214
      %v1216 = vmul.f32 %v1091, 1.442695
      %v1217 = vpow.pop %v1216
      %v1218 = vmul.f32 %v1092, 1.442695
      %v1219 = vpow.pop %v1218
      %v1220 = vmul.f32 %v1093, 1.442695
      %v1221 = vpow.pop %v1220
      %v1222 = vadd.f32 %v1095, %v1099
      %v1223 = vadd.f32 %v1222, %v1103
      %v1224 = vadd.f32 %v1223, %v1107
      %v1225 = vadd.f32 %v1224, %v1111
      %v1226 = vadd.f32 %v1225, %v1115
      %v1227 = vadd.f32 %v1226, %v1119
      %v1228 = vadd.f32 %v1227, %v1123
      %v1229 = vadd.f32 %v1228, %v1127
      %v1230 = vadd.f32 %v1229, %v1131
      %v1231 = vadd.f32 %v1230, %v1135
      %v1232 = vadd.f32 %v1231, %v1139
      %v1233 = vadd.f32 %v1232, %v1143
      %v1234 = vadd.f32 %v1233, %v1147
      %v1235 = vadd.f32 %v1234, %v1151
      %v1236 = vadd.f32 %v1235, %v1155
      %v1237 = vadd.f32 %v1236, %v1159
      %v1238 = vadd.f32 %v1237, %v1163
      %v1239 = vadd.f32 %v1238, %v1167
      %v1240 = vadd.f32 %v1239, %v1171
      %v1241 = vadd.f32 %v1240, %v1175
      %v1242 = vadd.f32 %v1241, %v1179
      %v1243 = vadd.f32 %v1242, %v1183
      %v1244 = vadd.f32 %v1243, %v1187
      %v1245 = vadd.f32 %v1244, %v1191
      %v1246 = vadd.f32 %v1245, %v1195
      %v1247 = vadd.f32 %v1246, %v1199
      %v1248 = vadd.f32 %v1247, %v1203
      %v1249 = vadd.f32 %v1248, %v1207
      %v1250 = vadd.f32 %v1249, %v1211
      %v1251 = vadd.f32 %v1250, %v1215
      %v1252 = vadd.f32 %v1251, %v1219
      %v1253 = vrot.slane %v1252, 4
      %v1254 = vadd.f32 %v1252, %v1253
      %v1255 = vrot.slane %v1254, 2
      %v1256 = vadd.f32 %v1254, %v1255
      %v1257 = vrot.slane %v1256, 1
      %v1258 = vadd.f32 %v1256, %v1257
      %v1259 = vadd.f32 %v1097, %v1101
      %v1260 = vadd.f32 %v1259, %v1105
      %v1261 = vadd.f32 %v1260, %v1109
      %v1262 = vadd.f32 %v1261, %v1113
      %v1263 = vadd.f32 %v1262, %v1117
      %v1264 = vadd.f32 %v1263, %v1121
      %v1265 = vadd.f32 %v1264, %v1125
      %v1266 = vadd.f32 %v1265, %v1129
      %v1267 = vadd.f32 %v1266, %v1133
      %v1268 = vadd.f32 %v1267, %v1137
      %v1269 = vadd.f32 %v1268, %v1141
      %v1270 = vadd.f32 %v1269, %v1145
      %v1271 = vadd.f32 %v1270, %v1149
      %v1272 = vadd.f32 %v1271, %v1153
      %v1273 = vadd.f32 %v1272, %v1157
      %v1274 = vadd.f32 %v1273, %v1161
      %v1275 = vadd.f32 %v1274, %v1165
      %v1276 = vadd.f32 %v1275, %v1169
      %v1277 = vadd.f32 %v1276, %v1173
      %v1278 = vadd.f32 %v1277, %v1177
      %v1279 = vadd.f32 %v1278, %v1181
      %v1280 = vadd.f32 %v1279, %v1185
      %v1281 = vadd.f32 %v1280, %v1189
      %v1282 = vadd.f32 %v1281, %v1193
      %v1283 = vadd.f32 %v1282, %v1197
      %v1284 = vadd.f32 %v1283, %v1201
      %v1285 = vadd.f32 %v1284, %v1205
      %v1286 = vadd.f32 %v1285, %v1209
      %v1287 = vadd.f32 %v1286, %v1213
      %v1288 = vadd.f32 %v1287, %v1217
      %v1289 = vadd.f32 %v1288, %v1221
      %v1290 = vrot.slane %v1289, 4
      %v1291 = vadd.f32 %v1289, %v1290
      %v1292 = vrot.slane %v1291, 2
      %v1293 = vadd.f32 %v1291, %v1292
      %v1294 = vrot.slane %v1293, 1
      %v1295 = vadd.f32 %v1293, %v1294
      %1296 = vmatprep.subr.mxu0 %v1097
      %1297 = vmatpush1.xpose.msra.mxu0 %v1095
      %1298 = vmatprep.subr.mxu0 %v1101
      %1299 = vmatpush1.xpose.msra.mxu0 %v1099
      %1300 = vmatprep.subr.mxu0 %v1105
      %1301 = vmatpush1.xpose.msra.mxu0 %v1103
      %1302 = vmatprep.subr.mxu0 %v1109
      %1303 = vmatpush1.xpose.msra.mxu0 %v1107
      %1304 = vmatprep.subr.mxu0 %v1113
      %1305 = vmatpush1.xpose.msra.mxu0 %v1111
      %1306 = vmatprep.subr.mxu0 %v1117
      %1307 = vmatpush1.xpose.msra.mxu0 %v1115
      %1308 = vmatprep.subr.mxu0 %v1121
      %1309 = vmatpush1.xpose.msra.mxu0 %v1119
      %1310 = vmatprep.subr.mxu0 %v1125
      %1311 = vmatpush1.xpose.msra.mxu0 %v1123
      %1312 = vmatprep.subr.mxu0 %v1129
      %1313 = vmatpush1.xpose.msra.mxu0 %v1127
      %1314 = vmatprep.subr.mxu0 %v1133
      %1315 = vmatpush1.xpose.msra.mxu0 %v1131
      %1316 = vmatprep.subr.mxu0 %v1137
      %1317 = vmatpush1.xpose.msra.mxu0 %v1135
      %1318 = vmatprep.subr.mxu0 %v1141
      %1319 = vmatpush1.xpose.msra.mxu0 %v1139
      %1320 = vmatprep.subr.mxu0 %v1145
      %1321 = vmatpush1.xpose.msra.mxu0 %v1143
      %1322 = vmatprep.subr.mxu0 %v1149
      %1323 = vmatpush1.xpose.msra.mxu0 %v1147
      %1324 = vmatprep.subr.mxu0 %v1153
      %1325 = vmatpush1.xpose.msra.mxu0 %v1151
      %1326 = vmatprep.subr.mxu0 %v1157
      %1327 = vmatpush1.xpose.msra.mxu0 %v1155
      %1328 = vmatprep.subr.mxu0 %v1161
      %1329 = vmatpush1.xpose.msra.mxu0 %v1159
      %1330 = vmatprep.subr.mxu0 %v1165
      %1331 = vmatpush1.xpose.msra.mxu0 %v1163
      %1332 = vmatprep.subr.mxu0 %v1169
      %1333 = vmatpush1.xpose.msra.mxu0 %v1167
      %1334 = vmatprep.subr.mxu0 %v1173
      %1335 = vmatpush1.xpose.msra.mxu0 %v1171
      %1336 = vmatprep.subr.mxu0 %v1177
      %1337 = vmatpush1.xpose.msra.mxu0 %v1175
      %1338 = vmatprep.subr.mxu0 %v1181
      %1339 = vmatpush1.xpose.msra.mxu0 %v1179
      %1340 = vmatprep.subr.mxu0 %v1185
      %1341 = vmatpush1.xpose.msra.mxu0 %v1183
      %1342 = vmatprep.subr.mxu0 %v1189
      %1343 = vmatpush1.xpose.msra.mxu0 %v1187
      %1344 = vmatprep.subr.mxu0 %v1193
      %1345 = vmatpush1.xpose.msra.mxu0 %v1191
      %1346 = vmatprep.subr.mxu0 %v1197
      %1347 = vmatpush1.xpose.msra.mxu0 %v1195
      %1348 = vmatprep.subr.mxu0 %v1201
      %1349 = vmatpush1.xpose.msra.mxu0 %v1199
      %1350 = vmatprep.subr.mxu0 %v1205
      %1351 = vmatpush1.xpose.msra.mxu0 %v1203
      %1352 = vmatprep.subr.mxu0 %v1209
      %1353 = vmatpush1.xpose.msra.mxu0 %v1207
      %1354 = vmatprep.subr.mxu0 %v1213
      %1355 = vmatpush1.xpose.msra.mxu0 %v1211
      %1356 = vmatprep.subr.mxu0 %v1217
      %1357 = vmatpush1.xpose.msra.mxu0 %v1215
      %1358 = vmatprep.subr.mxu0 %v1221
      %1359 = vmatpush1.xpose.msra.mxu0 %v1219
      %1360 = vmatprep.mubr.f32.mxu0 %v464
      %1361 = vmatmul.mubr.f32.gmra.mrb[0].mxu0 %v463
      %v1362 = vpop.f32.mrb[0].mxu0
      %v1363 = vadd.f32 0.0, %v1362
      %v1364 = vpop.f32.mrb[0].mxu0
      %v1365 = vadd.f32 0.0, %v1364
      %1366 = vmatprep.mubr.f32.mxu0 %v466
      %1367 = vmatmul.mubr.f32.gmra.mrb[0].mxu0 %v465
      %v1368 = vpop.f32.mrb[0].mxu0
      %v1369 = vadd.f32 0.0, %v1368
      %v1370 = vpop.f32.mrb[0].mxu0
      %v1371 = vadd.f32 0.0, %v1370
      %1372 = vmatprep.mubr.f32.mxu0 %v468
      %1373 = vmatmul.mubr.f32.gmra.mrb[0].mxu0 %v467
      %v1374 = vpop.f32.mrb[0].mxu0
      %v1375 = vadd.f32 0.0, %v1374
      %v1376 = vpop.f32.mrb[0].mxu0
      %v1377 = vadd.f32 0.0, %v1376
      %1378 = vmatprep.mubr.f32.mxu0 %v470
      %1379 = vmatmul.mubr.f32.gmra.mrb[0].mxu0 %v469
      %v1380 = vpop.f32.mrb[0].mxu0
      %v1381 = vadd.f32 0.0, %v1380
      %v1382 = vpop.f32.mrb[0].mxu0
      %v1383 = vadd.f32 0.0, %v1382
      %1384 = vdwg.mxu0
      %v1385 = vrcp.pop %v1258
      %v1386 = vrcp.pop %v1295
      %v1387 = vmul.f32 %v1363, %v1385
      %v1388 = vmul.f32 %v1365, %v1386
      %v1389 = vmul.f32 %v1369, %v1385
      %v1390 = vmul.f32 %v1371, %v1386
      %v1391 = vmul.f32 %v1375, %v1385
      %v1392 = vmul.f32 %v1377, %v1386
      %v1393 = vmul.f32 %v1381, %v1385
      %v1394 = vmul.f32 %v1383, %v1386
      %v1395 = vadd.f32 %v463, %v1387
      %v1396 = vadd.f32 %v464, %v1388
      %v1397 = vadd.f32 %v465, %v1389
      %v1398 = vadd.f32 %v466, %v1390
      %v1399 = vadd.f32 %v467, %v1391
      %v1400 = vadd.f32 %v468, %v1392
      %v1401 = vadd.f32 %v469, %v1393
      %v1402 = vadd.f32 %v470, %v1394
      %1403 = vmatprep.subr.mxu0 %v472
      %1404 = vmatpush1.xpose.msra.mxu0 %v471
      %1405 = vmatprep.subr.mxu0 %v474
      %1406 = vmatpush1.xpose.msra.mxu0 %v473
      %1407 = vmatprep.subr.mxu0 %v476
      %1408 = vmatpush1.xpose.msra.mxu0 %v475
      %1409 = vmatprep.subr.mxu0 %v478
      %1410 = vmatpush1.xpose.msra.mxu0 %v477
      %1411 = vmatprep.subr.mxu0 0.0
      %1412 = vmatpush1.xpose.msra.mxu0 0.0
      %1413 = vmatprep.subr.mxu0 0.0
      %1414 = vmatpush1.xpose.msra.mxu0 0.0
      %1415 = vmatprep.subr.mxu0 0.0
      %1416 = vmatpush1.xpose.msra.mxu0 0.0
      %1417 = vmatprep.subr.mxu0 0.0
      %1418 = vmatpush1.xpose.msra.mxu0 0.0
      %1419 = vmatprep.subr.mxu0 0.0
      %1420 = vmatpush1.xpose.msra.mxu0 0.0
      %1421 = vmatprep.subr.mxu0 0.0
      %1422 = vmatpush1.xpose.msra.mxu0 0.0
      %1423 = vmatprep.subr.mxu0 0.0
      %1424 = vmatpush1.xpose.msra.mxu0 0.0
      %1425 = vmatprep.subr.mxu0 0.0
      %1426 = vmatpush1.xpose.msra.mxu0 0.0
      %1427 = vmatprep.subr.mxu0 0.0
      %1428 = vmatpush1.xpose.msra.mxu0 0.0
      %1429 = vmatprep.subr.mxu0 0.0
      %1430 = vmatpush1.xpose.msra.mxu0 0.0
      %1431 = vmatprep.subr.mxu0 0.0
      %1432 = vmatpush1.xpose.msra.mxu0 0.0
      %1433 = vmatprep.subr.mxu0 0.0
      %1434 = vmatpush1.xpose.msra.mxu0 0.0
      %1435 = vmatprep.subr.mxu0 0.0
      %1436 = vmatpush1.xpose.msra.mxu0 0.0
      %1437 = vmatprep.subr.mxu0 0.0
      %1438 = vmatpush1.xpose.msra.mxu0 0.0
      %1439 = vmatprep.subr.mxu0 0.0
      %1440 = vmatpush1.xpose.msra.mxu0 0.0
      %1441 = vmatprep.subr.mxu0 0.0
      %1442 = vmatpush1.xpose.msra.mxu0 0.0
      %1443 = vmatprep.subr.mxu0 0.0
      %1444 = vmatpush1.xpose.msra.mxu0 0.0
      %1445 = vmatprep.subr.mxu0 0.0
      %1446 = vmatpush1.xpose.msra.mxu0 0.0
      %1447 = vmatprep.subr.mxu0 0.0
      %1448 = vmatpush1.xpose.msra.mxu0 0.0
      %1449 = vmatprep.subr.mxu0 0.0
      %1450 = vmatpush1.xpose.msra.mxu0 0.0
      %1451 = vmatprep.subr.mxu0 0.0
      %1452 = vmatpush1.xpose.msra.mxu0 0.0
      %1453 = vmatprep.subr.mxu0 0.0
      %1454 = vmatpush1.xpose.msra.mxu0 0.0
      %1455 = vmatprep.subr.mxu0 0.0
      %1456 = vmatpush1.xpose.msra.mxu0 0.0
      %1457 = vmatprep.subr.mxu0 0.0
      %1458 = vmatpush1.xpose.msra.mxu0 0.0
      %1459 = vmatprep.subr.mxu0 0.0
      %1460 = vmatpush1.xpose.msra.mxu0 0.0
      %1461 = vmatprep.subr.mxu0 0.0
      %1462 = vmatpush1.xpose.msra.mxu0 0.0
      %1463 = vmatprep.subr.mxu0 0.0
      %1464 = vmatpush1.xpose.msra.mxu0 0.0
      %1465 = vmatprep.subr.mxu0 0.0
      %1466 = vmatpush1.xpose.msra.mxu0 0.0
      %1467 = vmatprep.mubr.f32.mxu0 %v472
      %1468 = vmatmul.mubr.f32.gmra.mrb[0].mxu0 %v471
      %v1469 = vpop.f32.mrb[0].mxu0
      %v1470 = vadd.f32 0.0, %v1469
      %v1471 = vpop.f32.mrb[0].mxu0
      %1472 = vmatprep.mubr.f32.mxu0 %v474
      %1473 = vmatmul.mubr.f32.gmra.mrb[0].mxu0 %v473
      %v1474 = vpop.f32.mrb[0].mxu0
      %v1475 = vadd.f32 0.0, %v1474
      %v1476 = vpop.f32.mrb[0].mxu0
      %1477 = vmatprep.mubr.f32.mxu0 %v476
      %1478 = vmatmul.mubr.f32.gmra.mrb[0].mxu0 %v475
      %v1479 = vpop.f32.mrb[0].mxu0
      %v1480 = vadd.f32 0.0, %v1479
      %v1481 = vpop.f32.mrb[0].mxu0
      %1482 = vmatprep.mubr.f32.mxu0 %v478
      %1483 = vmatmul.mubr.f32.gmra.mrb[0].mxu0 %v477
      %v1484 = vpop.f32.mrb[0].mxu0
      %v1485 = vadd.f32 0.0, %v1484
      %v1486 = vpop.f32.mrb[0].mxu0
      %1487 = vdwg.mxu0
      %v1488 = vsel %vm543, %v1470, -inf
      %1489 = vmax.xlane.f32.xlu0 %v1488
      %v1490 = vpop.xlane.xlu0 %1489
      %v1491 = vsel %vm543, %v1475, -inf
      %1492 = vmax.xlane.f32.xlu0 %v1491
      %v1493 = vpop.xlane.xlu0 %1492
      %v1494 = vsel %vm543, %v1480, -inf
      %1495 = vmax.xlane.f32.xlu0 %v1494
      %v1496 = vpop.xlane.xlu0 %1495
      %v1497 = vsel %vm543, %v1485, -inf
      %1498 = vmax.xlane.f32.xlu0 %v1497
      %v1499 = vpop.xlane.xlu0 %1498
      %v1500 = vsub.f32 %v1470, %v1490
      %v1501 = vsub.f32 %v1475, %v1493
      %v1502 = vsub.f32 %v1480, %v1496
      %v1503 = vsub.f32 %v1485, %v1499
      %v1504 = vmul.f32 %v1500, 1.442695
      %v1505 = vpow.pop %v1504
      %v1506 = vmul.f32 %v1501, 1.442695
      %v1507 = vpow.pop %v1506
      %v1508 = vmul.f32 %v1502, 1.442695
      %v1509 = vpow.pop %v1508
      %v1510 = vmul.f32 %v1503, 1.442695
      %v1511 = vpow.pop %v1510
      %v1512 = vsel %vm543, %v1505, 0.0
      %1513 = vadd.xlane.f32.xlu0 %v1512
      %v1514 = vpop.xlane.xlu0 %1513
      %v1515 = vsel %vm543, %v1507, 0.0
      %1516 = vadd.xlane.f32.xlu0 %v1515
      %v1517 = vpop.xlane.xlu0 %1516
      %v1518 = vsel %vm543, %v1509, 0.0
      %1519 = vadd.xlane.f32.xlu0 %v1518
      %v1520 = vpop.xlane.xlu0 %1519
      %v1521 = vsel %vm543, %v1511, 0.0
      %1522 = vadd.xlane.f32.xlu0 %v1521
      %v1523 = vpop.xlane.xlu0 %1522
      %v1525 = vsel %vm543, %v1505, 0
      %v1528 = vsel %vm543, %v1507, 0
      %v1531 = vsel %vm543, %v1509, 0
      %v1534 = vsel %vm543, %v1511, 0
      %1536 = vmatprep.subr.mxu0 %v472
      %1537 = vmatpush1.msra.mxu0 %v471
      %1538 = vmatprep.subr.mxu0 %v474
      %1539 = vmatpush1.msra.mxu0 %v473
      %1540 = vmatprep.subr.mxu0 %v476
      %1541 = vmatpush1.msra.mxu0 %v475
      %1542 = vmatprep.subr.mxu0 %v478
      %1543 = vmatpush1.msra.mxu0 %v477
      %1544 = vmatprep.subr.mxu0 0.0
      %1545 = vmatpush1.msra.mxu0 0.0
      %1546 = vmatprep.subr.mxu0 0.0
      %1547 = vmatpush1.msra.mxu0 0.0
      %1548 = vmatprep.subr.mxu0 0.0
      %1549 = vmatpush1.msra.mxu0 0.0
      %1550 = vmatprep.subr.mxu0 0.0
      %1551 = vmatpush1.msra.mxu0 0.0
      %1552 = vmatprep.subr.mxu0 0.0
      %1553 = vmatpush1.msra.mxu0 0.0
      %1554 = vmatprep.subr.mxu0 0.0
      %1555 = vmatpush1.msra.mxu0 0.0
      %1556 = vmatprep.subr.mxu0 0.0
      %1557 = vmatpush1.msra.mxu0 0.0
      %1558 = vmatprep.subr.mxu0 0.0
      %1559 = vmatpush1.msra.mxu0 0.0
      %1560 = vmatprep.subr.mxu0 0.0
      %1561 = vmatpush1.msra.mxu0 0.0
      %1562 = vmatprep.subr.mxu0 0.0
      %1563 = vmatpush1.msra.mxu0 0.0
      %1564 = vmatprep.subr.mxu0 0.0
      %1565 = vmatpush1.msra.mxu0 0.0
      %1566 = vmatprep.subr.mxu0 0.0
      %1567 = vmatpush1.msra.mxu0 0.0
      %1568 = vmatprep.subr.mxu0 0.0
      %1569 = vmatpush1.msra.mxu0 0.0
      %1570 = vmatprep.subr.mxu0 0.0
      %1571 = vmatpush1.msra.mxu0 0.0
      %1572 = vmatprep.subr.mxu0 0.0
      %1573 = vmatpush1.msra.mxu0 0.0
      %1574 = vmatprep.subr.mxu0 0.0
      %1575 = vmatpush1.msra.mxu0 0.0
      %1576 = vmatprep.subr.mxu0 0.0
      %1577 = vmatpush1.msra.mxu0 0.0
      %1578 = vmatprep.subr.mxu0 0.0
      %1579 = vmatpush1.msra.mxu0 0.0
      %1580 = vmatprep.subr.mxu0 0.0
      %1581 = vmatpush1.msra.mxu0 0.0
      %1582 = vmatprep.subr.mxu0 0.0
      %1583 = vmatpush1.msra.mxu0 0.0
      %1584 = vmatprep.subr.mxu0 0.0
      %1585 = vmatpush1.msra.mxu0 0.0
      %1586 = vmatprep.subr.mxu0 0.0
      %1587 = vmatpush1.msra.mxu0 0.0
      %1588 = vmatprep.subr.mxu0 0.0
      %1589 = vmatpush1.msra.mxu0 0.0
      %1590 = vmatprep.subr.mxu0 0.0
      %1591 = vmatpush1.msra.mxu0 0.0
      %1592 = vmatprep.subr.mxu0 0.0
      %1593 = vmatpush1.msra.mxu0 0.0
      %1594 = vmatprep.subr.mxu0 0.0
      %1595 = vmatpush1.msra.mxu0 0.0
      %1596 = vmatprep.subr.mxu0 0.0
      %1597 = vmatpush1.msra.mxu0 0.0
      %1598 = vmatprep.subr.mxu0 0.0
      %1599 = vmatpush1.msra.mxu0 0.0
      %1600 = vmatprep.mubr.f32.mxu0 0.0
      %1601 = vmatmul.mubr.f32.gmra.mrb[0].mxu0 %v1525
      %v1602 = vpop.f32.mrb[0].mxu0
      %v1603 = vadd.f32 0.0, %v1602
      %v1604 = vpop.f32.mrb[0].mxu0
      %v1605 = vadd.f32 0.0, %v1604
      %1606 = vmatprep.mubr.f32.mxu0 0.0
      %1607 = vmatmul.mubr.f32.gmra.mrb[0].mxu0 %v1528
      %v1608 = vpop.f32.mrb[0].mxu0
      %v1609 = vadd.f32 0.0, %v1608
      %v1610 = vpop.f32.mrb[0].mxu0
      %v1611 = vadd.f32 0.0, %v1610
      %1612 = vmatprep.mubr.f32.mxu0 0.0
      %1613 = vmatmul.mubr.f32.gmra.mrb[0].mxu0 %v1531
      %v1614 = vpop.f32.mrb[0].mxu0
      %v1615 = vadd.f32 0.0, %v1614
      %v1616 = vpop.f32.mrb[0].mxu0
      %v1617 = vadd.f32 0.0, %v1616
      %1618 = vmatprep.mubr.f32.mxu0 0.0
      %1619 = vmatmul.mubr.f32.gmra.mrb[0].mxu0 %v1534
      %v1620 = vpop.f32.mrb[0].mxu0
      %v1621 = vadd.f32 0.0, %v1620
      %v1622 = vpop.f32.mrb[0].mxu0
      %v1623 = vadd.f32 0.0, %v1622
      %1624 = vdwg.mxu0
      %v1625 = vrcp.pop %v1514
      %v1626 = vrcp.pop %v1517
      %v1627 = vrcp.pop %v1520
      %v1628 = vrcp.pop %v1523
      %v1629 = vmul.f32 %v1603, %v1625
      %v1630 = vmul.f32 %v1605, %v1625
      %v1631 = vmul.f32 %v1609, %v1626
      %v1632 = vmul.f32 %v1611, %v1626
      %v1633 = vmul.f32 %v1615, %v1627
      %v1634 = vmul.f32 %v1617, %v1627
      %v1635 = vmul.f32 %v1621, %v1628
      %v1636 = vmul.f32 %v1623, %v1628
      %v1637 = vadd.f32 %v471, %v1629
      %v1638 = vadd.f32 %v472, %v1630
      %v1639 = vadd.f32 %v473, %v1631
      %v1640 = vadd.f32 %v474, %v1632
      %v1641 = vadd.f32 %v475, %v1633
      %v1642 = vadd.f32 %v476, %v1634
      %v1643 = vadd.f32 %v477, %v1635
      %v1644 = vadd.f32 %v478, %v1636
      %v1645 = vadd.f32 %v1395, %v1637
      %v1646 = vadd.f32 %v1396, %v1638
      %v1647 = vadd.f32 %v1397, %v1639
      %v1648 = vadd.f32 %v1398, %v1640
      %v1649 = vadd.f32 %v1399, %v1641
      %v1650 = vadd.f32 %v1400, %v1642
      %v1651 = vadd.f32 %v1401, %v1643
      %v1652 = vadd.f32 %v1402, %v1644
      %v1653 = vld [vmem:[%s3] sm:$0xff]
      %v1654 = vld [vmem:[%s4] sm:$0xff]
      %1656 = vset.pattern.permute.xlu0 0
      %1657 = vperm.xlu0 %1656, %v1654
      %v1658 = vpop.permute.xlu0 %1657
      %v1661 = vsel %vm543, %v1653, 0
      %1663 = vmatprep.subr.mxu0 %v1646
      %1664 = vmatpush1.msra.mxu0 %v1645
      %1665 = vmatprep.subr.mxu0 %v1648
      %1666 = vmatpush1.msra.mxu0 %v1647
      %1667 = vmatprep.subr.mxu0 %v1650
      %1668 = vmatpush1.msra.mxu0 %v1649
      %1669 = vmatprep.subr.mxu0 %v1652
      %1670 = vmatpush1.msra.mxu0 %v1651
      %1671 = vmatprep.subr.mxu0 0.0
      %1672 = vmatpush1.msra.mxu0 0.0
      %1673 = vmatprep.subr.mxu0 0.0
      %1674 = vmatpush1.msra.mxu0 0.0
      %1675 = vmatprep.subr.mxu0 0.0
      %1676 = vmatpush1.msra.mxu0 0.0
      %1677 = vmatprep.subr.mxu0 0.0
      %1678 = vmatpush1.msra.mxu0 0.0
      %1679 = vmatprep.subr.mxu0 0.0
      %1680 = vmatpush1.msra.mxu0 0.0
      %1681 = vmatprep.subr.mxu0 0.0
      %1682 = vmatpush1.msra.mxu0 0.0
      %1683 = vmatprep.subr.mxu0 0.0
      %1684 = vmatpush1.msra.mxu0 0.0
      %1685 = vmatprep.subr.mxu0 0.0
      %1686 = vmatpush1.msra.mxu0 0.0
      %1687 = vmatprep.subr.mxu0 0.0
      %1688 = vmatpush1.msra.mxu0 0.0
      %1689 = vmatprep.subr.mxu0 0.0
      %1690 = vmatpush1.msra.mxu0 0.0
      %1691 = vmatprep.subr.mxu0 0.0
      %1692 = vmatpush1.msra.mxu0 0.0
      %1693 = vmatprep.subr.mxu0 0.0
      %1694 = vmatpush1.msra.mxu0 0.0
      %1695 = vmatprep.subr.mxu0 0.0
      %1696 = vmatpush1.msra.mxu0 0.0
      %1697 = vmatprep.subr.mxu0 0.0
      %1698 = vmatpush1.msra.mxu0 0.0
      %1699 = vmatprep.subr.mxu0 0.0
      %1700 = vmatpush1.msra.mxu0 0.0
      %1701 = vmatprep.subr.mxu0 0.0
      %1702 = vmatpush1.msra.mxu0 0.0
      %1703 = vmatprep.subr.mxu0 0.0
      %1704 = vmatpush1.msra.mxu0 0.0
      %1705 = vmatprep.subr.mxu0 0.0
      %1706 = vmatpush1.msra.mxu0 0.0
      %1707 = vmatprep.subr.mxu0 0.0
      %1708 = vmatpush1.msra.mxu0 0.0
      %1709 = vmatprep.subr.mxu0 0.0
      %1710 = vmatpush1.msra.mxu0 0.0
      %1711 = vmatprep.subr.mxu0 0.0
      %1712 = vmatpush1.msra.mxu0 0.0
      %1713 = vmatprep.subr.mxu0 0.0
      %1714 = vmatpush1.msra.mxu0 0.0
      %1715 = vmatprep.subr.mxu0 0.0
      %1716 = vmatpush1.msra.mxu0 0.0
      %1717 = vmatprep.subr.mxu0 0.0
      %1718 = vmatpush1.msra.mxu0 0.0
      %1719 = vmatprep.subr.mxu0 0.0
      %1720 = vmatpush1.msra.mxu0 0.0
      %1721 = vmatprep.subr.mxu0 0.0
      %1722 = vmatpush1.msra.mxu0 0.0
      %1723 = vmatprep.subr.mxu0 0.0
      %1724 = vmatpush1.msra.mxu0 0.0
      %1725 = vmatprep.subr.mxu0 0.0
      %1726 = vmatpush1.msra.mxu0 0.0
      %1727 = vmatprep.mubr.f32.mxu0 0.0
      %1728 = vmatmul.mubr.f32.gmra.mrb[0].mxu0 %v1661
      %v1729 = vpop.f32.mrb[0].mxu0
      %v1730 = vadd.f32 %v1658, %v1729
      %v1731 = vpop.f32.mrb[0].mxu0
      %v1732 = vadd.f32 %v1658, %v1731
      %1733 = vdwg.mxu0
      %v1734 = vpack.c.bf16 %v1730, %v1730
      %v1735 = vpack.c.bf16 %v1732, %v1732
      %v1736 = vld [vmem:[%s5] sm:$0xff]
      %v1737 = vld [vmem:[%s5 + $0x8] sm:$0xff]
      %v1738 = vld [vmem:[%s5 + $0x10] sm:$0xff]
      %v1739 = vld [vmem:[%s5 + $0x18] sm:$0xff]
      %v1740 = vld [vmem:[%s5 + $0x20] sm:$0xff]
      %v1741 = vld [vmem:[%s5 + $0x28] sm:$0xff]
      %v1742 = vld [vmem:[%s5 + $0x30] sm:$0xff]
      %v1743 = vld [vmem:[%s5 + $0x38] sm:$0xff]
      %v1744 = vld [vmem:[%s5 + $0x40] sm:$0xff]
      %v1745 = vld [vmem:[%s5 + $0x48] sm:$0xff]
      %v1746 = vld [vmem:[%s5 + $0x50] sm:$0xff]
      %v1747 = vld [vmem:[%s5 + $0x58] sm:$0xff]
      %v1748 = vld [vmem:[%s5 + $0x60] sm:$0xff]
      %v1749 = vld [vmem:[%s5 + $0x68] sm:$0xff]
      %v1750 = vld [vmem:[%s5 + $0x70] sm:$0xff]
      %v1751 = vld [vmem:[%s5 + $0x78] sm:$0xff]
      %v1752 = vld [vmem:[%s5 + $0x80] sm:$0xff]
      %v1753 = vld [vmem:[%s5 + $0x88] sm:$0xff]
      %v1754 = vld [vmem:[%s5 + $0x90] sm:$0xff]
      %v1755 = vld [vmem:[%s5 + $0x98] sm:$0xff]
      %v1756 = vld [vmem:[%s5 + $0xa0] sm:$0xff]
      %v1757 = vld [vmem:[%s5 + $0xa8] sm:$0xff]
      %v1758 = vld [vmem:[%s5 + $0xb0] sm:$0xff]
      %v1759 = vld [vmem:[%s5 + $0xb8] sm:$0xff]
      %v1760 = vld [vmem:[%s5 + $0xc0] sm:$0xff]
      %v1761 = vld [vmem:[%s5 + $0xc8] sm:$0xff]
      %v1762 = vld [vmem:[%s5 + $0xd0] sm:$0xff]
      %v1763 = vld [vmem:[%s5 + $0xd8] sm:$0xff]
      %v1764 = vld [vmem:[%s5 + $0xe0] sm:$0xff]
      %v1765 = vld [vmem:[%s5 + $0xe8] sm:$0xff]
      %v1766 = vld [vmem:[%s5 + $0xf0] sm:$0xff]
      %v1767 = vld [vmem:[%s5 + $0xf8] sm:$0xff]
      %v1768 = vld [vmem:[%s5 + $0x100] sm:$0xff]
      %v1769 = vld [vmem:[%s5 + $0x108] sm:$0xff]
      %v1770 = vld [vmem:[%s5 + $0x110] sm:$0xff]
      %v1771 = vld [vmem:[%s5 + $0x118] sm:$0xff]
      %v1772 = vld [vmem:[%s5 + $0x120] sm:$0xff]
      %v1773 = vld [vmem:[%s5 + $0x128] sm:$0xff]
      %v1774 = vld [vmem:[%s5 + $0x130] sm:$0xff]
      %v1775 = vld [vmem:[%s5 + $0x138] sm:$0xff]
      %v1776 = vld [vmem:[%s5 + $0x140] sm:$0xff]
      %v1777 = vld [vmem:[%s5 + $0x148] sm:$0xff]
      %v1778 = vld [vmem:[%s5 + $0x150] sm:$0xff]
      %v1779 = vld [vmem:[%s5 + $0x158] sm:$0xff]
      %v1780 = vld [vmem:[%s5 + $0x160] sm:$0xff]
      %v1781 = vld [vmem:[%s5 + $0x168] sm:$0xff]
      %v1782 = vld [vmem:[%s5 + $0x170] sm:$0xff]
      %v1783 = vld [vmem:[%s5 + $0x178] sm:$0xff]
      %v1784 = vld [vmem:[%s5 + $0x180] sm:$0xff]
      %v1785 = vld [vmem:[%s5 + $0x188] sm:$0xff]
      %v1786 = vld [vmem:[%s5 + $0x190] sm:$0xff]
      %v1787 = vld [vmem:[%s5 + $0x198] sm:$0xff]
      %v1788 = vld [vmem:[%s5 + $0x1a0] sm:$0xff]
      %v1789 = vld [vmem:[%s5 + $0x1a8] sm:$0xff]
      %v1790 = vld [vmem:[%s5 + $0x1b0] sm:$0xff]
      %v1791 = vld [vmem:[%s5 + $0x1b8] sm:$0xff]
      %v1792 = vld [vmem:[%s5 + $0x1c0] sm:$0xff]
      %v1793 = vld [vmem:[%s5 + $0x1c8] sm:$0xff]
      %v1794 = vld [vmem:[%s5 + $0x1d0] sm:$0xff]
      %v1795 = vld [vmem:[%s5 + $0x1d8] sm:$0xff]
      %v1796 = vld [vmem:[%s5 + $0x1e0] sm:$0xff]
      %v1797 = vld [vmem:[%s5 + $0x1e8] sm:$0xff]
      %v1798 = vld [vmem:[%s5 + $0x1f0] sm:$0xff]
      %v1799 = vld [vmem:[%s5 + $0x1f8] sm:$0xff]
      %v1800 = vld [vmem:[%s5 + $0x200] sm:$0xff]
      %v1801 = vld [vmem:[%s5 + $0x208] sm:$0xff]
      %v1802 = vld [vmem:[%s5 + $0x210] sm:$0xff]
      %v1803 = vld [vmem:[%s5 + $0x218] sm:$0xff]
      %v1804 = vld [vmem:[%s5 + $0x220] sm:$0xff]
      %v1805 = vld [vmem:[%s5 + $0x228] sm:$0xff]
      %v1806 = vld [vmem:[%s5 + $0x230] sm:$0xff]
      %v1807 = vld [vmem:[%s5 + $0x238] sm:$0xff]
      %v1808 = vld [vmem:[%s5 + $0x240] sm:$0xff]
      %v1809 = vld [vmem:[%s5 + $0x248] sm:$0xff]
      %v1810 = vld [vmem:[%s5 + $0x250] sm:$0xff]
      %v1811 = vld [vmem:[%s5 + $0x258] sm:$0xff]
      %v1812 = vld [vmem:[%s5 + $0x260] sm:$0xff]
      %v1813 = vld [vmem:[%s5 + $0x268] sm:$0xff]
      %v1814 = vld [vmem:[%s5 + $0x270] sm:$0xff]
      %v1815 = vld [vmem:[%s5 + $0x278] sm:$0xff]
      %v1816 = vld [vmem:[%s5 + $0x280] sm:$0xff]
      %v1817 = vld [vmem:[%s5 + $0x288] sm:$0xff]
      %v1818 = vld [vmem:[%s5 + $0x290] sm:$0xff]
      %v1819 = vld [vmem:[%s5 + $0x298] sm:$0xff]
      %v1820 = vld [vmem:[%s5 + $0x2a0] sm:$0xff]
      %v1821 = vld [vmem:[%s5 + $0x2a8] sm:$0xff]
      %v1822 = vld [vmem:[%s5 + $0x2b0] sm:$0xff]
      %v1823 = vld [vmem:[%s5 + $0x2b8] sm:$0xff]
      %v1824 = vld [vmem:[%s5 + $0x2c0] sm:$0xff]
      %v1825 = vld [vmem:[%s5 + $0x2c8] sm:$0xff]
      %v1826 = vld [vmem:[%s5 + $0x2d0] sm:$0xff]
      %v1827 = vld [vmem:[%s5 + $0x2d8] sm:$0xff]
      %v1828 = vld [vmem:[%s5 + $0x2e0] sm:$0xff]
      %v1829 = vld [vmem:[%s5 + $0x2e8] sm:$0xff]
      %v1830 = vld [vmem:[%s5 + $0x2f0] sm:$0xff]
      %v1831 = vld [vmem:[%s5 + $0x2f8] sm:$0xff]
      %v1832 = vld [vmem:[%s5 + $0x300] sm:$0xff]
      %v1833 = vld [vmem:[%s5 + $0x308] sm:$0xff]
      %v1834 = vld [vmem:[%s5 + $0x310] sm:$0xff]
      %v1835 = vld [vmem:[%s5 + $0x318] sm:$0xff]
      %v1836 = vld [vmem:[%s5 + $0x320] sm:$0xff]
      %v1837 = vld [vmem:[%s5 + $0x328] sm:$0xff]
      %v1838 = vld [vmem:[%s5 + $0x330] sm:$0xff]
      %v1839 = vld [vmem:[%s5 + $0x338] sm:$0xff]
      %v1840 = vld [vmem:[%s5 + $0x340] sm:$0xff]
      %v1841 = vld [vmem:[%s5 + $0x348] sm:$0xff]
      %v1842 = vld [vmem:[%s5 + $0x350] sm:$0xff]
      %v1843 = vld [vmem:[%s5 + $0x358] sm:$0xff]
      %v1844 = vld [vmem:[%s5 + $0x360] sm:$0xff]
      %v1845 = vld [vmem:[%s5 + $0x368] sm:$0xff]
      %v1846 = vld [vmem:[%s5 + $0x370] sm:$0xff]
      %v1847 = vld [vmem:[%s5 + $0x378] sm:$0xff]
      %v1848 = vld [vmem:[%s5 + $0x380] sm:$0xff]
      %v1849 = vld [vmem:[%s5 + $0x388] sm:$0xff]
      %v1850 = vld [vmem:[%s5 + $0x390] sm:$0xff]
      %v1851 = vld [vmem:[%s5 + $0x398] sm:$0xff]
      %v1852 = vld [vmem:[%s5 + $0x3a0] sm:$0xff]
      %v1853 = vld [vmem:[%s5 + $0x3a8] sm:$0xff]
      %v1854 = vld [vmem:[%s5 + $0x3b0] sm:$0xff]
      %v1855 = vld [vmem:[%s5 + $0x3b8] sm:$0xff]
      %v1856 = vld [vmem:[%s5 + $0x3c0] sm:$0xff]
      %v1857 = vld [vmem:[%s5 + $0x3c8] sm:$0xff]
      %v1858 = vld [vmem:[%s5 + $0x3d0] sm:$0xff]
      %v1859 = vld [vmem:[%s5 + $0x3d8] sm:$0xff]
      %v1860 = vld [vmem:[%s5 + $0x3e0] sm:$0xff]
      %v1861 = vld [vmem:[%s5 + $0x3e8] sm:$0xff]
      %v1862 = vld [vmem:[%s5 + $0x3f0] sm:$0xff]
      %v1863 = vld [vmem:[%s5 + $0x3f8] sm:$0xff]
      %v1864 = vld [vmem:[%s5 + $0x400] sm:$0xff]
      %v1865 = vld [vmem:[%s5 + $0x408] sm:$0xff]
      %v1866 = vld [vmem:[%s5 + $0x410] sm:$0xff]
      %v1867 = vld [vmem:[%s5 + $0x418] sm:$0xff]
      %v1868 = vld [vmem:[%s5 + $0x420] sm:$0xff]
      %v1869 = vld [vmem:[%s5 + $0x428] sm:$0xff]
      %v1870 = vld [vmem:[%s5 + $0x430] sm:$0xff]
      %v1871 = vld [vmem:[%s5 + $0x438] sm:$0xff]
      %v1872 = vld [vmem:[%s5 + $0x440] sm:$0xff]
      %v1873 = vld [vmem:[%s5 + $0x448] sm:$0xff]
      %v1874 = vld [vmem:[%s5 + $0x450] sm:$0xff]
      %v1875 = vld [vmem:[%s5 + $0x458] sm:$0xff]
      %v1876 = vld [vmem:[%s5 + $0x460] sm:$0xff]
      %v1877 = vld [vmem:[%s5 + $0x468] sm:$0xff]
      %v1878 = vld [vmem:[%s5 + $0x470] sm:$0xff]
      %v1879 = vld [vmem:[%s5 + $0x478] sm:$0xff]
      %v1880 = vld [vmem:[%s5 + $0x480] sm:$0xff]
      %v1881 = vld [vmem:[%s5 + $0x488] sm:$0xff]
      %v1882 = vld [vmem:[%s5 + $0x490] sm:$0xff]
      %v1883 = vld [vmem:[%s5 + $0x498] sm:$0xff]
      %v1884 = vld [vmem:[%s5 + $0x4a0] sm:$0xff]
      %v1885 = vld [vmem:[%s5 + $0x4a8] sm:$0xff]
      %v1886 = vld [vmem:[%s5 + $0x4b0] sm:$0xff]
      %v1887 = vld [vmem:[%s5 + $0x4b8] sm:$0xff]
      %v1888 = vld [vmem:[%s5 + $0x4c0] sm:$0xff]
      %v1889 = vld [vmem:[%s5 + $0x4c8] sm:$0xff]
      %v1890 = vld [vmem:[%s5 + $0x4d0] sm:$0xff]
      %v1891 = vld [vmem:[%s5 + $0x4d8] sm:$0xff]
      %v1892 = vld [vmem:[%s5 + $0x4e0] sm:$0xff]
      %v1893 = vld [vmem:[%s5 + $0x4e8] sm:$0xff]
      %v1894 = vld [vmem:[%s5 + $0x4f0] sm:$0xff]
      %v1895 = vld [vmem:[%s5 + $0x4f8] sm:$0xff]
      %v1896 = vld [vmem:[%s5 + $0x500] sm:$0xff]
      %v1897 = vld [vmem:[%s5 + $0x508] sm:$0xff]
      %v1898 = vld [vmem:[%s5 + $0x510] sm:$0xff]
      %v1899 = vld [vmem:[%s5 + $0x518] sm:$0xff]
      %v1900 = vld [vmem:[%s5 + $0x520] sm:$0xff]
      %v1901 = vld [vmem:[%s5 + $0x528] sm:$0xff]
      %v1902 = vld [vmem:[%s5 + $0x530] sm:$0xff]
      %v1903 = vld [vmem:[%s5 + $0x538] sm:$0xff]
      %v1904 = vld [vmem:[%s5 + $0x540] sm:$0xff]
      %v1905 = vld [vmem:[%s5 + $0x548] sm:$0xff]
      %v1906 = vld [vmem:[%s5 + $0x550] sm:$0xff]
      %v1907 = vld [vmem:[%s5 + $0x558] sm:$0xff]
      %v1908 = vld [vmem:[%s5 + $0x560] sm:$0xff]
      %v1909 = vld [vmem:[%s5 + $0x568] sm:$0xff]
      %v1910 = vld [vmem:[%s5 + $0x570] sm:$0xff]
      %v1911 = vld [vmem:[%s5 + $0x578] sm:$0xff]
      %v1912 = vld [vmem:[%s5 + $0x580] sm:$0xff]
      %v1913 = vld [vmem:[%s5 + $0x588] sm:$0xff]
      %v1914 = vld [vmem:[%s5 + $0x590] sm:$0xff]
      %v1915 = vld [vmem:[%s5 + $0x598] sm:$0xff]
      %v1916 = vld [vmem:[%s5 + $0x5a0] sm:$0xff]
      %v1917 = vld [vmem:[%s5 + $0x5a8] sm:$0xff]
      %v1918 = vld [vmem:[%s5 + $0x5b0] sm:$0xff]
      %v1919 = vld [vmem:[%s5 + $0x5b8] sm:$0xff]
      %v1920 = vld [vmem:[%s5 + $0x5c0] sm:$0xff]
      %v1921 = vld [vmem:[%s5 + $0x5c8] sm:$0xff]
      %v1922 = vld [vmem:[%s5 + $0x5d0] sm:$0xff]
      %v1923 = vld [vmem:[%s5 + $0x5d8] sm:$0xff]
      %v1924 = vld [vmem:[%s5 + $0x5e0] sm:$0xff]
      %v1925 = vld [vmem:[%s5 + $0x5e8] sm:$0xff]
      %v1926 = vld [vmem:[%s5 + $0x5f0] sm:$0xff]
      %v1927 = vld [vmem:[%s5 + $0x5f8] sm:$0xff]
      %v1928 = vld [vmem:[%s5 + $0x600] sm:$0xff]
      %v1929 = vld [vmem:[%s5 + $0x608] sm:$0xff]
      %v1930 = vld [vmem:[%s5 + $0x610] sm:$0xff]
      %v1931 = vld [vmem:[%s5 + $0x618] sm:$0xff]
      %v1932 = vld [vmem:[%s5 + $0x620] sm:$0xff]
      %v1933 = vld [vmem:[%s5 + $0x628] sm:$0xff]
      %v1934 = vld [vmem:[%s5 + $0x630] sm:$0xff]
      %v1935 = vld [vmem:[%s5 + $0x638] sm:$0xff]
      %v1936 = vld [vmem:[%s5 + $0x640] sm:$0xff]
      %v1937 = vld [vmem:[%s5 + $0x648] sm:$0xff]
      %v1938 = vld [vmem:[%s5 + $0x650] sm:$0xff]
      %v1939 = vld [vmem:[%s5 + $0x658] sm:$0xff]
      %v1940 = vld [vmem:[%s5 + $0x660] sm:$0xff]
      %v1941 = vld [vmem:[%s5 + $0x668] sm:$0xff]
      %v1942 = vld [vmem:[%s5 + $0x670] sm:$0xff]
      %v1943 = vld [vmem:[%s5 + $0x678] sm:$0xff]
      %v1944 = vld [vmem:[%s5 + $0x680] sm:$0xff]
      %v1945 = vld [vmem:[%s5 + $0x688] sm:$0xff]
      %v1946 = vld [vmem:[%s5 + $0x690] sm:$0xff]
      %v1947 = vld [vmem:[%s5 + $0x698] sm:$0xff]
      %v1948 = vld [vmem:[%s5 + $0x6a0] sm:$0xff]
      %v1949 = vld [vmem:[%s5 + $0x6a8] sm:$0xff]
      %v1950 = vld [vmem:[%s5 + $0x6b0] sm:$0xff]
      %v1951 = vld [vmem:[%s5 + $0x6b8] sm:$0xff]
      %v1952 = vld [vmem:[%s5 + $0x6c0] sm:$0xff]
      %v1953 = vld [vmem:[%s5 + $0x6c8] sm:$0xff]
      %v1954 = vld [vmem:[%s5 + $0x6d0] sm:$0xff]
      %v1955 = vld [vmem:[%s5 + $0x6d8] sm:$0xff]
      %v1956 = vld [vmem:[%s5 + $0x6e0] sm:$0xff]
      %v1957 = vld [vmem:[%s5 + $0x6e8] sm:$0xff]
      %v1958 = vld [vmem:[%s5 + $0x6f0] sm:$0xff]
      %v1959 = vld [vmem:[%s5 + $0x6f8] sm:$0xff]
      %v1960 = vld [vmem:[%s5 + $0x700] sm:$0xff]
      %v1961 = vld [vmem:[%s5 + $0x708] sm:$0xff]
      %v1962 = vld [vmem:[%s5 + $0x710] sm:$0xff]
      %v1963 = vld [vmem:[%s5 + $0x718] sm:$0xff]
      %v1964 = vld [vmem:[%s5 + $0x720] sm:$0xff]
      %v1965 = vld [vmem:[%s5 + $0x728] sm:$0xff]
      %v1966 = vld [vmem:[%s5 + $0x730] sm:$0xff]
      %v1967 = vld [vmem:[%s5 + $0x738] sm:$0xff]
      %v1968 = vld [vmem:[%s5 + $0x740] sm:$0xff]
      %v1969 = vld [vmem:[%s5 + $0x748] sm:$0xff]
      %v1970 = vld [vmem:[%s5 + $0x750] sm:$0xff]
      %v1971 = vld [vmem:[%s5 + $0x758] sm:$0xff]
      %v1972 = vld [vmem:[%s5 + $0x760] sm:$0xff]
      %v1973 = vld [vmem:[%s5 + $0x768] sm:$0xff]
      %v1974 = vld [vmem:[%s5 + $0x770] sm:$0xff]
      %v1975 = vld [vmem:[%s5 + $0x778] sm:$0xff]
      %v1976 = vld [vmem:[%s5 + $0x780] sm:$0xff]
      %v1977 = vld [vmem:[%s5 + $0x788] sm:$0xff]
      %v1978 = vld [vmem:[%s5 + $0x790] sm:$0xff]
      %v1979 = vld [vmem:[%s5 + $0x798] sm:$0xff]
      %v1980 = vld [vmem:[%s5 + $0x7a0] sm:$0xff]
      %v1981 = vld [vmem:[%s5 + $0x7a8] sm:$0xff]
      %v1982 = vld [vmem:[%s5 + $0x7b0] sm:$0xff]
      %v1983 = vld [vmem:[%s5 + $0x7b8] sm:$0xff]
      %v1984 = vld [vmem:[%s5 + $0x7c0] sm:$0xff]
      %v1985 = vld [vmem:[%s5 + $0x7c8] sm:$0xff]
      %v1986 = vld [vmem:[%s5 + $0x7d0] sm:$0xff]
      %v1987 = vld [vmem:[%s5 + $0x7d8] sm:$0xff]
      %v1988 = vld [vmem:[%s5 + $0x7e0] sm:$0xff]
      %v1989 = vld [vmem:[%s5 + $0x7e8] sm:$0xff]
      %v1990 = vld [vmem:[%s5 + $0x7f0] sm:$0xff]
      %v1991 = vld [vmem:[%s5 + $0x7f8] sm:$0xff]
      %v1992 = vld [vmem:[%s5 + $0x800] sm:$0xff]
      %v1993 = vld [vmem:[%s5 + $0x808] sm:$0xff]
      %v1994 = vld [vmem:[%s5 + $0x810] sm:$0xff]
      %v1995 = vld [vmem:[%s5 + $0x818] sm:$0xff]
      %v1996 = vld [vmem:[%s5 + $0x820] sm:$0xff]
      %v1997 = vld [vmem:[%s5 + $0x828] sm:$0xff]
      %v1998 = vld [vmem:[%s5 + $0x830] sm:$0xff]
      %v1999 = vld [vmem:[%s5 + $0x838] sm:$0xff]
      %v2000 = vld [vmem:[%s5 + $0x840] sm:$0xff]
      %v2001 = vld [vmem:[%s5 + $0x848] sm:$0xff]
      %v2002 = vld [vmem:[%s5 + $0x850] sm:$0xff]
      %v2003 = vld [vmem:[%s5 + $0x858] sm:$0xff]
      %v2004 = vld [vmem:[%s5 + $0x860] sm:$0xff]
      %v2005 = vld [vmem:[%s5 + $0x868] sm:$0xff]
      %v2006 = vld [vmem:[%s5 + $0x870] sm:$0xff]
      %v2007 = vld [vmem:[%s5 + $0x878] sm:$0xff]
      %v2008 = vld [vmem:[%s5 + $0x880] sm:$0xff]
      %v2009 = vld [vmem:[%s5 + $0x888] sm:$0xff]
      %v2010 = vld [vmem:[%s5 + $0x890] sm:$0xff]
      %v2011 = vld [vmem:[%s5 + $0x898] sm:$0xff]
      %v2012 = vld [vmem:[%s5 + $0x8a0] sm:$0xff]
      %v2013 = vld [vmem:[%s5 + $0x8a8] sm:$0xff]
      %v2014 = vld [vmem:[%s5 + $0x8b0] sm:$0xff]
      %v2015 = vld [vmem:[%s5 + $0x8b8] sm:$0xff]
      %v2016 = vld [vmem:[%s5 + $0x8c0] sm:$0xff]
      %v2017 = vld [vmem:[%s5 + $0x8c8] sm:$0xff]
      %v2018 = vld [vmem:[%s5 + $0x8d0] sm:$0xff]
      %v2019 = vld [vmem:[%s5 + $0x8d8] sm:$0xff]
      %v2020 = vld [vmem:[%s5 + $0x8e0] sm:$0xff]
      %v2021 = vld [vmem:[%s5 + $0x8e8] sm:$0xff]
      %v2022 = vld [vmem:[%s5 + $0x8f0] sm:$0xff]
      %v2023 = vld [vmem:[%s5 + $0x8f8] sm:$0xff]
      %v2024 = vld [vmem:[%s5 + $0x900] sm:$0xff]
      %v2025 = vld [vmem:[%s5 + $0x908] sm:$0xff]
      %v2026 = vld [vmem:[%s5 + $0x910] sm:$0xff]
      %v2027 = vld [vmem:[%s5 + $0x918] sm:$0xff]
      %v2028 = vld [vmem:[%s5 + $0x920] sm:$0xff]
      %v2029 = vld [vmem:[%s5 + $0x928] sm:$0xff]
      %v2030 = vld [vmem:[%s5 + $0x930] sm:$0xff]
      %v2031 = vld [vmem:[%s5 + $0x938] sm:$0xff]
      %v2032 = vld [vmem:[%s5 + $0x940] sm:$0xff]
      %v2033 = vld [vmem:[%s5 + $0x948] sm:$0xff]
      %v2034 = vld [vmem:[%s5 + $0x950] sm:$0xff]
      %v2035 = vld [vmem:[%s5 + $0x958] sm:$0xff]
      %v2036 = vld [vmem:[%s5 + $0x960] sm:$0xff]
      %v2037 = vld [vmem:[%s5 + $0x968] sm:$0xff]
      %v2038 = vld [vmem:[%s5 + $0x970] sm:$0xff]
      %v2039 = vld [vmem:[%s5 + $0x978] sm:$0xff]
      %v2040 = vld [vmem:[%s5 + $0x980] sm:$0xff]
      %v2041 = vld [vmem:[%s5 + $0x988] sm:$0xff]
      %v2042 = vld [vmem:[%s5 + $0x990] sm:$0xff]
      %v2043 = vld [vmem:[%s5 + $0x998] sm:$0xff]
      %v2044 = vld [vmem:[%s5 + $0x9a0] sm:$0xff]
      %v2045 = vld [vmem:[%s5 + $0x9a8] sm:$0xff]
      %v2046 = vld [vmem:[%s5 + $0x9b0] sm:$0xff]
      %v2047 = vld [vmem:[%s5 + $0x9b8] sm:$0xff]
      %v2048 = vld [vmem:[%s5 + $0x9c0] sm:$0xff]
      %v2049 = vld [vmem:[%s5 + $0x9c8] sm:$0xff]
      %v2050 = vld [vmem:[%s5 + $0x9d0] sm:$0xff]
      %v2051 = vld [vmem:[%s5 + $0x9d8] sm:$0xff]
      %v2052 = vld [vmem:[%s5 + $0x9e0] sm:$0xff]
      %v2053 = vld [vmem:[%s5 + $0x9e8] sm:$0xff]
      %v2054 = vld [vmem:[%s5 + $0x9f0] sm:$0xff]
      %v2055 = vld [vmem:[%s5 + $0x9f8] sm:$0xff]
      %v2056 = vld [vmem:[%s5 + $0xa00] sm:$0xff]
      %v2057 = vld [vmem:[%s5 + $0xa08] sm:$0xff]
      %v2058 = vld [vmem:[%s5 + $0xa10] sm:$0xff]
      %v2059 = vld [vmem:[%s5 + $0xa18] sm:$0xff]
      %v2060 = vld [vmem:[%s5 + $0xa20] sm:$0xff]
      %v2061 = vld [vmem:[%s5 + $0xa28] sm:$0xff]
      %v2062 = vld [vmem:[%s5 + $0xa30] sm:$0xff]
      %v2063 = vld [vmem:[%s5 + $0xa38] sm:$0xff]
      %v2064 = vld [vmem:[%s5 + $0xa40] sm:$0xff]
      %v2065 = vld [vmem:[%s5 + $0xa48] sm:$0xff]
      %v2066 = vld [vmem:[%s5 + $0xa50] sm:$0xff]
      %v2067 = vld [vmem:[%s5 + $0xa58] sm:$0xff]
      %v2068 = vld [vmem:[%s5 + $0xa60] sm:$0xff]
      %v2069 = vld [vmem:[%s5 + $0xa68] sm:$0xff]
      %v2070 = vld [vmem:[%s5 + $0xa70] sm:$0xff]
      %v2071 = vld [vmem:[%s5 + $0xa78] sm:$0xff]
      %v2072 = vld [vmem:[%s5 + $0xa80] sm:$0xff]
      %v2073 = vld [vmem:[%s5 + $0xa88] sm:$0xff]
      %v2074 = vld [vmem:[%s5 + $0xa90] sm:$0xff]
      %v2075 = vld [vmem:[%s5 + $0xa98] sm:$0xff]
      %v2076 = vld [vmem:[%s5 + $0xaa0] sm:$0xff]
      %v2077 = vld [vmem:[%s5 + $0xaa8] sm:$0xff]
      %v2078 = vld [vmem:[%s5 + $0xab0] sm:$0xff]
      %v2079 = vld [vmem:[%s5 + $0xab8] sm:$0xff]
      %v2080 = vld [vmem:[%s5 + $0xac0] sm:$0xff]
      %v2081 = vld [vmem:[%s5 + $0xac8] sm:$0xff]
      %v2082 = vld [vmem:[%s5 + $0xad0] sm:$0xff]
      %v2083 = vld [vmem:[%s5 + $0xad8] sm:$0xff]
      %v2084 = vld [vmem:[%s5 + $0xae0] sm:$0xff]
      %v2085 = vld [vmem:[%s5 + $0xae8] sm:$0xff]
      %v2086 = vld [vmem:[%s5 + $0xaf0] sm:$0xff]
      %v2087 = vld [vmem:[%s5 + $0xaf8] sm:$0xff]
      %v2088 = vld [vmem:[%s5 + $0xb00] sm:$0xff]
      %v2089 = vld [vmem:[%s5 + $0xb08] sm:$0xff]
      %v2090 = vld [vmem:[%s5 + $0xb10] sm:$0xff]
      %v2091 = vld [vmem:[%s5 + $0xb18] sm:$0xff]
      %v2092 = vld [vmem:[%s5 + $0xb20] sm:$0xff]
      %v2093 = vld [vmem:[%s5 + $0xb28] sm:$0xff]
      %v2094 = vld [vmem:[%s5 + $0xb30] sm:$0xff]
      %v2095 = vld [vmem:[%s5 + $0xb38] sm:$0xff]
      %v2096 = vld [vmem:[%s5 + $0xb40] sm:$0xff]
      %v2097 = vld [vmem:[%s5 + $0xb48] sm:$0xff]
      %v2098 = vld [vmem:[%s5 + $0xb50] sm:$0xff]
      %v2099 = vld [vmem:[%s5 + $0xb58] sm:$0xff]
      %v2100 = vld [vmem:[%s5 + $0xb60] sm:$0xff]
      %v2101 = vld [vmem:[%s5 + $0xb68] sm:$0xff]
      %v2102 = vld [vmem:[%s5 + $0xb70] sm:$0xff]
      %v2103 = vld [vmem:[%s5 + $0xb78] sm:$0xff]
      %v2104 = vld [vmem:[%s5 + $0xb80] sm:$0xff]
      %v2105 = vld [vmem:[%s5 + $0xb88] sm:$0xff]
      %v2106 = vld [vmem:[%s5 + $0xb90] sm:$0xff]
      %v2107 = vld [vmem:[%s5 + $0xb98] sm:$0xff]
      %v2108 = vld [vmem:[%s5 + $0xba0] sm:$0xff]
      %v2109 = vld [vmem:[%s5 + $0xba8] sm:$0xff]
      %v2110 = vld [vmem:[%s5 + $0xbb0] sm:$0xff]
      %v2111 = vld [vmem:[%s5 + $0xbb8] sm:$0xff]
      %v2112 = vld [vmem:[%s5 + $0xbc0] sm:$0xff]
      %v2113 = vld [vmem:[%s5 + $0xbc8] sm:$0xff]
      %v2114 = vld [vmem:[%s5 + $0xbd0] sm:$0xff]
      %v2115 = vld [vmem:[%s5 + $0xbd8] sm:$0xff]
      %v2116 = vld [vmem:[%s5 + $0xbe0] sm:$0xff]
      %v2117 = vld [vmem:[%s5 + $0xbe8] sm:$0xff]
      %v2118 = vld [vmem:[%s5 + $0xbf0] sm:$0xff]
      %v2119 = vld [vmem:[%s5 + $0xbf8] sm:$0xff]
      %v2120 = vld [vmem:[%s5 + $0xc00] sm:$0xff]
      %v2121 = vld [vmem:[%s5 + $0xc08] sm:$0xff]
      %v2122 = vld [vmem:[%s5 + $0xc10] sm:$0xff]
      %v2123 = vld [vmem:[%s5 + $0xc18] sm:$0xff]
      %v2124 = vld [vmem:[%s5 + $0xc20] sm:$0xff]
      %v2125 = vld [vmem:[%s5 + $0xc28] sm:$0xff]
      %v2126 = vld [vmem:[%s5 + $0xc30] sm:$0xff]
      %v2127 = vld [vmem:[%s5 + $0xc38] sm:$0xff]
      %v2128 = vld [vmem:[%s5 + $0xc40] sm:$0xff]
      %v2129 = vld [vmem:[%s5 + $0xc48] sm:$0xff]
      %v2130 = vld [vmem:[%s5 + $0xc50] sm:$0xff]
      %v2131 = vld [vmem:[%s5 + $0xc58] sm:$0xff]
      %v2132 = vld [vmem:[%s5 + $0xc60] sm:$0xff]
      %v2133 = vld [vmem:[%s5 + $0xc68] sm:$0xff]
      %v2134 = vld [vmem:[%s5 + $0xc70] sm:$0xff]
      %v2135 = vld [vmem:[%s5 + $0xc78] sm:$0xff]
      %v2136 = vld [vmem:[%s5 + $0xc80] sm:$0xff]
      %v2137 = vld [vmem:[%s5 + $0xc88] sm:$0xff]
      %v2138 = vld [vmem:[%s5 + $0xc90] sm:$0xff]
      %v2139 = vld [vmem:[%s5 + $0xc98] sm:$0xff]
      %v2140 = vld [vmem:[%s5 + $0xca0] sm:$0xff]
      %v2141 = vld [vmem:[%s5 + $0xca8] sm:$0xff]
      %v2142 = vld [vmem:[%s5 + $0xcb0] sm:$0xff]
      %v2143 = vld [vmem:[%s5 + $0xcb8] sm:$0xff]
      %v2144 = vld [vmem:[%s5 + $0xcc0] sm:$0xff]
      %v2145 = vld [vmem:[%s5 + $0xcc8] sm:$0xff]
      %v2146 = vld [vmem:[%s5 + $0xcd0] sm:$0xff]
      %v2147 = vld [vmem:[%s5 + $0xcd8] sm:$0xff]
      %v2148 = vld [vmem:[%s5 + $0xce0] sm:$0xff]
      %v2149 = vld [vmem:[%s5 + $0xce8] sm:$0xff]
      %v2150 = vld [vmem:[%s5 + $0xcf0] sm:$0xff]
      %v2151 = vld [vmem:[%s5 + $0xcf8] sm:$0xff]
      %v2152 = vld [vmem:[%s5 + $0xd00] sm:$0xff]
      %v2153 = vld [vmem:[%s5 + $0xd08] sm:$0xff]
      %v2154 = vld [vmem:[%s5 + $0xd10] sm:$0xff]
      %v2155 = vld [vmem:[%s5 + $0xd18] sm:$0xff]
      %v2156 = vld [vmem:[%s5 + $0xd20] sm:$0xff]
      %v2157 = vld [vmem:[%s5 + $0xd28] sm:$0xff]
      %v2158 = vld [vmem:[%s5 + $0xd30] sm:$0xff]
      %v2159 = vld [vmem:[%s5 + $0xd38] sm:$0xff]
      %v2160 = vld [vmem:[%s5 + $0xd40] sm:$0xff]
      %v2161 = vld [vmem:[%s5 + $0xd48] sm:$0xff]
      %v2162 = vld [vmem:[%s5 + $0xd50] sm:$0xff]
      %v2163 = vld [vmem:[%s5 + $0xd58] sm:$0xff]
      %v2164 = vld [vmem:[%s5 + $0xd60] sm:$0xff]
      %v2165 = vld [vmem:[%s5 + $0xd68] sm:$0xff]
      %v2166 = vld [vmem:[%s5 + $0xd70] sm:$0xff]
      %v2167 = vld [vmem:[%s5 + $0xd78] sm:$0xff]
      %v2168 = vld [vmem:[%s5 + $0xd80] sm:$0xff]
      %v2169 = vld [vmem:[%s5 + $0xd88] sm:$0xff]
      %v2170 = vld [vmem:[%s5 + $0xd90] sm:$0xff]
      %v2171 = vld [vmem:[%s5 + $0xd98] sm:$0xff]
      %v2172 = vld [vmem:[%s5 + $0xda0] sm:$0xff]
      %v2173 = vld [vmem:[%s5 + $0xda8] sm:$0xff]
      %v2174 = vld [vmem:[%s5 + $0xdb0] sm:$0xff]
      %v2175 = vld [vmem:[%s5 + $0xdb8] sm:$0xff]
      %v2176 = vld [vmem:[%s5 + $0xdc0] sm:$0xff]
      %v2177 = vld [vmem:[%s5 + $0xdc8] sm:$0xff]
      %v2178 = vld [vmem:[%s5 + $0xdd0] sm:$0xff]
      %v2179 = vld [vmem:[%s5 + $0xdd8] sm:$0xff]
      %v2180 = vld [vmem:[%s5 + $0xde0] sm:$0xff]
      %v2181 = vld [vmem:[%s5 + $0xde8] sm:$0xff]
      %v2182 = vld [vmem:[%s5 + $0xdf0] sm:$0xff]
      %v2183 = vld [vmem:[%s5 + $0xdf8] sm:$0xff]
      %v2184 = vld [vmem:[%s5 + $0xe00] sm:$0xff]
      %v2185 = vld [vmem:[%s5 + $0xe08] sm:$0xff]
      %v2186 = vld [vmem:[%s5 + $0xe10] sm:$0xff]
      %v2187 = vld [vmem:[%s5 + $0xe18] sm:$0xff]
      %v2188 = vld [vmem:[%s5 + $0xe20] sm:$0xff]
      %v2189 = vld [vmem:[%s5 + $0xe28] sm:$0xff]
      %v2190 = vld [vmem:[%s5 + $0xe30] sm:$0xff]
      %v2191 = vld [vmem:[%s5 + $0xe38] sm:$0xff]
      %v2192 = vld [vmem:[%s5 + $0xe40] sm:$0xff]
      %v2193 = vld [vmem:[%s5 + $0xe48] sm:$0xff]
      %v2194 = vld [vmem:[%s5 + $0xe50] sm:$0xff]
      %v2195 = vld [vmem:[%s5 + $0xe58] sm:$0xff]
      %v2196 = vld [vmem:[%s5 + $0xe60] sm:$0xff]
      %v2197 = vld [vmem:[%s5 + $0xe68] sm:$0xff]
      %v2198 = vld [vmem:[%s5 + $0xe70] sm:$0xff]
      %v2199 = vld [vmem:[%s5 + $0xe78] sm:$0xff]
      %v2200 = vld [vmem:[%s5 + $0xe80] sm:$0xff]
      %v2201 = vld [vmem:[%s5 + $0xe88] sm:$0xff]
      %v2202 = vld [vmem:[%s5 + $0xe90] sm:$0xff]
      %v2203 = vld [vmem:[%s5 + $0xe98] sm:$0xff]
      %v2204 = vld [vmem:[%s5 + $0xea0] sm:$0xff]
      %v2205 = vld [vmem:[%s5 + $0xea8] sm:$0xff]
      %v2206 = vld [vmem:[%s5 + $0xeb0] sm:$0xff]
      %v2207 = vld [vmem:[%s5 + $0xeb8] sm:$0xff]
      %v2208 = vld [vmem:[%s5 + $0xec0] sm:$0xff]
      %v2209 = vld [vmem:[%s5 + $0xec8] sm:$0xff]
      %v2210 = vld [vmem:[%s5 + $0xed0] sm:$0xff]
      %v2211 = vld [vmem:[%s5 + $0xed8] sm:$0xff]
      %v2212 = vld [vmem:[%s5 + $0xee0] sm:$0xff]
      %v2213 = vld [vmem:[%s5 + $0xee8] sm:$0xff]
      %v2214 = vld [vmem:[%s5 + $0xef0] sm:$0xff]
      %v2215 = vld [vmem:[%s5 + $0xef8] sm:$0xff]
      %v2216 = vld [vmem:[%s5 + $0xf00] sm:$0xff]
      %v2217 = vld [vmem:[%s5 + $0xf08] sm:$0xff]
      %v2218 = vld [vmem:[%s5 + $0xf10] sm:$0xff]
      %v2219 = vld [vmem:[%s5 + $0xf18] sm:$0xff]
      %v2220 = vld [vmem:[%s5 + $0xf20] sm:$0xff]
      %v2221 = vld [vmem:[%s5 + $0xf28] sm:$0xff]
      %v2222 = vld [vmem:[%s5 + $0xf30] sm:$0xff]
      %v2223 = vld [vmem:[%s5 + $0xf38] sm:$0xff]
      %v2224 = vld [vmem:[%s5 + $0xf40] sm:$0xff]
      %v2225 = vld [vmem:[%s5 + $0xf48] sm:$0xff]
      %v2226 = vld [vmem:[%s5 + $0xf50] sm:$0xff]
      %v2227 = vld [vmem:[%s5 + $0xf58] sm:$0xff]
      %v2228 = vld [vmem:[%s5 + $0xf60] sm:$0xff]
      %v2229 = vld [vmem:[%s5 + $0xf68] sm:$0xff]
      %v2230 = vld [vmem:[%s5 + $0xf70] sm:$0xff]
      %v2231 = vld [vmem:[%s5 + $0xf78] sm:$0xff]
      %v2232 = vld [vmem:[%s5 + $0xf80] sm:$0xff]
      %v2233 = vld [vmem:[%s5 + $0xf88] sm:$0xff]
      %v2234 = vld [vmem:[%s5 + $0xf90] sm:$0xff]
      %v2235 = vld [vmem:[%s5 + $0xf98] sm:$0xff]
      %v2236 = vld [vmem:[%s5 + $0xfa0] sm:$0xff]
      %v2237 = vld [vmem:[%s5 + $0xfa8] sm:$0xff]
      %v2238 = vld [vmem:[%s5 + $0xfb0] sm:$0xff]
      %v2239 = vld [vmem:[%s5 + $0xfb8] sm:$0xff]
      %v2240 = vld [vmem:[%s5 + $0xfc0] sm:$0xff]
      %v2241 = vld [vmem:[%s5 + $0xfc8] sm:$0xff]
      %v2242 = vld [vmem:[%s5 + $0xfd0] sm:$0xff]
      %v2243 = vld [vmem:[%s5 + $0xfd8] sm:$0xff]
      %v2244 = vld [vmem:[%s5 + $0xfe0] sm:$0xff]
      %v2245 = vld [vmem:[%s5 + $0xfe8] sm:$0xff]
      %v2246 = vld [vmem:[%s5 + $0xff0] sm:$0xff]
      %v2247 = vld [vmem:[%s5 + $0xff8] sm:$0xff]
      %v2760 = vunpack.c.l.b16 %v1736
      %v2761 = vunpack.c.h.b16 %v1736
      %v2762 = vunpack.c.l.b16 %v1737
      %v2763 = vunpack.c.h.b16 %v1737
      %v2764 = vunpack.c.l.b16 %v1738
      %v2765 = vunpack.c.h.b16 %v1738
      %v2766 = vunpack.c.l.b16 %v1739
      %v2767 = vunpack.c.h.b16 %v1739
      %v2768 = vunpack.c.l.b16 %v1740
      %v2769 = vunpack.c.h.b16 %v1740
      %v2770 = vunpack.c.l.b16 %v1741
      %v2771 = vunpack.c.h.b16 %v1741
      %v2772 = vunpack.c.l.b16 %v1742
      %v2773 = vunpack.c.h.b16 %v1742
      %v2774 = vunpack.c.l.b16 %v1743
      %v2775 = vunpack.c.h.b16 %v1743
      %v2776 = vunpack.c.l.b16 %v1744
      %v2777 = vunpack.c.h.b16 %v1744
      %v2778 = vunpack.c.l.b16 %v1745
      %v2779 = vunpack.c.h.b16 %v1745
      %v2780 = vunpack.c.l.b16 %v1746
      %v2781 = vunpack.c.h.b16 %v1746
      %v2782 = vunpack.c.l.b16 %v1747
      %v2783 = vunpack.c.h.b16 %v1747
      %v2784 = vunpack.c.l.b16 %v1748
      %v2785 = vunpack.c.h.b16 %v1748
      %v2786 = vunpack.c.l.b16 %v1749
      %v2787 = vunpack.c.h.b16 %v1749
      %v2788 = vunpack.c.l.b16 %v1750
      %v2789 = vunpack.c.h.b16 %v1750
      %v2790 = vunpack.c.l.b16 %v1751
      %v2791 = vunpack.c.h.b16 %v1751
      %v2792 = vunpack.c.l.b16 %v1752
      %v2793 = vunpack.c.h.b16 %v1752
      %v2794 = vunpack.c.l.b16 %v1753
      %v2795 = vunpack.c.h.b16 %v1753
      %v2796 = vunpack.c.l.b16 %v1754
      %v2797 = vunpack.c.h.b16 %v1754
      %v2798 = vunpack.c.l.b16 %v1755
      %v2799 = vunpack.c.h.b16 %v1755
      %v2800 = vunpack.c.l.b16 %v1756
      %v2801 = vunpack.c.h.b16 %v1756
      %v2802 = vunpack.c.l.b16 %v1757
      %v2803 = vunpack.c.h.b16 %v1757
      %v2804 = vunpack.c.l.b16 %v1758
      %v2805 = vunpack.c.h.b16 %v1758
      %v2806 = vunpack.c.l.b16 %v1759
      %v2807 = vunpack.c.h.b16 %v1759
      %v2808 = vunpack.c.l.b16 %v1760
      %v2809 = vunpack.c.h.b16 %v1760
      %v2810 = vunpack.c.l.b16 %v1761
      %v2811 = vunpack.c.h.b16 %v1761
      %v2812 = vunpack.c.l.b16 %v1762
      %v2813 = vunpack.c.h.b16 %v1762
      %v2814 = vunpack.c.l.b16 %v1763
      %v2815 = vunpack.c.h.b16 %v1763
      %v2816 = vunpack.c.l.b16 %v1764
      %v2817 = vunpack.c.h.b16 %v1764
      %v2818 = vunpack.c.l.b16 %v1765
      %v2819 = vunpack.c.h.b16 %v1765
      %v2820 = vunpack.c.l.b16 %v1766
      %v2821 = vunpack.c.h.b16 %v1766
      %v2822 = vunpack.c.l.b16 %v1767
      %v2823 = vunpack.c.h.b16 %v1767
      %v2824 = vunpack.c.l.b16 %v1768
      %v2825 = vunpack.c.h.b16 %v1768
      %v2826 = vunpack.c.l.b16 %v1769
      %v2827 = vunpack.c.h.b16 %v1769
      %v2828 = vunpack.c.l.b16 %v1770
      %v2829 = vunpack.c.h.b16 %v1770
      %v2830 = vunpack.c.l.b16 %v1771
      %v2831 = vunpack.c.h.b16 %v1771
      %v2832 = vunpack.c.l.b16 %v1772
      %v2833 = vunpack.c.h.b16 %v1772
      %v2834 = vunpack.c.l.b16 %v1773
      %v2835 = vunpack.c.h.b16 %v1773
      %v2836 = vunpack.c.l.b16 %v1774
      %v2837 = vunpack.c.h.b16 %v1774
      %v2838 = vunpack.c.l.b16 %v1775
      %v2839 = vunpack.c.h.b16 %v1775
      %v2840 = vunpack.c.l.b16 %v1776
      %v2841 = vunpack.c.h.b16 %v1776
      %v2842 = vunpack.c.l.b16 %v1777
      %v2843 = vunpack.c.h.b16 %v1777
      %v2844 = vunpack.c.l.b16 %v1778
      %v2845 = vunpack.c.h.b16 %v1778
      %v2846 = vunpack.c.l.b16 %v1779
      %v2847 = vunpack.c.h.b16 %v1779
      %v2848 = vunpack.c.l.b16 %v1780
      %v2849 = vunpack.c.h.b16 %v1780
      %v2850 = vunpack.c.l.b16 %v1781
      %v2851 = vunpack.c.h.b16 %v1781
      %v2852 = vunpack.c.l.b16 %v1782
      %v2853 = vunpack.c.h.b16 %v1782
      %v2854 = vunpack.c.l.b16 %v1783
      %v2855 = vunpack.c.h.b16 %v1783
      %v2856 = vunpack.c.l.b16 %v1784
      %v2857 = vunpack.c.h.b16 %v1784
      %v2858 = vunpack.c.l.b16 %v1785
      %v2859 = vunpack.c.h.b16 %v1785
      %v2860 = vunpack.c.l.b16 %v1786
      %v2861 = vunpack.c.h.b16 %v1786
      %v2862 = vunpack.c.l.b16 %v1787
      %v2863 = vunpack.c.h.b16 %v1787
      %v2864 = vunpack.c.l.b16 %v1788
      %v2865 = vunpack.c.h.b16 %v1788
      %v2866 = vunpack.c.l.b16 %v1789
      %v2867 = vunpack.c.h.b16 %v1789
      %v2868 = vunpack.c.l.b16 %v1790
      %v2869 = vunpack.c.h.b16 %v1790
      %v2870 = vunpack.c.l.b16 %v1791
      %v2871 = vunpack.c.h.b16 %v1791
      %v2872 = vunpack.c.l.b16 %v1792
      %v2873 = vunpack.c.h.b16 %v1792
      %v2874 = vunpack.c.l.b16 %v1793
      %v2875 = vunpack.c.h.b16 %v1793
      %v2876 = vunpack.c.l.b16 %v1794
      %v2877 = vunpack.c.h.b16 %v1794
      %v2878 = vunpack.c.l.b16 %v1795
      %v2879 = vunpack.c.h.b16 %v1795
      %v2880 = vunpack.c.l.b16 %v1796
      %v2881 = vunpack.c.h.b16 %v1796
      %v2882 = vunpack.c.l.b16 %v1797
      %v2883 = vunpack.c.h.b16 %v1797
      %v2884 = vunpack.c.l.b16 %v1798
      %v2885 = vunpack.c.h.b16 %v1798
      %v2886 = vunpack.c.l.b16 %v1799
      %v2887 = vunpack.c.h.b16 %v1799
      %v2888 = vunpack.c.l.b16 %v1800
      %v2889 = vunpack.c.h.b16 %v1800
      %v2890 = vunpack.c.l.b16 %v1801
      %v2891 = vunpack.c.h.b16 %v1801
      %v2892 = vunpack.c.l.b16 %v1802
      %v2893 = vunpack.c.h.b16 %v1802
      %v2894 = vunpack.c.l.b16 %v1803
      %v2895 = vunpack.c.h.b16 %v1803
      %v2896 = vunpack.c.l.b16 %v1804
      %v2897 = vunpack.c.h.b16 %v1804
      %v2898 = vunpack.c.l.b16 %v1805
      %v2899 = vunpack.c.h.b16 %v1805
      %v2900 = vunpack.c.l.b16 %v1806
      %v2901 = vunpack.c.h.b16 %v1806
      %v2902 = vunpack.c.l.b16 %v1807
      %v2903 = vunpack.c.h.b16 %v1807
      %v2904 = vunpack.c.l.b16 %v1808
      %v2905 = vunpack.c.h.b16 %v1808
      %v2906 = vunpack.c.l.b16 %v1809
      %v2907 = vunpack.c.h.b16 %v1809
      %v2908 = vunpack.c.l.b16 %v1810
      %v2909 = vunpack.c.h.b16 %v1810
      %v2910 = vunpack.c.l.b16 %v1811
      %v2911 = vunpack.c.h.b16 %v1811
      %v2912 = vunpack.c.l.b16 %v1812
      %v2913 = vunpack.c.h.b16 %v1812
      %v2914 = vunpack.c.l.b16 %v1813
      %v2915 = vunpack.c.h.b16 %v1813
      %v2916 = vunpack.c.l.b16 %v1814
      %v2917 = vunpack.c.h.b16 %v1814
      %v2918 = vunpack.c.l.b16 %v1815
      %v2919 = vunpack.c.h.b16 %v1815
      %v2920 = vunpack.c.l.b16 %v1816
      %v2921 = vunpack.c.h.b16 %v1816
      %v2922 = vunpack.c.l.b16 %v1817
      %v2923 = vunpack.c.h.b16 %v1817
      %v2924 = vunpack.c.l.b16 %v1818
      %v2925 = vunpack.c.h.b16 %v1818
      %v2926 = vunpack.c.l.b16 %v1819
      %v2927 = vunpack.c.h.b16 %v1819
      %v2928 = vunpack.c.l.b16 %v1820
      %v2929 = vunpack.c.h.b16 %v1820
      %v2930 = vunpack.c.l.b16 %v1821
      %v2931 = vunpack.c.h.b16 %v1821
      %v2932 = vunpack.c.l.b16 %v1822
      %v2933 = vunpack.c.h.b16 %v1822
      %v2934 = vunpack.c.l.b16 %v1823
      %v2935 = vunpack.c.h.b16 %v1823
      %v2936 = vunpack.c.l.b16 %v1824
      %v2937 = vunpack.c.h.b16 %v1824
      %v2938 = vunpack.c.l.b16 %v1825
      %v2939 = vunpack.c.h.b16 %v1825
      %v2940 = vunpack.c.l.b16 %v1826
      %v2941 = vunpack.c.h.b16 %v1826
      %v2942 = vunpack.c.l.b16 %v1827
      %v2943 = vunpack.c.h.b16 %v1827
      %v2944 = vunpack.c.l.b16 %v1828
      %v2945 = vunpack.c.h.b16 %v1828
      %v2946 = vunpack.c.l.b16 %v1829
      %v2947 = vunpack.c.h.b16 %v1829
      %v2948 = vunpack.c.l.b16 %v1830
      %v2949 = vunpack.c.h.b16 %v1830
      %v2950 = vunpack.c.l.b16 %v1831
      %v2951 = vunpack.c.h.b16 %v1831
      %v2952 = vunpack.c.l.b16 %v1832
      %v2953 = vunpack.c.h.b16 %v1832
      %v2954 = vunpack.c.l.b16 %v1833
      %v2955 = vunpack.c.h.b16 %v1833
      %v2956 = vunpack.c.l.b16 %v1834
      %v2957 = vunpack.c.h.b16 %v1834
      %v2958 = vunpack.c.l.b16 %v1835
      %v2959 = vunpack.c.h.b16 %v1835
      %v2960 = vunpack.c.l.b16 %v1836
      %v2961 = vunpack.c.h.b16 %v1836
      %v2962 = vunpack.c.l.b16 %v1837
      %v2963 = vunpack.c.h.b16 %v1837
      %v2964 = vunpack.c.l.b16 %v1838
      %v2965 = vunpack.c.h.b16 %v1838
      %v2966 = vunpack.c.l.b16 %v1839
      %v2967 = vunpack.c.h.b16 %v1839
      %v2968 = vunpack.c.l.b16 %v1840
      %v2969 = vunpack.c.h.b16 %v1840
      %v2970 = vunpack.c.l.b16 %v1841
      %v2971 = vunpack.c.h.b16 %v1841
      %v2972 = vunpack.c.l.b16 %v1842
      %v2973 = vunpack.c.h.b16 %v1842
      %v2974 = vunpack.c.l.b16 %v1843
      %v2975 = vunpack.c.h.b16 %v1843
      %v2976 = vunpack.c.l.b16 %v1844
      %v2977 = vunpack.c.h.b16 %v1844
      %v2978 = vunpack.c.l.b16 %v1845
      %v2979 = vunpack.c.h.b16 %v1845
      %v2980 = vunpack.c.l.b16 %v1846
      %v2981 = vunpack.c.h.b16 %v1846
      %v2982 = vunpack.c.l.b16 %v1847
      %v2983 = vunpack.c.h.b16 %v1847
      %v2984 = vunpack.c.l.b16 %v1848
      %v2985 = vunpack.c.h.b16 %v1848
      %v2986 = vunpack.c.l.b16 %v1849
      %v2987 = vunpack.c.h.b16 %v1849
      %v2988 = vunpack.c.l.b16 %v1850
      %v2989 = vunpack.c.h.b16 %v1850
      %v2990 = vunpack.c.l.b16 %v1851
      %v2991 = vunpack.c.h.b16 %v1851
      %v2992 = vunpack.c.l.b16 %v1852
      %v2993 = vunpack.c.h.b16 %v1852
      %v2994 = vunpack.c.l.b16 %v1853
      %v2995 = vunpack.c.h.b16 %v1853
      %v2996 = vunpack.c.l.b16 %v1854
      %v2997 = vunpack.c.h.b16 %v1854
      %v2998 = vunpack.c.l.b16 %v1855
      %v2999 = vunpack.c.h.b16 %v1855
      %v3000 = vunpack.c.l.b16 %v1856
      %v3001 = vunpack.c.h.b16 %v1856
      %v3002 = vunpack.c.l.b16 %v1857
      %v3003 = vunpack.c.h.b16 %v1857
      %v3004 = vunpack.c.l.b16 %v1858
      %v3005 = vunpack.c.h.b16 %v1858
      %v3006 = vunpack.c.l.b16 %v1859
      %v3007 = vunpack.c.h.b16 %v1859
      %v3008 = vunpack.c.l.b16 %v1860
      %v3009 = vunpack.c.h.b16 %v1860
      %v3010 = vunpack.c.l.b16 %v1861
      %v3011 = vunpack.c.h.b16 %v1861
      %v3012 = vunpack.c.l.b16 %v1862
      %v3013 = vunpack.c.h.b16 %v1862
      %v3014 = vunpack.c.l.b16 %v1863
      %v3015 = vunpack.c.h.b16 %v1863
      %v3016 = vunpack.c.l.b16 %v1864
      %v3017 = vunpack.c.h.b16 %v1864
      %v3018 = vunpack.c.l.b16 %v1865
      %v3019 = vunpack.c.h.b16 %v1865
      %v3020 = vunpack.c.l.b16 %v1866
      %v3021 = vunpack.c.h.b16 %v1866
      %v3022 = vunpack.c.l.b16 %v1867
      %v3023 = vunpack.c.h.b16 %v1867
      %v3024 = vunpack.c.l.b16 %v1868
      %v3025 = vunpack.c.h.b16 %v1868
      %v3026 = vunpack.c.l.b16 %v1869
      %v3027 = vunpack.c.h.b16 %v1869
      %v3028 = vunpack.c.l.b16 %v1870
      %v3029 = vunpack.c.h.b16 %v1870
      %v3030 = vunpack.c.l.b16 %v1871
      %v3031 = vunpack.c.h.b16 %v1871
      %v3032 = vunpack.c.l.b16 %v1872
      %v3033 = vunpack.c.h.b16 %v1872
      %v3034 = vunpack.c.l.b16 %v1873
      %v3035 = vunpack.c.h.b16 %v1873
      %v3036 = vunpack.c.l.b16 %v1874
      %v3037 = vunpack.c.h.b16 %v1874
      %v3038 = vunpack.c.l.b16 %v1875
      %v3039 = vunpack.c.h.b16 %v1875
      %v3040 = vunpack.c.l.b16 %v1876
      %v3041 = vunpack.c.h.b16 %v1876
      %v3042 = vunpack.c.l.b16 %v1877
      %v3043 = vunpack.c.h.b16 %v1877
      %v3044 = vunpack.c.l.b16 %v1878
      %v3045 = vunpack.c.h.b16 %v1878
      %v3046 = vunpack.c.l.b16 %v1879
      %v3047 = vunpack.c.h.b16 %v1879
      %v3048 = vunpack.c.l.b16 %v1880
      %v3049 = vunpack.c.h.b16 %v1880
      %v3050 = vunpack.c.l.b16 %v1881
      %v3051 = vunpack.c.h.b16 %v1881
      %v3052 = vunpack.c.l.b16 %v1882
      %v3053 = vunpack.c.h.b16 %v1882
      %v3054 = vunpack.c.l.b16 %v1883
      %v3055 = vunpack.c.h.b16 %v1883
      %v3056 = vunpack.c.l.b16 %v1884
      %v3057 = vunpack.c.h.b16 %v1884
      %v3058 = vunpack.c.l.b16 %v1885
      %v3059 = vunpack.c.h.b16 %v1885
      %v3060 = vunpack.c.l.b16 %v1886
      %v3061 = vunpack.c.h.b16 %v1886
      %v3062 = vunpack.c.l.b16 %v1887
      %v3063 = vunpack.c.h.b16 %v1887
      %v3064 = vunpack.c.l.b16 %v1888
      %v3065 = vunpack.c.h.b16 %v1888
      %v3066 = vunpack.c.l.b16 %v1889
      %v3067 = vunpack.c.h.b16 %v1889
      %v3068 = vunpack.c.l.b16 %v1890
      %v3069 = vunpack.c.h.b16 %v1890
      %v3070 = vunpack.c.l.b16 %v1891
      %v3071 = vunpack.c.h.b16 %v1891
      %v3072 = vunpack.c.l.b16 %v1892
      %v3073 = vunpack.c.h.b16 %v1892
      %v3074 = vunpack.c.l.b16 %v1893
      %v3075 = vunpack.c.h.b16 %v1893
      %v3076 = vunpack.c.l.b16 %v1894
      %v3077 = vunpack.c.h.b16 %v1894
      %v3078 = vunpack.c.l.b16 %v1895
      %v3079 = vunpack.c.h.b16 %v1895
      %v3080 = vunpack.c.l.b16 %v1896
      %v3081 = vunpack.c.h.b16 %v1896
      %v3082 = vunpack.c.l.b16 %v1897
      %v3083 = vunpack.c.h.b16 %v1897
      %v3084 = vunpack.c.l.b16 %v1898
      %v3085 = vunpack.c.h.b16 %v1898
      %v3086 = vunpack.c.l.b16 %v1899
      %v3087 = vunpack.c.h.b16 %v1899
      %v3088 = vunpack.c.l.b16 %v1900
      %v3089 = vunpack.c.h.b16 %v1900
      %v3090 = vunpack.c.l.b16 %v1901
      %v3091 = vunpack.c.h.b16 %v1901
      %v3092 = vunpack.c.l.b16 %v1902
      %v3093 = vunpack.c.h.b16 %v1902
      %v3094 = vunpack.c.l.b16 %v1903
      %v3095 = vunpack.c.h.b16 %v1903
      %v3096 = vunpack.c.l.b16 %v1904
      %v3097 = vunpack.c.h.b16 %v1904
      %v3098 = vunpack.c.l.b16 %v1905
      %v3099 = vunpack.c.h.b16 %v1905
      %v3100 = vunpack.c.l.b16 %v1906
      %v3101 = vunpack.c.h.b16 %v1906
      %v3102 = vunpack.c.l.b16 %v1907
      %v3103 = vunpack.c.h.b16 %v1907
      %v3104 = vunpack.c.l.b16 %v1908
      %v3105 = vunpack.c.h.b16 %v1908
      %v3106 = vunpack.c.l.b16 %v1909
      %v3107 = vunpack.c.h.b16 %v1909
      %v3108 = vunpack.c.l.b16 %v1910
      %v3109 = vunpack.c.h.b16 %v1910
      %v3110 = vunpack.c.l.b16 %v1911
      %v3111 = vunpack.c.h.b16 %v1911
      %v3112 = vunpack.c.l.b16 %v1912
      %v3113 = vunpack.c.h.b16 %v1912
      %v3114 = vunpack.c.l.b16 %v1913
      %v3115 = vunpack.c.h.b16 %v1913
      %v3116 = vunpack.c.l.b16 %v1914
      %v3117 = vunpack.c.h.b16 %v1914
      %v3118 = vunpack.c.l.b16 %v1915
      %v3119 = vunpack.c.h.b16 %v1915
      %v3120 = vunpack.c.l.b16 %v1916
      %v3121 = vunpack.c.h.b16 %v1916
      %v3122 = vunpack.c.l.b16 %v1917
      %v3123 = vunpack.c.h.b16 %v1917
      %v3124 = vunpack.c.l.b16 %v1918
      %v3125 = vunpack.c.h.b16 %v1918
      %v3126 = vunpack.c.l.b16 %v1919
      %v3127 = vunpack.c.h.b16 %v1919
      %v3128 = vunpack.c.l.b16 %v1920
      %v3129 = vunpack.c.h.b16 %v1920
      %v3130 = vunpack.c.l.b16 %v1921
      %v3131 = vunpack.c.h.b16 %v1921
      %v3132 = vunpack.c.l.b16 %v1922
      %v3133 = vunpack.c.h.b16 %v1922
      %v3134 = vunpack.c.l.b16 %v1923
      %v3135 = vunpack.c.h.b16 %v1923
      %v3136 = vunpack.c.l.b16 %v1924
      %v3137 = vunpack.c.h.b16 %v1924
      %v3138 = vunpack.c.l.b16 %v1925
      %v3139 = vunpack.c.h.b16 %v1925
      %v3140 = vunpack.c.l.b16 %v1926
      %v3141 = vunpack.c.h.b16 %v1926
      %v3142 = vunpack.c.l.b16 %v1927
      %v3143 = vunpack.c.h.b16 %v1927
      %v3144 = vunpack.c.l.b16 %v1928
      %v3145 = vunpack.c.h.b16 %v1928
      %v3146 = vunpack.c.l.b16 %v1929
      %v3147 = vunpack.c.h.b16 %v1929
      %v3148 = vunpack.c.l.b16 %v1930
      %v3149 = vunpack.c.h.b16 %v1930
      %v3150 = vunpack.c.l.b16 %v1931
      %v3151 = vunpack.c.h.b16 %v1931
      %v3152 = vunpack.c.l.b16 %v1932
      %v3153 = vunpack.c.h.b16 %v1932
      %v3154 = vunpack.c.l.b16 %v1933
      %v3155 = vunpack.c.h.b16 %v1933
      %v3156 = vunpack.c.l.b16 %v1934
      %v3157 = vunpack.c.h.b16 %v1934
      %v3158 = vunpack.c.l.b16 %v1935
      %v3159 = vunpack.c.h.b16 %v1935
      %v3160 = vunpack.c.l.b16 %v1936
      %v3161 = vunpack.c.h.b16 %v1936
      %v3162 = vunpack.c.l.b16 %v1937
      %v3163 = vunpack.c.h.b16 %v1937
      %v3164 = vunpack.c.l.b16 %v1938
      %v3165 = vunpack.c.h.b16 %v1938
      %v3166 = vunpack.c.l.b16 %v1939
      %v3167 = vunpack.c.h.b16 %v1939
      %v3168 = vunpack.c.l.b16 %v1940
      %v3169 = vunpack.c.h.b16 %v1940
      %v3170 = vunpack.c.l.b16 %v1941
      %v3171 = vunpack.c.h.b16 %v1941
      %v3172 = vunpack.c.l.b16 %v1942
      %v3173 = vunpack.c.h.b16 %v1942
      %v3174 = vunpack.c.l.b16 %v1943
      %v3175 = vunpack.c.h.b16 %v1943
      %v3176 = vunpack.c.l.b16 %v1944
      %v3177 = vunpack.c.h.b16 %v1944
      %v3178 = vunpack.c.l.b16 %v1945
      %v3179 = vunpack.c.h.b16 %v1945
      %v3180 = vunpack.c.l.b16 %v1946
      %v3181 = vunpack.c.h.b16 %v1946
      %v3182 = vunpack.c.l.b16 %v1947
      %v3183 = vunpack.c.h.b16 %v1947
      %v3184 = vunpack.c.l.b16 %v1948
      %v3185 = vunpack.c.h.b16 %v1948
      %v3186 = vunpack.c.l.b16 %v1949
      %v3187 = vunpack.c.h.b16 %v1949
      %v3188 = vunpack.c.l.b16 %v1950
      %v3189 = vunpack.c.h.b16 %v1950
      %v3190 = vunpack.c.l.b16 %v1951
      %v3191 = vunpack.c.h.b16 %v1951
      %v3192 = vunpack.c.l.b16 %v1952
      %v3193 = vunpack.c.h.b16 %v1952
      %v3194 = vunpack.c.l.b16 %v1953
      %v3195 = vunpack.c.h.b16 %v1953
      %v3196 = vunpack.c.l.b16 %v1954
      %v3197 = vunpack.c.h.b16 %v1954
      %v3198 = vunpack.c.l.b16 %v1955
      %v3199 = vunpack.c.h.b16 %v1955
      %v3200 = vunpack.c.l.b16 %v1956
      %v3201 = vunpack.c.h.b16 %v1956
      %v3202 = vunpack.c.l.b16 %v1957
      %v3203 = vunpack.c.h.b16 %v1957
      %v3204 = vunpack.c.l.b16 %v1958
      %v3205 = vunpack.c.h.b16 %v1958
      %v3206 = vunpack.c.l.b16 %v1959
      %v3207 = vunpack.c.h.b16 %v1959
      %v3208 = vunpack.c.l.b16 %v1960
      %v3209 = vunpack.c.h.b16 %v1960
      %v3210 = vunpack.c.l.b16 %v1961
      %v3211 = vunpack.c.h.b16 %v1961
      %v3212 = vunpack.c.l.b16 %v1962
      %v3213 = vunpack.c.h.b16 %v1962
      %v3214 = vunpack.c.l.b16 %v1963
      %v3215 = vunpack.c.h.b16 %v1963
      %v3216 = vunpack.c.l.b16 %v1964
      %v3217 = vunpack.c.h.b16 %v1964
      %v3218 = vunpack.c.l.b16 %v1965
      %v3219 = vunpack.c.h.b16 %v1965
      %v3220 = vunpack.c.l.b16 %v1966
      %v3221 = vunpack.c.h.b16 %v1966
      %v3222 = vunpack.c.l.b16 %v1967
      %v3223 = vunpack.c.h.b16 %v1967
      %v3224 = vunpack.c.l.b16 %v1968
      %v3225 = vunpack.c.h.b16 %v1968
      %v3226 = vunpack.c.l.b16 %v1969
      %v3227 = vunpack.c.h.b16 %v1969
      %v3228 = vunpack.c.l.b16 %v1970
      %v3229 = vunpack.c.h.b16 %v1970
      %v3230 = vunpack.c.l.b16 %v1971
      %v3231 = vunpack.c.h.b16 %v1971
      %v3232 = vunpack.c.l.b16 %v1972
      %v3233 = vunpack.c.h.b16 %v1972
      %v3234 = vunpack.c.l.b16 %v1973
      %v3235 = vunpack.c.h.b16 %v1973
      %v3236 = vunpack.c.l.b16 %v1974
      %v3237 = vunpack.c.h.b16 %v1974
      %v3238 = vunpack.c.l.b16 %v1975
      %v3239 = vunpack.c.h.b16 %v1975
      %v3240 = vunpack.c.l.b16 %v1976
      %v3241 = vunpack.c.h.b16 %v1976
      %v3242 = vunpack.c.l.b16 %v1977
      %v3243 = vunpack.c.h.b16 %v1977
      %v3244 = vunpack.c.l.b16 %v1978
      %v3245 = vunpack.c.h.b16 %v1978
      %v3246 = vunpack.c.l.b16 %v1979
      %v3247 = vunpack.c.h.b16 %v1979
      %v3248 = vunpack.c.l.b16 %v1980
      %v3249 = vunpack.c.h.b16 %v1980
      %v3250 = vunpack.c.l.b16 %v1981
      %v3251 = vunpack.c.h.b16 %v1981
      %v3252 = vunpack.c.l.b16 %v1982
      %v3253 = vunpack.c.h.b16 %v1982
      %v3254 = vunpack.c.l.b16 %v1983
      %v3255 = vunpack.c.h.b16 %v1983
      %v3256 = vunpack.c.l.b16 %v1984
      %v3257 = vunpack.c.h.b16 %v1984
      %v3258 = vunpack.c.l.b16 %v1985
      %v3259 = vunpack.c.h.b16 %v1985
      %v3260 = vunpack.c.l.b16 %v1986
      %v3261 = vunpack.c.h.b16 %v1986
      %v3262 = vunpack.c.l.b16 %v1987
      %v3263 = vunpack.c.h.b16 %v1987
      %v3264 = vunpack.c.l.b16 %v1988
      %v3265 = vunpack.c.h.b16 %v1988
      %v3266 = vunpack.c.l.b16 %v1989
      %v3267 = vunpack.c.h.b16 %v1989
      %v3268 = vunpack.c.l.b16 %v1990
      %v3269 = vunpack.c.h.b16 %v1990
      %v3270 = vunpack.c.l.b16 %v1991
      %v3271 = vunpack.c.h.b16 %v1991
      %v3272 = vunpack.c.l.b16 %v1992
      %v3273 = vunpack.c.h.b16 %v1992
      %v3274 = vunpack.c.l.b16 %v1993
      %v3275 = vunpack.c.h.b16 %v1993
      %v3276 = vunpack.c.l.b16 %v1994
      %v3277 = vunpack.c.h.b16 %v1994
      %v3278 = vunpack.c.l.b16 %v1995
      %v3279 = vunpack.c.h.b16 %v1995
      %v3280 = vunpack.c.l.b16 %v1996
      %v3281 = vunpack.c.h.b16 %v1996
      %v3282 = vunpack.c.l.b16 %v1997
      %v3283 = vunpack.c.h.b16 %v1997
      %v3284 = vunpack.c.l.b16 %v1998
      %v3285 = vunpack.c.h.b16 %v1998
      %v3286 = vunpack.c.l.b16 %v1999
      %v3287 = vunpack.c.h.b16 %v1999
      %v3288 = vunpack.c.l.b16 %v2000
      %v3289 = vunpack.c.h.b16 %v2000
      %v3290 = vunpack.c.l.b16 %v2001
      %v3291 = vunpack.c.h.b16 %v2001
      %v3292 = vunpack.c.l.b16 %v2002
      %v3293 = vunpack.c.h.b16 %v2002
      %v3294 = vunpack.c.l.b16 %v2003
      %v3295 = vunpack.c.h.b16 %v2003
      %v3296 = vunpack.c.l.b16 %v2004
      %v3297 = vunpack.c.h.b16 %v2004
      %v3298 = vunpack.c.l.b16 %v2005
      %v3299 = vunpack.c.h.b16 %v2005
      %v3300 = vunpack.c.l.b16 %v2006
      %v3301 = vunpack.c.h.b16 %v2006
      %v3302 = vunpack.c.l.b16 %v2007
      %v3303 = vunpack.c.h.b16 %v2007
      %v3304 = vunpack.c.l.b16 %v2008
      %v3305 = vunpack.c.h.b16 %v2008
      %v3306 = vunpack.c.l.b16 %v2009
      %v3307 = vunpack.c.h.b16 %v2009
      %v3308 = vunpack.c.l.b16 %v2010
      %v3309 = vunpack.c.h.b16 %v2010
      %v3310 = vunpack.c.l.b16 %v2011
      %v3311 = vunpack.c.h.b16 %v2011
      %v3312 = vunpack.c.l.b16 %v2012
      %v3313 = vunpack.c.h.b16 %v2012
      %v3314 = vunpack.c.l.b16 %v2013
      %v3315 = vunpack.c.h.b16 %v2013
      %v3316 = vunpack.c.l.b16 %v2014
      %v3317 = vunpack.c.h.b16 %v2014
      %v3318 = vunpack.c.l.b16 %v2015
      %v3319 = vunpack.c.h.b16 %v2015
      %v3320 = vunpack.c.l.b16 %v2016
      %v3321 = vunpack.c.h.b16 %v2016
      %v3322 = vunpack.c.l.b16 %v2017
      %v3323 = vunpack.c.h.b16 %v2017
      %v3324 = vunpack.c.l.b16 %v2018
      %v3325 = vunpack.c.h.b16 %v2018
      %v3326 = vunpack.c.l.b16 %v2019
      %v3327 = vunpack.c.h.b16 %v2019
      %v3328 = vunpack.c.l.b16 %v2020
      %v3329 = vunpack.c.h.b16 %v2020
      %v3330 = vunpack.c.l.b16 %v2021
      %v3331 = vunpack.c.h.b16 %v2021
      %v3332 = vunpack.c.l.b16 %v2022
      %v3333 = vunpack.c.h.b16 %v2022
      %v3334 = vunpack.c.l.b16 %v2023
      %v3335 = vunpack.c.h.b16 %v2023
      %v3336 = vunpack.c.l.b16 %v2024
      %v3337 = vunpack.c.h.b16 %v2024
      %v3338 = vunpack.c.l.b16 %v2025
      %v3339 = vunpack.c.h.b16 %v2025
      %v3340 = vunpack.c.l.b16 %v2026
      %v3341 = vunpack.c.h.b16 %v2026
      %v3342 = vunpack.c.l.b16 %v2027
      %v3343 = vunpack.c.h.b16 %v2027
      %v3344 = vunpack.c.l.b16 %v2028
      %v3345 = vunpack.c.h.b16 %v2028
      %v3346 = vunpack.c.l.b16 %v2029
      %v3347 = vunpack.c.h.b16 %v2029
      %v3348 = vunpack.c.l.b16 %v2030
      %v3349 = vunpack.c.h.b16 %v2030
      %v3350 = vunpack.c.l.b16 %v2031
      %v3351 = vunpack.c.h.b16 %v2031
      %v3352 = vunpack.c.l.b16 %v2032
      %v3353 = vunpack.c.h.b16 %v2032
      %v3354 = vunpack.c.l.b16 %v2033
      %v3355 = vunpack.c.h.b16 %v2033
      %v3356 = vunpack.c.l.b16 %v2034
      %v3357 = vunpack.c.h.b16 %v2034
      %v3358 = vunpack.c.l.b16 %v2035
      %v3359 = vunpack.c.h.b16 %v2035
      %v3360 = vunpack.c.l.b16 %v2036
      %v3361 = vunpack.c.h.b16 %v2036
      %v3362 = vunpack.c.l.b16 %v2037
      %v3363 = vunpack.c.h.b16 %v2037
      %v3364 = vunpack.c.l.b16 %v2038
      %v3365 = vunpack.c.h.b16 %v2038
      %v3366 = vunpack.c.l.b16 %v2039
      %v3367 = vunpack.c.h.b16 %v2039
      %v3368 = vunpack.c.l.b16 %v2040
      %v3369 = vunpack.c.h.b16 %v2040
      %v3370 = vunpack.c.l.b16 %v2041
      %v3371 = vunpack.c.h.b16 %v2041
      %v3372 = vunpack.c.l.b16 %v2042
      %v3373 = vunpack.c.h.b16 %v2042
      %v3374 = vunpack.c.l.b16 %v2043
      %v3375 = vunpack.c.h.b16 %v2043
      %v3376 = vunpack.c.l.b16 %v2044
      %v3377 = vunpack.c.h.b16 %v2044
      %v3378 = vunpack.c.l.b16 %v2045
      %v3379 = vunpack.c.h.b16 %v2045
      %v3380 = vunpack.c.l.b16 %v2046
      %v3381 = vunpack.c.h.b16 %v2046
      %v3382 = vunpack.c.l.b16 %v2047
      %v3383 = vunpack.c.h.b16 %v2047
      %v3384 = vunpack.c.l.b16 %v2048
      %v3385 = vunpack.c.h.b16 %v2048
      %v3386 = vunpack.c.l.b16 %v2049
      %v3387 = vunpack.c.h.b16 %v2049
      %v3388 = vunpack.c.l.b16 %v2050
      %v3389 = vunpack.c.h.b16 %v2050
      %v3390 = vunpack.c.l.b16 %v2051
      %v3391 = vunpack.c.h.b16 %v2051
      %v3392 = vunpack.c.l.b16 %v2052
      %v3393 = vunpack.c.h.b16 %v2052
      %v3394 = vunpack.c.l.b16 %v2053
      %v3395 = vunpack.c.h.b16 %v2053
      %v3396 = vunpack.c.l.b16 %v2054
      %v3397 = vunpack.c.h.b16 %v2054
      %v3398 = vunpack.c.l.b16 %v2055
      %v3399 = vunpack.c.h.b16 %v2055
      %v3400 = vunpack.c.l.b16 %v2056
      %v3401 = vunpack.c.h.b16 %v2056
      %v3402 = vunpack.c.l.b16 %v2057
      %v3403 = vunpack.c.h.b16 %v2057
      %v3404 = vunpack.c.l.b16 %v2058
      %v3405 = vunpack.c.h.b16 %v2058
      %v3406 = vunpack.c.l.b16 %v2059
      %v3407 = vunpack.c.h.b16 %v2059
      %v3408 = vunpack.c.l.b16 %v2060
      %v3409 = vunpack.c.h.b16 %v2060
      %v3410 = vunpack.c.l.b16 %v2061
      %v3411 = vunpack.c.h.b16 %v2061
      %v3412 = vunpack.c.l.b16 %v2062
      %v3413 = vunpack.c.h.b16 %v2062
      %v3414 = vunpack.c.l.b16 %v2063
      %v3415 = vunpack.c.h.b16 %v2063
      %v3416 = vunpack.c.l.b16 %v2064
      %v3417 = vunpack.c.h.b16 %v2064
      %v3418 = vunpack.c.l.b16 %v2065
      %v3419 = vunpack.c.h.b16 %v2065
      %v3420 = vunpack.c.l.b16 %v2066
      %v3421 = vunpack.c.h.b16 %v2066
      %v3422 = vunpack.c.l.b16 %v2067
      %v3423 = vunpack.c.h.b16 %v2067
      %v3424 = vunpack.c.l.b16 %v2068
      %v3425 = vunpack.c.h.b16 %v2068
      %v3426 = vunpack.c.l.b16 %v2069
      %v3427 = vunpack.c.h.b16 %v2069
      %v3428 = vunpack.c.l.b16 %v2070
      %v3429 = vunpack.c.h.b16 %v2070
      %v3430 = vunpack.c.l.b16 %v2071
      %v3431 = vunpack.c.h.b16 %v2071
      %v3432 = vunpack.c.l.b16 %v2072
      %v3433 = vunpack.c.h.b16 %v2072
      %v3434 = vunpack.c.l.b16 %v2073
      %v3435 = vunpack.c.h.b16 %v2073
      %v3436 = vunpack.c.l.b16 %v2074
      %v3437 = vunpack.c.h.b16 %v2074
      %v3438 = vunpack.c.l.b16 %v2075
      %v3439 = vunpack.c.h.b16 %v2075
      %v3440 = vunpack.c.l.b16 %v2076
      %v3441 = vunpack.c.h.b16 %v2076
      %v3442 = vunpack.c.l.b16 %v2077
      %v3443 = vunpack.c.h.b16 %v2077
      %v3444 = vunpack.c.l.b16 %v2078
      %v3445 = vunpack.c.h.b16 %v2078
      %v3446 = vunpack.c.l.b16 %v2079
      %v3447 = vunpack.c.h.b16 %v2079
      %v3448 = vunpack.c.l.b16 %v2080
      %v3449 = vunpack.c.h.b16 %v2080
      %v3450 = vunpack.c.l.b16 %v2081
      %v3451 = vunpack.c.h.b16 %v2081
      %v3452 = vunpack.c.l.b16 %v2082
      %v3453 = vunpack.c.h.b16 %v2082
      %v3454 = vunpack.c.l.b16 %v2083
      %v3455 = vunpack.c.h.b16 %v2083
      %v3456 = vunpack.c.l.b16 %v2084
      %v3457 = vunpack.c.h.b16 %v2084
      %v3458 = vunpack.c.l.b16 %v2085
      %v3459 = vunpack.c.h.b16 %v2085
      %v3460 = vunpack.c.l.b16 %v2086
      %v3461 = vunpack.c.h.b16 %v2086
      %v3462 = vunpack.c.l.b16 %v2087
      %v3463 = vunpack.c.h.b16 %v2087
      %v3464 = vunpack.c.l.b16 %v2088
      %v3465 = vunpack.c.h.b16 %v2088
      %v3466 = vunpack.c.l.b16 %v2089
      %v3467 = vunpack.c.h.b16 %v2089
      %v3468 = vunpack.c.l.b16 %v2090
      %v3469 = vunpack.c.h.b16 %v2090
      %v3470 = vunpack.c.l.b16 %v2091
      %v3471 = vunpack.c.h.b16 %v2091
      %v3472 = vunpack.c.l.b16 %v2092
      %v3473 = vunpack.c.h.b16 %v2092
      %v3474 = vunpack.c.l.b16 %v2093
      %v3475 = vunpack.c.h.b16 %v2093
      %v3476 = vunpack.c.l.b16 %v2094
      %v3477 = vunpack.c.h.b16 %v2094
      %v3478 = vunpack.c.l.b16 %v2095
      %v3479 = vunpack.c.h.b16 %v2095
      %v3480 = vunpack.c.l.b16 %v2096
      %v3481 = vunpack.c.h.b16 %v2096
      %v3482 = vunpack.c.l.b16 %v2097
      %v3483 = vunpack.c.h.b16 %v2097
      %v3484 = vunpack.c.l.b16 %v2098
      %v3485 = vunpack.c.h.b16 %v2098
      %v3486 = vunpack.c.l.b16 %v2099
      %v3487 = vunpack.c.h.b16 %v2099
      %v3488 = vunpack.c.l.b16 %v2100
      %v3489 = vunpack.c.h.b16 %v2100
      %v3490 = vunpack.c.l.b16 %v2101
      %v3491 = vunpack.c.h.b16 %v2101
      %v3492 = vunpack.c.l.b16 %v2102
      %v3493 = vunpack.c.h.b16 %v2102
      %v3494 = vunpack.c.l.b16 %v2103
      %v3495 = vunpack.c.h.b16 %v2103
      %v3496 = vunpack.c.l.b16 %v2104
      %v3497 = vunpack.c.h.b16 %v2104
      %v3498 = vunpack.c.l.b16 %v2105
      %v3499 = vunpack.c.h.b16 %v2105
      %v3500 = vunpack.c.l.b16 %v2106
      %v3501 = vunpack.c.h.b16 %v2106
      %v3502 = vunpack.c.l.b16 %v2107
      %v3503 = vunpack.c.h.b16 %v2107
      %v3504 = vunpack.c.l.b16 %v2108
      %v3505 = vunpack.c.h.b16 %v2108
      %v3506 = vunpack.c.l.b16 %v2109
      %v3507 = vunpack.c.h.b16 %v2109
      %v3508 = vunpack.c.l.b16 %v2110
      %v3509 = vunpack.c.h.b16 %v2110
      %v3510 = vunpack.c.l.b16 %v2111
      %v3511 = vunpack.c.h.b16 %v2111
      %v3512 = vunpack.c.l.b16 %v2112
      %v3513 = vunpack.c.h.b16 %v2112
      %v3514 = vunpack.c.l.b16 %v2113
      %v3515 = vunpack.c.h.b16 %v2113
      %v3516 = vunpack.c.l.b16 %v2114
      %v3517 = vunpack.c.h.b16 %v2114
      %v3518 = vunpack.c.l.b16 %v2115
      %v3519 = vunpack.c.h.b16 %v2115
      %v3520 = vunpack.c.l.b16 %v2116
      %v3521 = vunpack.c.h.b16 %v2116
      %v3522 = vunpack.c.l.b16 %v2117
      %v3523 = vunpack.c.h.b16 %v2117
      %v3524 = vunpack.c.l.b16 %v2118
      %v3525 = vunpack.c.h.b16 %v2118
      %v3526 = vunpack.c.l.b16 %v2119
      %v3527 = vunpack.c.h.b16 %v2119
      %v3528 = vunpack.c.l.b16 %v2120
      %v3529 = vunpack.c.h.b16 %v2120
      %v3530 = vunpack.c.l.b16 %v2121
      %v3531 = vunpack.c.h.b16 %v2121
      %v3532 = vunpack.c.l.b16 %v2122
      %v3533 = vunpack.c.h.b16 %v2122
      %v3534 = vunpack.c.l.b16 %v2123
      %v3535 = vunpack.c.h.b16 %v2123
      %v3536 = vunpack.c.l.b16 %v2124
      %v3537 = vunpack.c.h.b16 %v2124
      %v3538 = vunpack.c.l.b16 %v2125
      %v3539 = vunpack.c.h.b16 %v2125
      %v3540 = vunpack.c.l.b16 %v2126
      %v3541 = vunpack.c.h.b16 %v2126
      %v3542 = vunpack.c.l.b16 %v2127
      %v3543 = vunpack.c.h.b16 %v2127
      %v3544 = vunpack.c.l.b16 %v2128
      %v3545 = vunpack.c.h.b16 %v2128
      %v3546 = vunpack.c.l.b16 %v2129
      %v3547 = vunpack.c.h.b16 %v2129
      %v3548 = vunpack.c.l.b16 %v2130
      %v3549 = vunpack.c.h.b16 %v2130
      %v3550 = vunpack.c.l.b16 %v2131
      %v3551 = vunpack.c.h.b16 %v2131
      %v3552 = vunpack.c.l.b16 %v2132
      %v3553 = vunpack.c.h.b16 %v2132
      %v3554 = vunpack.c.l.b16 %v2133
      %v3555 = vunpack.c.h.b16 %v2133
      %v3556 = vunpack.c.l.b16 %v2134
      %v3557 = vunpack.c.h.b16 %v2134
      %v3558 = vunpack.c.l.b16 %v2135
      %v3559 = vunpack.c.h.b16 %v2135
      %v3560 = vunpack.c.l.b16 %v2136
      %v3561 = vunpack.c.h.b16 %v2136
      %v3562 = vunpack.c.l.b16 %v2137
      %v3563 = vunpack.c.h.b16 %v2137
      %v3564 = vunpack.c.l.b16 %v2138
      %v3565 = vunpack.c.h.b16 %v2138
      %v3566 = vunpack.c.l.b16 %v2139
      %v3567 = vunpack.c.h.b16 %v2139
      %v3568 = vunpack.c.l.b16 %v2140
      %v3569 = vunpack.c.h.b16 %v2140
      %v3570 = vunpack.c.l.b16 %v2141
      %v3571 = vunpack.c.h.b16 %v2141
      %v3572 = vunpack.c.l.b16 %v2142
      %v3573 = vunpack.c.h.b16 %v2142
      %v3574 = vunpack.c.l.b16 %v2143
      %v3575 = vunpack.c.h.b16 %v2143
      %v3576 = vunpack.c.l.b16 %v2144
      %v3577 = vunpack.c.h.b16 %v2144
      %v3578 = vunpack.c.l.b16 %v2145
      %v3579 = vunpack.c.h.b16 %v2145
      %v3580 = vunpack.c.l.b16 %v2146
      %v3581 = vunpack.c.h.b16 %v2146
      %v3582 = vunpack.c.l.b16 %v2147
      %v3583 = vunpack.c.h.b16 %v2147
      %v3584 = vunpack.c.l.b16 %v2148
      %v3585 = vunpack.c.h.b16 %v2148
      %v3586 = vunpack.c.l.b16 %v2149
      %v3587 = vunpack.c.h.b16 %v2149
      %v3588 = vunpack.c.l.b16 %v2150
      %v3589 = vunpack.c.h.b16 %v2150
      %v3590 = vunpack.c.l.b16 %v2151
      %v3591 = vunpack.c.h.b16 %v2151
      %v3592 = vunpack.c.l.b16 %v2152
      %v3593 = vunpack.c.h.b16 %v2152
      %v3594 = vunpack.c.l.b16 %v2153
      %v3595 = vunpack.c.h.b16 %v2153
      %v3596 = vunpack.c.l.b16 %v2154
      %v3597 = vunpack.c.h.b16 %v2154
      %v3598 = vunpack.c.l.b16 %v2155
      %v3599 = vunpack.c.h.b16 %v2155
      %v3600 = vunpack.c.l.b16 %v2156
      %v3601 = vunpack.c.h.b16 %v2156
      %v3602 = vunpack.c.l.b16 %v2157
      %v3603 = vunpack.c.h.b16 %v2157
      %v3604 = vunpack.c.l.b16 %v2158
      %v3605 = vunpack.c.h.b16 %v2158
      %v3606 = vunpack.c.l.b16 %v2159
      %v3607 = vunpack.c.h.b16 %v2159
      %v3608 = vunpack.c.l.b16 %v2160
      %v3609 = vunpack.c.h.b16 %v2160
      %v3610 = vunpack.c.l.b16 %v2161
      %v3611 = vunpack.c.h.b16 %v2161
      %v3612 = vunpack.c.l.b16 %v2162
      %v3613 = vunpack.c.h.b16 %v2162
      %v3614 = vunpack.c.l.b16 %v2163
      %v3615 = vunpack.c.h.b16 %v2163
      %v3616 = vunpack.c.l.b16 %v2164
      %v3617 = vunpack.c.h.b16 %v2164
      %v3618 = vunpack.c.l.b16 %v2165
      %v3619 = vunpack.c.h.b16 %v2165
      %v3620 = vunpack.c.l.b16 %v2166
      %v3621 = vunpack.c.h.b16 %v2166
      %v3622 = vunpack.c.l.b16 %v2167
      %v3623 = vunpack.c.h.b16 %v2167
      %v3624 = vunpack.c.l.b16 %v2168
      %v3625 = vunpack.c.h.b16 %v2168
      %v3626 = vunpack.c.l.b16 %v2169
      %v3627 = vunpack.c.h.b16 %v2169
      %v3628 = vunpack.c.l.b16 %v2170
      %v3629 = vunpack.c.h.b16 %v2170
      %v3630 = vunpack.c.l.b16 %v2171
      %v3631 = vunpack.c.h.b16 %v2171
      %v3632 = vunpack.c.l.b16 %v2172
      %v3633 = vunpack.c.h.b16 %v2172
      %v3634 = vunpack.c.l.b16 %v2173
      %v3635 = vunpack.c.h.b16 %v2173
      %v3636 = vunpack.c.l.b16 %v2174
      %v3637 = vunpack.c.h.b16 %v2174
      %v3638 = vunpack.c.l.b16 %v2175
      %v3639 = vunpack.c.h.b16 %v2175
      %v3640 = vunpack.c.l.b16 %v2176
      %v3641 = vunpack.c.h.b16 %v2176
      %v3642 = vunpack.c.l.b16 %v2177
      %v3643 = vunpack.c.h.b16 %v2177
      %v3644 = vunpack.c.l.b16 %v2178
      %v3645 = vunpack.c.h.b16 %v2178
      %v3646 = vunpack.c.l.b16 %v2179
      %v3647 = vunpack.c.h.b16 %v2179
      %v3648 = vunpack.c.l.b16 %v2180
      %v3649 = vunpack.c.h.b16 %v2180
      %v3650 = vunpack.c.l.b16 %v2181
      %v3651 = vunpack.c.h.b16 %v2181
      %v3652 = vunpack.c.l.b16 %v2182
      %v3653 = vunpack.c.h.b16 %v2182
      %v3654 = vunpack.c.l.b16 %v2183
      %v3655 = vunpack.c.h.b16 %v2183
      %v3656 = vunpack.c.l.b16 %v2184
      %v3657 = vunpack.c.h.b16 %v2184
      %v3658 = vunpack.c.l.b16 %v2185
      %v3659 = vunpack.c.h.b16 %v2185
      %v3660 = vunpack.c.l.b16 %v2186
      %v3661 = vunpack.c.h.b16 %v2186
      %v3662 = vunpack.c.l.b16 %v2187
      %v3663 = vunpack.c.h.b16 %v2187
      %v3664 = vunpack.c.l.b16 %v2188
      %v3665 = vunpack.c.h.b16 %v2188
      %v3666 = vunpack.c.l.b16 %v2189
      %v3667 = vunpack.c.h.b16 %v2189
      %v3668 = vunpack.c.l.b16 %v2190
      %v3669 = vunpack.c.h.b16 %v2190
      %v3670 = vunpack.c.l.b16 %v2191
      %v3671 = vunpack.c.h.b16 %v2191
      %v3672 = vunpack.c.l.b16 %v2192
      %v3673 = vunpack.c.h.b16 %v2192
      %v3674 = vunpack.c.l.b16 %v2193
      %v3675 = vunpack.c.h.b16 %v2193
      %v3676 = vunpack.c.l.b16 %v2194
      %v3677 = vunpack.c.h.b16 %v2194
      %v3678 = vunpack.c.l.b16 %v2195
      %v3679 = vunpack.c.h.b16 %v2195
      %v3680 = vunpack.c.l.b16 %v2196
      %v3681 = vunpack.c.h.b16 %v2196
      %v3682 = vunpack.c.l.b16 %v2197
      %v3683 = vunpack.c.h.b16 %v2197
      %v3684 = vunpack.c.l.b16 %v2198
      %v3685 = vunpack.c.h.b16 %v2198
      %v3686 = vunpack.c.l.b16 %v2199
      %v3687 = vunpack.c.h.b16 %v2199
      %v3688 = vunpack.c.l.b16 %v2200
      %v3689 = vunpack.c.h.b16 %v2200
      %v3690 = vunpack.c.l.b16 %v2201
      %v3691 = vunpack.c.h.b16 %v2201
      %v3692 = vunpack.c.l.b16 %v2202
      %v3693 = vunpack.c.h.b16 %v2202
      %v3694 = vunpack.c.l.b16 %v2203
      %v3695 = vunpack.c.h.b16 %v2203
      %v3696 = vunpack.c.l.b16 %v2204
      %v3697 = vunpack.c.h.b16 %v2204
      %v3698 = vunpack.c.l.b16 %v2205
      %v3699 = vunpack.c.h.b16 %v2205
      %v3700 = vunpack.c.l.b16 %v2206
      %v3701 = vunpack.c.h.b16 %v2206
      %v3702 = vunpack.c.l.b16 %v2207
      %v3703 = vunpack.c.h.b16 %v2207
      %v3704 = vunpack.c.l.b16 %v2208
      %v3705 = vunpack.c.h.b16 %v2208
      %v3706 = vunpack.c.l.b16 %v2209
      %v3707 = vunpack.c.h.b16 %v2209
      %v3708 = vunpack.c.l.b16 %v2210
      %v3709 = vunpack.c.h.b16 %v2210
      %v3710 = vunpack.c.l.b16 %v2211
      %v3711 = vunpack.c.h.b16 %v2211
      %v3712 = vunpack.c.l.b16 %v2212
      %v3713 = vunpack.c.h.b16 %v2212
      %v3714 = vunpack.c.l.b16 %v2213
      %v3715 = vunpack.c.h.b16 %v2213
      %v3716 = vunpack.c.l.b16 %v2214
      %v3717 = vunpack.c.h.b16 %v2214
      %v3718 = vunpack.c.l.b16 %v2215
      %v3719 = vunpack.c.h.b16 %v2215
      %v3720 = vunpack.c.l.b16 %v2216
      %v3721 = vunpack.c.h.b16 %v2216
      %v3722 = vunpack.c.l.b16 %v2217
      %v3723 = vunpack.c.h.b16 %v2217
      %v3724 = vunpack.c.l.b16 %v2218
      %v3725 = vunpack.c.h.b16 %v2218
      %v3726 = vunpack.c.l.b16 %v2219
      %v3727 = vunpack.c.h.b16 %v2219
      %v3728 = vunpack.c.l.b16 %v2220
      %v3729 = vunpack.c.h.b16 %v2220
      %v3730 = vunpack.c.l.b16 %v2221
      %v3731 = vunpack.c.h.b16 %v2221
      %v3732 = vunpack.c.l.b16 %v2222
      %v3733 = vunpack.c.h.b16 %v2222
      %v3734 = vunpack.c.l.b16 %v2223
      %v3735 = vunpack.c.h.b16 %v2223
      %v3736 = vunpack.c.l.b16 %v2224
      %v3737 = vunpack.c.h.b16 %v2224
      %v3738 = vunpack.c.l.b16 %v2225
      %v3739 = vunpack.c.h.b16 %v2225
      %v3740 = vunpack.c.l.b16 %v2226
      %v3741 = vunpack.c.h.b16 %v2226
      %v3742 = vunpack.c.l.b16 %v2227
      %v3743 = vunpack.c.h.b16 %v2227
      %v3744 = vunpack.c.l.b16 %v2228
      %v3745 = vunpack.c.h.b16 %v2228
      %v3746 = vunpack.c.l.b16 %v2229
      %v3747 = vunpack.c.h.b16 %v2229
      %v3748 = vunpack.c.l.b16 %v2230
      %v3749 = vunpack.c.h.b16 %v2230
      %v3750 = vunpack.c.l.b16 %v2231
      %v3751 = vunpack.c.h.b16 %v2231
      %v3752 = vunpack.c.l.b16 %v2232
      %v3753 = vunpack.c.h.b16 %v2232
      %v3754 = vunpack.c.l.b16 %v2233
      %v3755 = vunpack.c.h.b16 %v2233
      %v3756 = vunpack.c.l.b16 %v2234
      %v3757 = vunpack.c.h.b16 %v2234
      %v3758 = vunpack.c.l.b16 %v2235
      %v3759 = vunpack.c.h.b16 %v2235
      %v3760 = vunpack.c.l.b16 %v2236
      %v3761 = vunpack.c.h.b16 %v2236
      %v3762 = vunpack.c.l.b16 %v2237
      %v3763 = vunpack.c.h.b16 %v2237
      %v3764 = vunpack.c.l.b16 %v2238
      %v3765 = vunpack.c.h.b16 %v2238
      %v3766 = vunpack.c.l.b16 %v2239
      %v3767 = vunpack.c.h.b16 %v2239
      %v3768 = vunpack.c.l.b16 %v2240
      %v3769 = vunpack.c.h.b16 %v2240
      %v3770 = vunpack.c.l.b16 %v2241
      %v3771 = vunpack.c.h.b16 %v2241
      %v3772 = vunpack.c.l.b16 %v2242
      %v3773 = vunpack.c.h.b16 %v2242
      %v3774 = vunpack.c.l.b16 %v2243
      %v3775 = vunpack.c.h.b16 %v2243
      %v3776 = vunpack.c.l.b16 %v2244
      %v3777 = vunpack.c.h.b16 %v2244
      %v3778 = vunpack.c.l.b16 %v2245
      %v3779 = vunpack.c.h.b16 %v2245
      %v3780 = vunpack.c.l.b16 %v2246
      %v3781 = vunpack.c.h.b16 %v2246
      %v3782 = vunpack.c.l.b16 %v2247
      %v3783 = vunpack.c.h.b16 %v2247
      %v3784 = vpack.c.b16 %v2792, %v2760
      %v3785 = vpack.c.b16 %v2793, %v2761
      %v3786 = vpack.c.b16 %v2794, %v2762
      %v3787 = vpack.c.b16 %v2795, %v2763
      %v3788 = vpack.c.b16 %v2796, %v2764
      %v3789 = vpack.c.b16 %v2797, %v2765
      %v3790 = vpack.c.b16 %v2798, %v2766
      %v3791 = vpack.c.b16 %v2799, %v2767
      %v3792 = vpack.c.b16 %v2800, %v2768
      %v3793 = vpack.c.b16 %v2801, %v2769
      %v3794 = vpack.c.b16 %v2802, %v2770
      %v3795 = vpack.c.b16 %v2803, %v2771
      %v3796 = vpack.c.b16 %v2804, %v2772
      %v3797 = vpack.c.b16 %v2805, %v2773
      %v3798 = vpack.c.b16 %v2806, %v2774
      %v3799 = vpack.c.b16 %v2807, %v2775
      %v3800 = vpack.c.b16 %v2808, %v2776
      %v3801 = vpack.c.b16 %v2809, %v2777
      %v3802 = vpack.c.b16 %v2810, %v2778
      %v3803 = vpack.c.b16 %v2811, %v2779
      %v3804 = vpack.c.b16 %v2812, %v2780
      %v3805 = vpack.c.b16 %v2813, %v2781
      %v3806 = vpack.c.b16 %v2814, %v2782
      %v3807 = vpack.c.b16 %v2815, %v2783
      %v3808 = vpack.c.b16 %v2816, %v2784
      %v3809 = vpack.c.b16 %v2817, %v2785
      %v3810 = vpack.c.b16 %v2818, %v2786
      %v3811 = vpack.c.b16 %v2819, %v2787
      %v3812 = vpack.c.b16 %v2820, %v2788
      %v3813 = vpack.c.b16 %v2821, %v2789
      %v3814 = vpack.c.b16 %v2822, %v2790
      %v3815 = vpack.c.b16 %v2823, %v2791
      %v3816 = vpack.c.b16 %v2856, %v2824
      %v3817 = vpack.c.b16 %v2857, %v2825
      %v3818 = vpack.c.b16 %v2858, %v2826
      %v3819 = vpack.c.b16 %v2859, %v2827
      %v3820 = vpack.c.b16 %v2860, %v2828
      %v3821 = vpack.c.b16 %v2861, %v2829
      %v3822 = vpack.c.b16 %v2862, %v2830
      %v3823 = vpack.c.b16 %v2863, %v2831
      %v3824 = vpack.c.b16 %v2864, %v2832
      %v3825 = vpack.c.b16 %v2865, %v2833
      %v3826 = vpack.c.b16 %v2866, %v2834
      %v3827 = vpack.c.b16 %v2867, %v2835
      %v3828 = vpack.c.b16 %v2868, %v2836
      %v3829 = vpack.c.b16 %v2869, %v2837
      %v3830 = vpack.c.b16 %v2870, %v2838
      %v3831 = vpack.c.b16 %v2871, %v2839
      %v3832 = vpack.c.b16 %v2872, %v2840
      %v3833 = vpack.c.b16 %v2873, %v2841
      %v3834 = vpack.c.b16 %v2874, %v2842
      %v3835 = vpack.c.b16 %v2875, %v2843
      %v3836 = vpack.c.b16 %v2876, %v2844
      %v3837 = vpack.c.b16 %v2877, %v2845
      %v3838 = vpack.c.b16 %v2878, %v2846
      %v3839 = vpack.c.b16 %v2879, %v2847
      %v3840 = vpack.c.b16 %v2880, %v2848
      %v3841 = vpack.c.b16 %v2881, %v2849
      %v3842 = vpack.c.b16 %v2882, %v2850
      %v3843 = vpack.c.b16 %v2883, %v2851
      %v3844 = vpack.c.b16 %v2884, %v2852
      %v3845 = vpack.c.b16 %v2885, %v2853
      %v3846 = vpack.c.b16 %v2886, %v2854
      %v3847 = vpack.c.b16 %v2887, %v2855
      %v3848 = vpack.c.b16 %v2920, %v2888
      %v3849 = vpack.c.b16 %v2921, %v2889
      %v3850 = vpack.c.b16 %v2922, %v2890
      %v3851 = vpack.c.b16 %v2923, %v2891
      %v3852 = vpack.c.b16 %v2924, %v2892
      %v3853 = vpack.c.b16 %v2925, %v2893
      %v3854 = vpack.c.b16 %v2926, %v2894
      %v3855 = vpack.c.b16 %v2927, %v2895
      %v3856 = vpack.c.b16 %v2928, %v2896
      %v3857 = vpack.c.b16 %v2929, %v2897
      %v3858 = vpack.c.b16 %v2930, %v2898
      %v3859 = vpack.c.b16 %v2931, %v2899
      %v3860 = vpack.c.b16 %v2932, %v2900
      %v3861 = vpack.c.b16 %v2933, %v2901
      %v3862 = vpack.c.b16 %v2934, %v2902
      %v3863 = vpack.c.b16 %v2935, %v2903
      %v3864 = vpack.c.b16 %v2936, %v2904
      %v3865 = vpack.c.b16 %v2937, %v2905
      %v3866 = vpack.c.b16 %v2938, %v2906
      %v3867 = vpack.c.b16 %v2939, %v2907
      %v3868 = vpack.c.b16 %v2940, %v2908
      %v3869 = vpack.c.b16 %v2941, %v2909
      %v3870 = vpack.c.b16 %v2942, %v2910
      %v3871 = vpack.c.b16 %v2943, %v2911
      %v3872 = vpack.c.b16 %v2944, %v2912
      %v3873 = vpack.c.b16 %v2945, %v2913
      %v3874 = vpack.c.b16 %v2946, %v2914
      %v3875 = vpack.c.b16 %v2947, %v2915
      %v3876 = vpack.c.b16 %v2948, %v2916
      %v3877 = vpack.c.b16 %v2949, %v2917
      %v3878 = vpack.c.b16 %v2950, %v2918
      %v3879 = vpack.c.b16 %v2951, %v2919
      %v3880 = vpack.c.b16 %v2984, %v2952
      %v3881 = vpack.c.b16 %v2985, %v2953
      %v3882 = vpack.c.b16 %v2986, %v2954
      %v3883 = vpack.c.b16 %v2987, %v2955
      %v3884 = vpack.c.b16 %v2988, %v2956
      %v3885 = vpack.c.b16 %v2989, %v2957
      %v3886 = vpack.c.b16 %v2990, %v2958
      %v3887 = vpack.c.b16 %v2991, %v2959
      %v3888 = vpack.c.b16 %v2992, %v2960
      %v3889 = vpack.c.b16 %v2993, %v2961
      %v3890 = vpack.c.b16 %v2994, %v2962
      %v3891 = vpack.c.b16 %v2995, %v2963
      %v3892 = vpack.c.b16 %v2996, %v2964
      %v3893 = vpack.c.b16 %v2997, %v2965
      %v3894 = vpack.c.b16 %v2998, %v2966
      %v3895 = vpack.c.b16 %v2999, %v2967
      %v3896 = vpack.c.b16 %v3000, %v2968
      %v3897 = vpack.c.b16 %v3001, %v2969
      %v3898 = vpack.c.b16 %v3002, %v2970
      %v3899 = vpack.c.b16 %v3003, %v2971
      %v3900 = vpack.c.b16 %v3004, %v2972
      %v3901 = vpack.c.b16 %v3005, %v2973
      %v3902 = vpack.c.b16 %v3006, %v2974
      %v3903 = vpack.c.b16 %v3007, %v2975
      %v3904 = vpack.c.b16 %v3008, %v2976
      %v3905 = vpack.c.b16 %v3009, %v2977
      %v3906 = vpack.c.b16 %v3010, %v2978
      %v3907 = vpack.c.b16 %v3011, %v2979
      %v3908 = vpack.c.b16 %v3012, %v2980
      %v3909 = vpack.c.b16 %v3013, %v2981
      %v3910 = vpack.c.b16 %v3014, %v2982
      %v3911 = vpack.c.b16 %v3015, %v2983
      %v3912 = vpack.c.b16 %v3048, %v3016
      %v3913 = vpack.c.b16 %v3049, %v3017
      %v3914 = vpack.c.b16 %v3050, %v3018
      %v3915 = vpack.c.b16 %v3051, %v3019
      %v3916 = vpack.c.b16 %v3052, %v3020
      %v3917 = vpack.c.b16 %v3053, %v3021
      %v3918 = vpack.c.b16 %v3054, %v3022
      %v3919 = vpack.c.b16 %v3055, %v3023
      %v3920 = vpack.c.b16 %v3056, %v3024
      %v3921 = vpack.c.b16 %v3057, %v3025
      %v3922 = vpack.c.b16 %v3058, %v3026
      %v3923 = vpack.c.b16 %v3059, %v3027
      %v3924 = vpack.c.b16 %v3060, %v3028
      %v3925 = vpack.c.b16 %v3061, %v3029
      %v3926 = vpack.c.b16 %v3062, %v3030
      %v3927 = vpack.c.b16 %v3063, %v3031
      %v3928 = vpack.c.b16 %v3064, %v3032
      %v3929 = vpack.c.b16 %v3065, %v3033
      %v3930 = vpack.c.b16 %v3066, %v3034
      %v3931 = vpack.c.b16 %v3067, %v3035
      %v3932 = vpack.c.b16 %v3068, %v3036
      %v3933 = vpack.c.b16 %v3069, %v3037
      %v3934 = vpack.c.b16 %v3070, %v3038
      %v3935 = vpack.c.b16 %v3071, %v3039
      %v3936 = vpack.c.b16 %v3072, %v3040
      %v3937 = vpack.c.b16 %v3073, %v3041
      %v3938 = vpack.c.b16 %v3074, %v3042
      %v3939 = vpack.c.b16 %v3075, %v3043
      %v3940 = vpack.c.b16 %v3076, %v3044
      %v3941 = vpack.c.b16 %v3077, %v3045
      %v3942 = vpack.c.b16 %v3078, %v3046
      %v3943 = vpack.c.b16 %v3079, %v3047
      %v3944 = vpack.c.b16 %v3112, %v3080
      %v3945 = vpack.c.b16 %v3113, %v3081
      %v3946 = vpack.c.b16 %v3114, %v3082
      %v3947 = vpack.c.b16 %v3115, %v3083
      %v3948 = vpack.c.b16 %v3116, %v3084
      %v3949 = vpack.c.b16 %v3117, %v3085
      %v3950 = vpack.c.b16 %v3118, %v3086
      %v3951 = vpack.c.b16 %v3119, %v3087
      %v3952 = vpack.c.b16 %v3120, %v3088
      %v3953 = vpack.c.b16 %v3121, %v3089
      %v3954 = vpack.c.b16 %v3122, %v3090
      %v3955 = vpack.c.b16 %v3123, %v3091
      %v3956 = vpack.c.b16 %v3124, %v3092
      %v3957 = vpack.c.b16 %v3125, %v3093
      %v3958 = vpack.c.b16 %v3126, %v3094
      %v3959 = vpack.c.b16 %v3127, %v3095
      %v3960 = vpack.c.b16 %v3128, %v3096
      %v3961 = vpack.c.b16 %v3129, %v3097
      %v3962 = vpack.c.b16 %v3130, %v3098
      %v3963 = vpack.c.b16 %v3131, %v3099
      %v3964 = vpack.c.b16 %v3132, %v3100
      %v3965 = vpack.c.b16 %v3133, %v3101
      %v3966 = vpack.c.b16 %v3134, %v3102
      %v3967 = vpack.c.b16 %v3135, %v3103
      %v3968 = vpack.c.b16 %v3136, %v3104
      %v3969 = vpack.c.b16 %v3137, %v3105
      %v3970 = vpack.c.b16 %v3138, %v3106
      %v3971 = vpack.c.b16 %v3139, %v3107
      %v3972 = vpack.c.b16 %v3140, %v3108
      %v3973 = vpack.c.b16 %v3141, %v3109
      %v3974 = vpack.c.b16 %v3142, %v3110
      %v3975 = vpack.c.b16 %v3143, %v3111
      %v3976 = vpack.c.b16 %v3176, %v3144
      %v3977 = vpack.c.b16 %v3177, %v3145
      %v3978 = vpack.c.b16 %v3178, %v3146
      %v3979 = vpack.c.b16 %v3179, %v3147
      %v3980 = vpack.c.b16 %v3180, %v3148
      %v3981 = vpack.c.b16 %v3181, %v3149
      %v3982 = vpack.c.b16 %v3182, %v3150
      %v3983 = vpack.c.b16 %v3183, %v3151
      %v3984 = vpack.c.b16 %v3184, %v3152
      %v3985 = vpack.c.b16 %v3185, %v3153
      %v3986 = vpack.c.b16 %v3186, %v3154
      %v3987 = vpack.c.b16 %v3187, %v3155
      %v3988 = vpack.c.b16 %v3188, %v3156
      %v3989 = vpack.c.b16 %v3189, %v3157
      %v3990 = vpack.c.b16 %v3190, %v3158
      %v3991 = vpack.c.b16 %v3191, %v3159
      %v3992 = vpack.c.b16 %v3192, %v3160
      %v3993 = vpack.c.b16 %v3193, %v3161
      %v3994 = vpack.c.b16 %v3194, %v3162
      %v3995 = vpack.c.b16 %v3195, %v3163
      %v3996 = vpack.c.b16 %v3196, %v3164
      %v3997 = vpack.c.b16 %v3197, %v3165
      %v3998 = vpack.c.b16 %v3198, %v3166
      %v3999 = vpack.c.b16 %v3199, %v3167
      %v4000 = vpack.c.b16 %v3200, %v3168
      %v4001 = vpack.c.b16 %v3201, %v3169
      %v4002 = vpack.c.b16 %v3202, %v3170
      %v4003 = vpack.c.b16 %v3203, %v3171
      %v4004 = vpack.c.b16 %v3204, %v3172
      %v4005 = vpack.c.b16 %v3205, %v3173
      %v4006 = vpack.c.b16 %v3206, %v3174
      %v4007 = vpack.c.b16 %v3207, %v3175
      %v4008 = vpack.c.b16 %v3240, %v3208
      %v4009 = vpack.c.b16 %v3241, %v3209
      %v4010 = vpack.c.b16 %v3242, %v3210
      %v4011 = vpack.c.b16 %v3243, %v3211
      %v4012 = vpack.c.b16 %v3244, %v3212
      %v4013 = vpack.c.b16 %v3245, %v3213
      %v4014 = vpack.c.b16 %v3246, %v3214
      %v4015 = vpack.c.b16 %v3247, %v3215
      %v4016 = vpack.c.b16 %v3248, %v3216
      %v4017 = vpack.c.b16 %v3249, %v3217
      %v4018 = vpack.c.b16 %v3250, %v3218
      %v4019 = vpack.c.b16 %v3251, %v3219
      %v4020 = vpack.c.b16 %v3252, %v3220
      %v4021 = vpack.c.b16 %v3253, %v3221
      %v4022 = vpack.c.b16 %v3254, %v3222
      %v4023 = vpack.c.b16 %v3255, %v3223
      %v4024 = vpack.c.b16 %v3256, %v3224
      %v4025 = vpack.c.b16 %v3257, %v3225
      %v4026 = vpack.c.b16 %v3258, %v3226
      %v4027 = vpack.c.b16 %v3259, %v3227
      %v4028 = vpack.c.b16 %v3260, %v3228
      %v4029 = vpack.c.b16 %v3261, %v3229
      %v4030 = vpack.c.b16 %v3262, %v3230
      %v4031 = vpack.c.b16 %v3263, %v3231
      %v4032 = vpack.c.b16 %v3264, %v3232
      %v4033 = vpack.c.b16 %v3265, %v3233
      %v4034 = vpack.c.b16 %v3266, %v3234
      %v4035 = vpack.c.b16 %v3267, %v3235
      %v4036 = vpack.c.b16 %v3268, %v3236
      %v4037 = vpack.c.b16 %v3269, %v3237
      %v4038 = vpack.c.b16 %v3270, %v3238
      %v4039 = vpack.c.b16 %v3271, %v3239
      %v4040 = vpack.c.b16 %v3304, %v3272
      %v4041 = vpack.c.b16 %v3305, %v3273
      %v4042 = vpack.c.b16 %v3306, %v3274
      %v4043 = vpack.c.b16 %v3307, %v3275
      %v4044 = vpack.c.b16 %v3308, %v3276
      %v4045 = vpack.c.b16 %v3309, %v3277
      %v4046 = vpack.c.b16 %v3310, %v3278
      %v4047 = vpack.c.b16 %v3311, %v3279
      %v4048 = vpack.c.b16 %v3312, %v3280
      %v4049 = vpack.c.b16 %v3313, %v3281
      %v4050 = vpack.c.b16 %v3314, %v3282
      %v4051 = vpack.c.b16 %v3315, %v3283
      %v4052 = vpack.c.b16 %v3316, %v3284
      %v4053 = vpack.c.b16 %v3317, %v3285
      %v4054 = vpack.c.b16 %v3318, %v3286
      %v4055 = vpack.c.b16 %v3319, %v3287
      %v4056 = vpack.c.b16 %v3320, %v3288
      %v4057 = vpack.c.b16 %v3321, %v3289
      %v4058 = vpack.c.b16 %v3322, %v3290
      %v4059 = vpack.c.b16 %v3323, %v3291
      %v4060 = vpack.c.b16 %v3324, %v3292
      %v4061 = vpack.c.b16 %v3325, %v3293
      %v4062 = vpack.c.b16 %v3326, %v3294
      %v4063 = vpack.c.b16 %v3327, %v3295
      %v4064 = vpack.c.b16 %v3328, %v3296
      %v4065 = vpack.c.b16 %v3329, %v3297
      %v4066 = vpack.c.b16 %v3330, %v3298
      %v4067 = vpack.c.b16 %v3331, %v3299
      %v4068 = vpack.c.b16 %v3332, %v3300
      %v4069 = vpack.c.b16 %v3333, %v3301
      %v4070 = vpack.c.b16 %v3334, %v3302
      %v4071 = vpack.c.b16 %v3335, %v3303
      %v4072 = vpack.c.b16 %v3368, %v3336
      %v4073 = vpack.c.b16 %v3369, %v3337
      %v4074 = vpack.c.b16 %v3370, %v3338
      %v4075 = vpack.c.b16 %v3371, %v3339
      %v4076 = vpack.c.b16 %v3372, %v3340
      %v4077 = vpack.c.b16 %v3373, %v3341
      %v4078 = vpack.c.b16 %v3374, %v3342
      %v4079 = vpack.c.b16 %v3375, %v3343
      %v4080 = vpack.c.b16 %v3376, %v3344
      %v4081 = vpack.c.b16 %v3377, %v3345
      %v4082 = vpack.c.b16 %v3378, %v3346
      %v4083 = vpack.c.b16 %v3379, %v3347
      %v4084 = vpack.c.b16 %v3380, %v3348
      %v4085 = vpack.c.b16 %v3381, %v3349
      %v4086 = vpack.c.b16 %v3382, %v3350
      %v4087 = vpack.c.b16 %v3383, %v3351
      %v4088 = vpack.c.b16 %v3384, %v3352
      %v4089 = vpack.c.b16 %v3385, %v3353
      %v4090 = vpack.c.b16 %v3386, %v3354
      %v4091 = vpack.c.b16 %v3387, %v3355
      %v4092 = vpack.c.b16 %v3388, %v3356
      %v4093 = vpack.c.b16 %v3389, %v3357
      %v4094 = vpack.c.b16 %v3390, %v3358
      %v4095 = vpack.c.b16 %v3391, %v3359
      %v4096 = vpack.c.b16 %v3392, %v3360
      %v4097 = vpack.c.b16 %v3393, %v3361
      %v4098 = vpack.c.b16 %v3394, %v3362
      %v4099 = vpack.c.b16 %v3395, %v3363
      %v4100 = vpack.c.b16 %v3396, %v3364
      %v4101 = vpack.c.b16 %v3397, %v3365
      %v4102 = vpack.c.b16 %v3398, %v3366
      %v4103 = vpack.c.b16 %v3399, %v3367
      %v4104 = vpack.c.b16 %v3432, %v3400
      %v4105 = vpack.c.b16 %v3433, %v3401
      %v4106 = vpack.c.b16 %v3434, %v3402
      %v4107 = vpack.c.b16 %v3435, %v3403
      %v4108 = vpack.c.b16 %v3436, %v3404
      %v4109 = vpack.c.b16 %v3437, %v3405
      %v4110 = vpack.c.b16 %v3438, %v3406
      %v4111 = vpack.c.b16 %v3439, %v3407
      %v4112 = vpack.c.b16 %v3440, %v3408
      %v4113 = vpack.c.b16 %v3441, %v3409
      %v4114 = vpack.c.b16 %v3442, %v3410
      %v4115 = vpack.c.b16 %v3443, %v3411
      %v4116 = vpack.c.b16 %v3444, %v3412
      %v4117 = vpack.c.b16 %v3445, %v3413
      %v4118 = vpack.c.b16 %v3446, %v3414
      %v4119 = vpack.c.b16 %v3447, %v3415
      %v4120 = vpack.c.b16 %v3448, %v3416
      %v4121 = vpack.c.b16 %v3449, %v3417
      %v4122 = vpack.c.b16 %v3450, %v3418
      %v4123 = vpack.c.b16 %v3451, %v3419
      %v4124 = vpack.c.b16 %v3452, %v3420
      %v4125 = vpack.c.b16 %v3453, %v3421
      %v4126 = vpack.c.b16 %v3454, %v3422
      %v4127 = vpack.c.b16 %v3455, %v3423
      %v4128 = vpack.c.b16 %v3456, %v3424
      %v4129 = vpack.c.b16 %v3457, %v3425
      %v4130 = vpack.c.b16 %v3458, %v3426
      %v4131 = vpack.c.b16 %v3459, %v3427
      %v4132 = vpack.c.b16 %v3460, %v3428
      %v4133 = vpack.c.b16 %v3461, %v3429
      %v4134 = vpack.c.b16 %v3462, %v3430
      %v4135 = vpack.c.b16 %v3463, %v3431
      %v4136 = vpack.c.b16 %v3496, %v3464
      %v4137 = vpack.c.b16 %v3497, %v3465
      %v4138 = vpack.c.b16 %v3498, %v3466
      %v4139 = vpack.c.b16 %v3499, %v3467
      %v4140 = vpack.c.b16 %v3500, %v3468
      %v4141 = vpack.c.b16 %v3501, %v3469
      %v4142 = vpack.c.b16 %v3502, %v3470
      %v4143 = vpack.c.b16 %v3503, %v3471
      %v4144 = vpack.c.b16 %v3504, %v3472
      %v4145 = vpack.c.b16 %v3505, %v3473
      %v4146 = vpack.c.b16 %v3506, %v3474
      %v4147 = vpack.c.b16 %v3507, %v3475
      %v4148 = vpack.c.b16 %v3508, %v3476
      %v4149 = vpack.c.b16 %v3509, %v3477
      %v4150 = vpack.c.b16 %v3510, %v3478
      %v4151 = vpack.c.b16 %v3511, %v3479
      %v4152 = vpack.c.b16 %v3512, %v3480
      %v4153 = vpack.c.b16 %v3513, %v3481
      %v4154 = vpack.c.b16 %v3514, %v3482
      %v4155 = vpack.c.b16 %v3515, %v3483
      %v4156 = vpack.c.b16 %v3516, %v3484
      %v4157 = vpack.c.b16 %v3517, %v3485
      %v4158 = vpack.c.b16 %v3518, %v3486
      %v4159 = vpack.c.b16 %v3519, %v3487
      %v4160 = vpack.c.b16 %v3520, %v3488
      %v4161 = vpack.c.b16 %v3521, %v3489
      %v4162 = vpack.c.b16 %v3522, %v3490
      %v4163 = vpack.c.b16 %v3523, %v3491
      %v4164 = vpack.c.b16 %v3524, %v3492
      %v4165 = vpack.c.b16 %v3525, %v3493
      %v4166 = vpack.c.b16 %v3526, %v3494
      %v4167 = vpack.c.b16 %v3527, %v3495
      %v4168 = vpack.c.b16 %v3560, %v3528
      %v4169 = vpack.c.b16 %v3561, %v3529
      %v4170 = vpack.c.b16 %v3562, %v3530
      %v4171 = vpack.c.b16 %v3563, %v3531
      %v4172 = vpack.c.b16 %v3564, %v3532
      %v4173 = vpack.c.b16 %v3565, %v3533
      %v4174 = vpack.c.b16 %v3566, %v3534
      %v4175 = vpack.c.b16 %v3567, %v3535
      %v4176 = vpack.c.b16 %v3568, %v3536
      %v4177 = vpack.c.b16 %v3569, %v3537
      %v4178 = vpack.c.b16 %v3570, %v3538
      %v4179 = vpack.c.b16 %v3571, %v3539
      %v4180 = vpack.c.b16 %v3572, %v3540
      %v4181 = vpack.c.b16 %v3573, %v3541
      %v4182 = vpack.c.b16 %v3574, %v3542
      %v4183 = vpack.c.b16 %v3575, %v3543
      %v4184 = vpack.c.b16 %v3576, %v3544
      %v4185 = vpack.c.b16 %v3577, %v3545
      %v4186 = vpack.c.b16 %v3578, %v3546
      %v4187 = vpack.c.b16 %v3579, %v3547
      %v4188 = vpack.c.b16 %v3580, %v3548
      %v4189 = vpack.c.b16 %v3581, %v3549
      %v4190 = vpack.c.b16 %v3582, %v3550
      %v4191 = vpack.c.b16 %v3583, %v3551
      %v4192 = vpack.c.b16 %v3584, %v3552
      %v4193 = vpack.c.b16 %v3585, %v3553
      %v4194 = vpack.c.b16 %v3586, %v3554
      %v4195 = vpack.c.b16 %v3587, %v3555
      %v4196 = vpack.c.b16 %v3588, %v3556
      %v4197 = vpack.c.b16 %v3589, %v3557
      %v4198 = vpack.c.b16 %v3590, %v3558
      %v4199 = vpack.c.b16 %v3591, %v3559
      %v4200 = vpack.c.b16 %v3624, %v3592
      %v4201 = vpack.c.b16 %v3625, %v3593
      %v4202 = vpack.c.b16 %v3626, %v3594
      %v4203 = vpack.c.b16 %v3627, %v3595
      %v4204 = vpack.c.b16 %v3628, %v3596
      %v4205 = vpack.c.b16 %v3629, %v3597
      %v4206 = vpack.c.b16 %v3630, %v3598
      %v4207 = vpack.c.b16 %v3631, %v3599
      %v4208 = vpack.c.b16 %v3632, %v3600
      %v4209 = vpack.c.b16 %v3633, %v3601
      %v4210 = vpack.c.b16 %v3634, %v3602
      %v4211 = vpack.c.b16 %v3635, %v3603
      %v4212 = vpack.c.b16 %v3636, %v3604
      %v4213 = vpack.c.b16 %v3637, %v3605
      %v4214 = vpack.c.b16 %v3638, %v3606
      %v4215 = vpack.c.b16 %v3639, %v3607
      %v4216 = vpack.c.b16 %v3640, %v3608
      %v4217 = vpack.c.b16 %v3641, %v3609
      %v4218 = vpack.c.b16 %v3642, %v3610
      %v4219 = vpack.c.b16 %v3643, %v3611
      %v4220 = vpack.c.b16 %v3644, %v3612
      %v4221 = vpack.c.b16 %v3645, %v3613
      %v4222 = vpack.c.b16 %v3646, %v3614
      %v4223 = vpack.c.b16 %v3647, %v3615
      %v4224 = vpack.c.b16 %v3648, %v3616
      %v4225 = vpack.c.b16 %v3649, %v3617
      %v4226 = vpack.c.b16 %v3650, %v3618
      %v4227 = vpack.c.b16 %v3651, %v3619
      %v4228 = vpack.c.b16 %v3652, %v3620
      %v4229 = vpack.c.b16 %v3653, %v3621
      %v4230 = vpack.c.b16 %v3654, %v3622
      %v4231 = vpack.c.b16 %v3655, %v3623
      %v4232 = vpack.c.b16 %v3688, %v3656
      %v4233 = vpack.c.b16 %v3689, %v3657
      %v4234 = vpack.c.b16 %v3690, %v3658
      %v4235 = vpack.c.b16 %v3691, %v3659
      %v4236 = vpack.c.b16 %v3692, %v3660
      %v4237 = vpack.c.b16 %v3693, %v3661
      %v4238 = vpack.c.b16 %v3694, %v3662
      %v4239 = vpack.c.b16 %v3695, %v3663
      %v4240 = vpack.c.b16 %v3696, %v3664
      %v4241 = vpack.c.b16 %v3697, %v3665
      %v4242 = vpack.c.b16 %v3698, %v3666
      %v4243 = vpack.c.b16 %v3699, %v3667
      %v4244 = vpack.c.b16 %v3700, %v3668
      %v4245 = vpack.c.b16 %v3701, %v3669
      %v4246 = vpack.c.b16 %v3702, %v3670
      %v4247 = vpack.c.b16 %v3703, %v3671
      %v4248 = vpack.c.b16 %v3704, %v3672
      %v4249 = vpack.c.b16 %v3705, %v3673
      %v4250 = vpack.c.b16 %v3706, %v3674
      %v4251 = vpack.c.b16 %v3707, %v3675
      %v4252 = vpack.c.b16 %v3708, %v3676
      %v4253 = vpack.c.b16 %v3709, %v3677
      %v4254 = vpack.c.b16 %v3710, %v3678
      %v4255 = vpack.c.b16 %v3711, %v3679
      %v4256 = vpack.c.b16 %v3712, %v3680
      %v4257 = vpack.c.b16 %v3713, %v3681
      %v4258 = vpack.c.b16 %v3714, %v3682
      %v4259 = vpack.c.b16 %v3715, %v3683
      %v4260 = vpack.c.b16 %v3716, %v3684
      %v4261 = vpack.c.b16 %v3717, %v3685
      %v4262 = vpack.c.b16 %v3718, %v3686
      %v4263 = vpack.c.b16 %v3719, %v3687
      %v4264 = vpack.c.b16 %v3752, %v3720
      %v4265 = vpack.c.b16 %v3753, %v3721
      %v4266 = vpack.c.b16 %v3754, %v3722
      %v4267 = vpack.c.b16 %v3755, %v3723
      %v4268 = vpack.c.b16 %v3756, %v3724
      %v4269 = vpack.c.b16 %v3757, %v3725
      %v4270 = vpack.c.b16 %v3758, %v3726
      %v4271 = vpack.c.b16 %v3759, %v3727
      %v4272 = vpack.c.b16 %v3760, %v3728
      %v4273 = vpack.c.b16 %v3761, %v3729
      %v4274 = vpack.c.b16 %v3762, %v3730
      %v4275 = vpack.c.b16 %v3763, %v3731
      %v4276 = vpack.c.b16 %v3764, %v3732
      %v4277 = vpack.c.b16 %v3765, %v3733
      %v4278 = vpack.c.b16 %v3766, %v3734
      %v4279 = vpack.c.b16 %v3767, %v3735
      %v4280 = vpack.c.b16 %v3768, %v3736
      %v4281 = vpack.c.b16 %v3769, %v3737
      %v4282 = vpack.c.b16 %v3770, %v3738
      %v4283 = vpack.c.b16 %v3771, %v3739
      %v4284 = vpack.c.b16 %v3772, %v3740
      %v4285 = vpack.c.b16 %v3773, %v3741
      %v4286 = vpack.c.b16 %v3774, %v3742
      %v4287 = vpack.c.b16 %v3775, %v3743
      %v4288 = vpack.c.b16 %v3776, %v3744
      %v4289 = vpack.c.b16 %v3777, %v3745
      %v4290 = vpack.c.b16 %v3778, %v3746
      %v4291 = vpack.c.b16 %v3779, %v3747
      %v4292 = vpack.c.b16 %v3780, %v3748
      %v4293 = vpack.c.b16 %v3781, %v3749
      %v4294 = vpack.c.b16 %v3782, %v3750
      %v4295 = vpack.c.b16 %v3783, %v3751
      %4808 = vmatprep.subr.bf16.mxu0 %v3785
      %4809 = vmatpush1.bf16.msra.mxu0 %v3784
      %4810 = vmatprep.subr.bf16.mxu0 %v3817
      %4811 = vmatpush1.bf16.msra.mxu0 %v3816
      %4812 = vmatprep.subr.bf16.mxu0 %v3849
      %4813 = vmatpush1.bf16.msra.mxu0 %v3848
      %4814 = vmatprep.subr.bf16.mxu0 %v3881
      %4815 = vmatpush1.bf16.msra.mxu0 %v3880
      %4816 = vmatprep.subr.bf16.mxu0 %v3913
      %4817 = vmatpush1.bf16.msra.mxu0 %v3912
      %4818 = vmatprep.subr.bf16.mxu0 %v3945
      %4819 = vmatpush1.bf16.msra.mxu0 %v3944
      %4820 = vmatprep.subr.bf16.mxu0 %v3977
      %4821 = vmatpush1.bf16.msra.mxu0 %v3976
      %4822 = vmatprep.subr.bf16.mxu0 %v4009
      %4823 = vmatpush1.bf16.msra.mxu0 %v4008
      %4824 = vmatprep.subr.bf16.mxu0 %v4041
      %4825 = vmatpush1.bf16.msra.mxu0 %v4040
      %4826 = vmatprep.subr.bf16.mxu0 %v4073
      %4827 = vmatpush1.bf16.msra.mxu0 %v4072
      %4828 = vmatprep.subr.bf16.mxu0 %v4105
      %4829 = vmatpush1.bf16.msra.mxu0 %v4104
      %4830 = vmatprep.subr.bf16.mxu0 %v4137
      %4831 = vmatpush1.bf16.msra.mxu0 %v4136
      %4832 = vmatprep.subr.bf16.mxu0 %v4169
      %4833 = vmatpush1.bf16.msra.mxu0 %v4168
      %4834 = vmatprep.subr.bf16.mxu0 %v4201
      %4835 = vmatpush1.bf16.msra.mxu0 %v4200
      %4836 = vmatprep.subr.bf16.mxu0 %v4233
      %4837 = vmatpush1.bf16.msra.mxu0 %v4232
      %4838 = vmatprep.subr.bf16.mxu0 %v4265
      %4839 = vmatpush1.bf16.msra.mxu0 %v4264
      %4840 = vmatprep.mubr.bf16.mxu0 %v1735
      %4841 = vmatmul.mubr.bf16.gmra.mrb[0].mxu0 %v1734
      %v4842 = vpop.f32.mrb[0].mxu0
      %v4843 = vadd.f32 0.0, %v4842
      %v4844 = vpop.f32.mrb[0].mxu0
      %v4845 = vadd.f32 0.0, %v4844
      %v4846 = vpop.f32.mrb[0].mxu0
      %v4847 = vpop.f32.mrb[0].mxu0
      %4848 = vdwg.mxu0
      %4849 = vmatprep.subr.bf16.mxu0 %v3787
      %4850 = vmatpush1.bf16.msra.mxu0 %v3786
      %4851 = vmatprep.subr.bf16.mxu0 %v3819
      %4852 = vmatpush1.bf16.msra.mxu0 %v3818
      %4853 = vmatprep.subr.bf16.mxu0 %v3851
      %4854 = vmatpush1.bf16.msra.mxu0 %v3850
      %4855 = vmatprep.subr.bf16.mxu0 %v3883
      %4856 = vmatpush1.bf16.msra.mxu0 %v3882
      %4857 = vmatprep.subr.bf16.mxu0 %v3915
      %4858 = vmatpush1.bf16.msra.mxu0 %v3914
      %4859 = vmatprep.subr.bf16.mxu0 %v3947
      %4860 = vmatpush1.bf16.msra.mxu0 %v3946
      %4861 = vmatprep.subr.bf16.mxu0 %v3979
      %4862 = vmatpush1.bf16.msra.mxu0 %v3978
      %4863 = vmatprep.subr.bf16.mxu0 %v4011
      %4864 = vmatpush1.bf16.msra.mxu0 %v4010
      %4865 = vmatprep.subr.bf16.mxu0 %v4043
      %4866 = vmatpush1.bf16.msra.mxu0 %v4042
      %4867 = vmatprep.subr.bf16.mxu0 %v4075
      %4868 = vmatpush1.bf16.msra.mxu0 %v4074
      %4869 = vmatprep.subr.bf16.mxu0 %v4107
      %4870 = vmatpush1.bf16.msra.mxu0 %v4106
      %4871 = vmatprep.subr.bf16.mxu0 %v4139
      %4872 = vmatpush1.bf16.msra.mxu0 %v4138
      %4873 = vmatprep.subr.bf16.mxu0 %v4171
      %4874 = vmatpush1.bf16.msra.mxu0 %v4170
      %4875 = vmatprep.subr.bf16.mxu0 %v4203
      %4876 = vmatpush1.bf16.msra.mxu0 %v4202
      %4877 = vmatprep.subr.bf16.mxu0 %v4235
      %4878 = vmatpush1.bf16.msra.mxu0 %v4234
      %4879 = vmatprep.subr.bf16.mxu0 %v4267
      %4880 = vmatpush1.bf16.msra.mxu0 %v4266
      %4881 = vmatprep.mubr.bf16.mxu0 %v1735
      %4882 = vmatmul.mubr.bf16.gmra.mrb[0].mxu0 %v1734
      %v4883 = vpop.f32.mrb[0].mxu0
      %v4884 = vadd.f32 0.0, %v4883
      %v4885 = vpop.f32.mrb[0].mxu0
      %v4886 = vadd.f32 0.0, %v4885
      %v4887 = vpop.f32.mrb[0].mxu0
      %v4888 = vpop.f32.mrb[0].mxu0
      %4889 = vdwg.mxu0
      %4890 = vmatprep.subr.bf16.mxu0 %v3789
      %4891 = vmatpush1.bf16.msra.mxu0 %v3788
      %4892 = vmatprep.subr.bf16.mxu0 %v3821
      %4893 = vmatpush1.bf16.msra.mxu0 %v3820
      %4894 = vmatprep.subr.bf16.mxu0 %v3853
      %4895 = vmatpush1.bf16.msra.mxu0 %v3852
      %4896 = vmatprep.subr.bf16.mxu0 %v3885
      %4897 = vmatpush1.bf16.msra.mxu0 %v3884
      %4898 = vmatprep.subr.bf16.mxu0 %v3917
      %4899 = vmatpush1.bf16.msra.mxu0 %v3916
      %4900 = vmatprep.subr.bf16.mxu0 %v3949
      %4901 = vmatpush1.bf16.msra.mxu0 %v3948
      %4902 = vmatprep.subr.bf16.mxu0 %v3981
      %4903 = vmatpush1.bf16.msra.mxu0 %v3980
      %4904 = vmatprep.subr.bf16.mxu0 %v4013
      %4905 = vmatpush1.bf16.msra.mxu0 %v4012
      %4906 = vmatprep.subr.bf16.mxu0 %v4045
      %4907 = vmatpush1.bf16.msra.mxu0 %v4044
      %4908 = vmatprep.subr.bf16.mxu0 %v4077
      %4909 = vmatpush1.bf16.msra.mxu0 %v4076
      %4910 = vmatprep.subr.bf16.mxu0 %v4109
      %4911 = vmatpush1.bf16.msra.mxu0 %v4108
      %4912 = vmatprep.subr.bf16.mxu0 %v4141
      %4913 = vmatpush1.bf16.msra.mxu0 %v4140
      %4914 = vmatprep.subr.bf16.mxu0 %v4173
      %4915 = vmatpush1.bf16.msra.mxu0 %v4172
      %4916 = vmatprep.subr.bf16.mxu0 %v4205
      %4917 = vmatpush1.bf16.msra.mxu0 %v4204
      %4918 = vmatprep.subr.bf16.mxu0 %v4237
      %4919 = vmatpush1.bf16.msra.mxu0 %v4236
      %4920 = vmatprep.subr.bf16.mxu0 %v4269
      %4921 = vmatpush1.bf16.msra.mxu0 %v4268
      %4922 = vmatprep.mubr.bf16.mxu0 %v1735
      %4923 = vmatmul.mubr.bf16.gmra.mrb[0].mxu0 %v1734
      %v4924 = vpop.f32.mrb[0].mxu0
      %v4925 = vadd.f32 0.0, %v4924
      %v4926 = vpop.f32.mrb[0].mxu0
      %v4927 = vadd.f32 0.0, %v4926
      %v4928 = vpop.f32.mrb[0].mxu0
      %v4929 = vpop.f32.mrb[0].mxu0
      %4930 = vdwg.mxu0
      %4931 = vmatprep.subr.bf16.mxu0 %v3791
      %4932 = vmatpush1.bf16.msra.mxu0 %v3790
      %4933 = vmatprep.subr.bf16.mxu0 %v3823
      %4934 = vmatpush1.bf16.msra.mxu0 %v3822
      %4935 = vmatprep.subr.bf16.mxu0 %v3855
      %4936 = vmatpush1.bf16.msra.mxu0 %v3854
      %4937 = vmatprep.subr.bf16.mxu0 %v3887
      %4938 = vmatpush1.bf16.msra.mxu0 %v3886
      %4939 = vmatprep.subr.bf16.mxu0 %v3919
      %4940 = vmatpush1.bf16.msra.mxu0 %v3918
      %4941 = vmatprep.subr.bf16.mxu0 %v3951
      %4942 = vmatpush1.bf16.msra.mxu0 %v3950
      %4943 = vmatprep.subr.bf16.mxu0 %v3983
      %4944 = vmatpush1.bf16.msra.mxu0 %v3982
      %4945 = vmatprep.subr.bf16.mxu0 %v4015
      %4946 = vmatpush1.bf16.msra.mxu0 %v4014
      %4947 = vmatprep.subr.bf16.mxu0 %v4047
      %4948 = vmatpush1.bf16.msra.mxu0 %v4046
      %4949 = vmatprep.subr.bf16.mxu0 %v4079
      %4950 = vmatpush1.bf16.msra.mxu0 %v4078
      %4951 = vmatprep.subr.bf16.mxu0 %v4111
      %4952 = vmatpush1.bf16.msra.mxu0 %v4110
      %4953 = vmatprep.subr.bf16.mxu0 %v4143
      %4954 = vmatpush1.bf16.msra.mxu0 %v4142
      %4955 = vmatprep.subr.bf16.mxu0 %v4175
      %4956 = vmatpush1.bf16.msra.mxu0 %v4174
      %4957 = vmatprep.subr.bf16.mxu0 %v4207
      %4958 = vmatpush1.bf16.msra.mxu0 %v4206
      %4959 = vmatprep.subr.bf16.mxu0 %v4239
      %4960 = vmatpush1.bf16.msra.mxu0 %v4238
      %4961 = vmatprep.subr.bf16.mxu0 %v4271
      %4962 = vmatpush1.bf16.msra.mxu0 %v4270
      %4963 = vmatprep.mubr.bf16.mxu0 %v1735
      %4964 = vmatmul.mubr.bf16.gmra.mrb[0].mxu0 %v1734
      %v4965 = vpop.f32.mrb[0].mxu0
      %v4966 = vadd.f32 0.0, %v4965
      %v4967 = vpop.f32.mrb[0].mxu0
      %v4968 = vadd.f32 0.0, %v4967
      %v4969 = vpop.f32.mrb[0].mxu0
      %v4970 = vpop.f32.mrb[0].mxu0
      %4971 = vdwg.mxu0
      %4972 = vmatprep.subr.bf16.mxu0 %v3793
      %4973 = vmatpush1.bf16.msra.mxu0 %v3792
      %4974 = vmatprep.subr.bf16.mxu0 %v3825
      %4975 = vmatpush1.bf16.msra.mxu0 %v3824
      %4976 = vmatprep.subr.bf16.mxu0 %v3857
      %4977 = vmatpush1.bf16.msra.mxu0 %v3856
      %4978 = vmatprep.subr.bf16.mxu0 %v3889
      %4979 = vmatpush1.bf16.msra.mxu0 %v3888
      %4980 = vmatprep.subr.bf16.mxu0 %v3921
      %4981 = vmatpush1.bf16.msra.mxu0 %v3920
      %4982 = vmatprep.subr.bf16.mxu0 %v3953
      %4983 = vmatpush1.bf16.msra.mxu0 %v3952
      %4984 = vmatprep.subr.bf16.mxu0 %v3985
      %4985 = vmatpush1.bf16.msra.mxu0 %v3984
      %4986 = vmatprep.subr.bf16.mxu0 %v4017
      %4987 = vmatpush1.bf16.msra.mxu0 %v4016
      %4988 = vmatprep.subr.bf16.mxu0 %v4049
      %4989 = vmatpush1.bf16.msra.mxu0 %v4048
      %4990 = vmatprep.subr.bf16.mxu0 %v4081
      %4991 = vmatpush1.bf16.msra.mxu0 %v4080
      %4992 = vmatprep.subr.bf16.mxu0 %v4113
      %4993 = vmatpush1.bf16.msra.mxu0 %v4112
      %4994 = vmatprep.subr.bf16.mxu0 %v4145
      %4995 = vmatpush1.bf16.msra.mxu0 %v4144
      %4996 = vmatprep.subr.bf16.mxu0 %v4177
      %4997 = vmatpush1.bf16.msra.mxu0 %v4176
      %4998 = vmatprep.subr.bf16.mxu0 %v4209
      %4999 = vmatpush1.bf16.msra.mxu0 %v4208
      %5000 = vmatprep.subr.bf16.mxu0 %v4241
      %5001 = vmatpush1.bf16.msra.mxu0 %v4240
      %5002 = vmatprep.subr.bf16.mxu0 %v4273
      %5003 = vmatpush1.bf16.msra.mxu0 %v4272
      %5004 = vmatprep.mubr.bf16.mxu0 %v1735
      %5005 = vmatmul.mubr.bf16.gmra.mrb[0].mxu0 %v1734
      %v5006 = vpop.f32.mrb[0].mxu0
      %v5007 = vadd.f32 0.0, %v5006
      %v5008 = vpop.f32.mrb[0].mxu0
      %v5009 = vadd.f32 0.0, %v5008
      %v5010 = vpop.f32.mrb[0].mxu0
      %v5011 = vpop.f32.mrb[0].mxu0
      %5012 = vdwg.mxu0
      %5013 = vmatprep.subr.bf16.mxu0 %v3795
      %5014 = vmatpush1.bf16.msra.mxu0 %v3794
      %5015 = vmatprep.subr.bf16.mxu0 %v3827
      %5016 = vmatpush1.bf16.msra.mxu0 %v3826
      %5017 = vmatprep.subr.bf16.mxu0 %v3859
      %5018 = vmatpush1.bf16.msra.mxu0 %v3858
      %5019 = vmatprep.subr.bf16.mxu0 %v3891
      %5020 = vmatpush1.bf16.msra.mxu0 %v3890
      %5021 = vmatprep.subr.bf16.mxu0 %v3923
      %5022 = vmatpush1.bf16.msra.mxu0 %v3922
      %5023 = vmatprep.subr.bf16.mxu0 %v3955
      %5024 = vmatpush1.bf16.msra.mxu0 %v3954
      %5025 = vmatprep.subr.bf16.mxu0 %v3987
      %5026 = vmatpush1.bf16.msra.mxu0 %v3986
      %5027 = vmatprep.subr.bf16.mxu0 %v4019
      %5028 = vmatpush1.bf16.msra.mxu0 %v4018
      %5029 = vmatprep.subr.bf16.mxu0 %v4051
      %5030 = vmatpush1.bf16.msra.mxu0 %v4050
      %5031 = vmatprep.subr.bf16.mxu0 %v4083
      %5032 = vmatpush1.bf16.msra.mxu0 %v4082
      %5033 = vmatprep.subr.bf16.mxu0 %v4115
      %5034 = vmatpush1.bf16.msra.mxu0 %v4114
      %5035 = vmatprep.subr.bf16.mxu0 %v4147
      %5036 = vmatpush1.bf16.msra.mxu0 %v4146
      %5037 = vmatprep.subr.bf16.mxu0 %v4179
      %5038 = vmatpush1.bf16.msra.mxu0 %v4178
      %5039 = vmatprep.subr.bf16.mxu0 %v4211
      %5040 = vmatpush1.bf16.msra.mxu0 %v4210
      %5041 = vmatprep.subr.bf16.mxu0 %v4243
      %5042 = vmatpush1.bf16.msra.mxu0 %v4242
      %5043 = vmatprep.subr.bf16.mxu0 %v4275
      %5044 = vmatpush1.bf16.msra.mxu0 %v4274
      %5045 = vmatprep.mubr.bf16.mxu0 %v1735
      %5046 = vmatmul.mubr.bf16.gmra.mrb[0].mxu0 %v1734
      %v5047 = vpop.f32.mrb[0].mxu0
      %v5048 = vadd.f32 0.0, %v5047
      %v5049 = vpop.f32.mrb[0].mxu0
      %v5050 = vadd.f32 0.0, %v5049
      %v5051 = vpop.f32.mrb[0].mxu0
      %v5052 = vpop.f32.mrb[0].mxu0
      %5053 = vdwg.mxu0
      %5054 = vmatprep.subr.bf16.mxu0 %v3797
      %5055 = vmatpush1.bf16.msra.mxu0 %v3796
      %5056 = vmatprep.subr.bf16.mxu0 %v3829
      %5057 = vmatpush1.bf16.msra.mxu0 %v3828
      %5058 = vmatprep.subr.bf16.mxu0 %v3861
      %5059 = vmatpush1.bf16.msra.mxu0 %v3860
      %5060 = vmatprep.subr.bf16.mxu0 %v3893
      %5061 = vmatpush1.bf16.msra.mxu0 %v3892
      %5062 = vmatprep.subr.bf16.mxu0 %v3925
      %5063 = vmatpush1.bf16.msra.mxu0 %v3924
      %5064 = vmatprep.subr.bf16.mxu0 %v3957
      %5065 = vmatpush1.bf16.msra.mxu0 %v3956
      %5066 = vmatprep.subr.bf16.mxu0 %v3989
      %5067 = vmatpush1.bf16.msra.mxu0 %v3988
      %5068 = vmatprep.subr.bf16.mxu0 %v4021
      %5069 = vmatpush1.bf16.msra.mxu0 %v4020
      %5070 = vmatprep.subr.bf16.mxu0 %v4053
      %5071 = vmatpush1.bf16.msra.mxu0 %v4052
      %5072 = vmatprep.subr.bf16.mxu0 %v4085
      %5073 = vmatpush1.bf16.msra.mxu0 %v4084
      %5074 = vmatprep.subr.bf16.mxu0 %v4117
      %5075 = vmatpush1.bf16.msra.mxu0 %v4116
      %5076 = vmatprep.subr.bf16.mxu0 %v4149
      %5077 = vmatpush1.bf16.msra.mxu0 %v4148
      %5078 = vmatprep.subr.bf16.mxu0 %v4181
      %5079 = vmatpush1.bf16.msra.mxu0 %v4180
      %5080 = vmatprep.subr.bf16.mxu0 %v4213
      %5081 = vmatpush1.bf16.msra.mxu0 %v4212
      %5082 = vmatprep.subr.bf16.mxu0 %v4245
      %5083 = vmatpush1.bf16.msra.mxu0 %v4244
      %5084 = vmatprep.subr.bf16.mxu0 %v4277
      %5085 = vmatpush1.bf16.msra.mxu0 %v4276
      %5086 = vmatprep.mubr.bf16.mxu0 %v1735
      %5087 = vmatmul.mubr.bf16.gmra.mrb[0].mxu0 %v1734
      %v5088 = vpop.f32.mrb[0].mxu0
      %v5089 = vadd.f32 0.0, %v5088
      %v5090 = vpop.f32.mrb[0].mxu0
      %v5091 = vadd.f32 0.0, %v5090
      %v5092 = vpop.f32.mrb[0].mxu0
      %v5093 = vpop.f32.mrb[0].mxu0
      %5094 = vdwg.mxu0
      %5095 = vmatprep.subr.bf16.mxu0 %v3799
      %5096 = vmatpush1.bf16.msra.mxu0 %v3798
      %5097 = vmatprep.subr.bf16.mxu0 %v3831
      %5098 = vmatpush1.bf16.msra.mxu0 %v3830
      %5099 = vmatprep.subr.bf16.mxu0 %v3863
      %5100 = vmatpush1.bf16.msra.mxu0 %v3862
      %5101 = vmatprep.subr.bf16.mxu0 %v3895
      %5102 = vmatpush1.bf16.msra.mxu0 %v3894
      %5103 = vmatprep.subr.bf16.mxu0 %v3927
      %5104 = vmatpush1.bf16.msra.mxu0 %v3926
      %5105 = vmatprep.subr.bf16.mxu0 %v3959
      %5106 = vmatpush1.bf16.msra.mxu0 %v3958
      %5107 = vmatprep.subr.bf16.mxu0 %v3991
      %5108 = vmatpush1.bf16.msra.mxu0 %v3990
      %5109 = vmatprep.subr.bf16.mxu0 %v4023
      %5110 = vmatpush1.bf16.msra.mxu0 %v4022
      %5111 = vmatprep.subr.bf16.mxu0 %v4055
      %5112 = vmatpush1.bf16.msra.mxu0 %v4054
      %5113 = vmatprep.subr.bf16.mxu0 %v4087
      %5114 = vmatpush1.bf16.msra.mxu0 %v4086
      %5115 = vmatprep.subr.bf16.mxu0 %v4119
      %5116 = vmatpush1.bf16.msra.mxu0 %v4118
      %5117 = vmatprep.subr.bf16.mxu0 %v4151
      %5118 = vmatpush1.bf16.msra.mxu0 %v4150
      %5119 = vmatprep.subr.bf16.mxu0 %v4183
      %5120 = vmatpush1.bf16.msra.mxu0 %v4182
      %5121 = vmatprep.subr.bf16.mxu0 %v4215
      %5122 = vmatpush1.bf16.msra.mxu0 %v4214
      %5123 = vmatprep.subr.bf16.mxu0 %v4247
      %5124 = vmatpush1.bf16.msra.mxu0 %v4246
      %5125 = vmatprep.subr.bf16.mxu0 %v4279
      %5126 = vmatpush1.bf16.msra.mxu0 %v4278
      %5127 = vmatprep.mubr.bf16.mxu0 %v1735
      %5128 = vmatmul.mubr.bf16.gmra.mrb[0].mxu0 %v1734
      %v5129 = vpop.f32.mrb[0].mxu0
      %v5130 = vadd.f32 0.0, %v5129
      %v5131 = vpop.f32.mrb[0].mxu0
      %v5132 = vadd.f32 0.0, %v5131
      %v5133 = vpop.f32.mrb[0].mxu0
      %v5134 = vpop.f32.mrb[0].mxu0
      %5135 = vdwg.mxu0
      %5136 = vmatprep.subr.bf16.mxu0 %v3801
      %5137 = vmatpush1.bf16.msra.mxu0 %v3800
      %5138 = vmatprep.subr.bf16.mxu0 %v3833
      %5139 = vmatpush1.bf16.msra.mxu0 %v3832
      %5140 = vmatprep.subr.bf16.mxu0 %v3865
      %5141 = vmatpush1.bf16.msra.mxu0 %v3864
      %5142 = vmatprep.subr.bf16.mxu0 %v3897
      %5143 = vmatpush1.bf16.msra.mxu0 %v3896
      %5144 = vmatprep.subr.bf16.mxu0 %v3929
      %5145 = vmatpush1.bf16.msra.mxu0 %v3928
      %5146 = vmatprep.subr.bf16.mxu0 %v3961
      %5147 = vmatpush1.bf16.msra.mxu0 %v3960
      %5148 = vmatprep.subr.bf16.mxu0 %v3993
      %5149 = vmatpush1.bf16.msra.mxu0 %v3992
      %5150 = vmatprep.subr.bf16.mxu0 %v4025
      %5151 = vmatpush1.bf16.msra.mxu0 %v4024
      %5152 = vmatprep.subr.bf16.mxu0 %v4057
      %5153 = vmatpush1.bf16.msra.mxu0 %v4056
      %5154 = vmatprep.subr.bf16.mxu0 %v4089
      %5155 = vmatpush1.bf16.msra.mxu0 %v4088
      %5156 = vmatprep.subr.bf16.mxu0 %v4121
      %5157 = vmatpush1.bf16.msra.mxu0 %v4120
      %5158 = vmatprep.subr.bf16.mxu0 %v4153
      %5159 = vmatpush1.bf16.msra.mxu0 %v4152
      %5160 = vmatprep.subr.bf16.mxu0 %v4185
      %5161 = vmatpush1.bf16.msra.mxu0 %v4184
      %5162 = vmatprep.subr.bf16.mxu0 %v4217
      %5163 = vmatpush1.bf16.msra.mxu0 %v4216
      %5164 = vmatprep.subr.bf16.mxu0 %v4249
      %5165 = vmatpush1.bf16.msra.mxu0 %v4248
      %5166 = vmatprep.subr.bf16.mxu0 %v4281
      %5167 = vmatpush1.bf16.msra.mxu0 %v4280
      %5168 = vmatprep.mubr.bf16.mxu0 %v1735
      %5169 = vmatmul.mubr.bf16.gmra.mrb[0].mxu0 %v1734
      %v5170 = vpop.f32.mrb[0].mxu0
      %v5171 = vadd.f32 0.0, %v5170
      %v5172 = vpop.f32.mrb[0].mxu0
      %v5173 = vadd.f32 0.0, %v5172
      %v5174 = vpop.f32.mrb[0].mxu0
      %v5175 = vpop.f32.mrb[0].mxu0
      %5176 = vdwg.mxu0
      %5177 = vmatprep.subr.bf16.mxu0 %v3803
      %5178 = vmatpush1.bf16.msra.mxu0 %v3802
      %5179 = vmatprep.subr.bf16.mxu0 %v3835
      %5180 = vmatpush1.bf16.msra.mxu0 %v3834
      %5181 = vmatprep.subr.bf16.mxu0 %v3867
      %5182 = vmatpush1.bf16.msra.mxu0 %v3866
      %5183 = vmatprep.subr.bf16.mxu0 %v3899
      %5184 = vmatpush1.bf16.msra.mxu0 %v3898
      %5185 = vmatprep.subr.bf16.mxu0 %v3931
      %5186 = vmatpush1.bf16.msra.mxu0 %v3930
      %5187 = vmatprep.subr.bf16.mxu0 %v3963
      %5188 = vmatpush1.bf16.msra.mxu0 %v3962
      %5189 = vmatprep.subr.bf16.mxu0 %v3995
      %5190 = vmatpush1.bf16.msra.mxu0 %v3994
      %5191 = vmatprep.subr.bf16.mxu0 %v4027
      %5192 = vmatpush1.bf16.msra.mxu0 %v4026
      %5193 = vmatprep.subr.bf16.mxu0 %v4059
      %5194 = vmatpush1.bf16.msra.mxu0 %v4058
      %5195 = vmatprep.subr.bf16.mxu0 %v4091
      %5196 = vmatpush1.bf16.msra.mxu0 %v4090
      %5197 = vmatprep.subr.bf16.mxu0 %v4123
      %5198 = vmatpush1.bf16.msra.mxu0 %v4122
      %5199 = vmatprep.subr.bf16.mxu0 %v4155
      %5200 = vmatpush1.bf16.msra.mxu0 %v4154
      %5201 = vmatprep.subr.bf16.mxu0 %v4187
      %5202 = vmatpush1.bf16.msra.mxu0 %v4186
      %5203 = vmatprep.subr.bf16.mxu0 %v4219
      %5204 = vmatpush1.bf16.msra.mxu0 %v4218
      %5205 = vmatprep.subr.bf16.mxu0 %v4251
      %5206 = vmatpush1.bf16.msra.mxu0 %v4250
      %5207 = vmatprep.subr.bf16.mxu0 %v4283
      %5208 = vmatpush1.bf16.msra.mxu0 %v4282
      %5209 = vmatprep.mubr.bf16.mxu0 %v1735
      %5210 = vmatmul.mubr.bf16.gmra.mrb[0].mxu0 %v1734
      %v5211 = vpop.f32.mrb[0].mxu0
      %v5212 = vadd.f32 0.0, %v5211
      %v5213 = vpop.f32.mrb[0].mxu0
      %v5214 = vadd.f32 0.0, %v5213
      %v5215 = vpop.f32.mrb[0].mxu0
      %v5216 = vpop.f32.mrb[0].mxu0
      %5217 = vdwg.mxu0
      %5218 = vmatprep.subr.bf16.mxu0 %v3805
      %5219 = vmatpush1.bf16.msra.mxu0 %v3804
      %5220 = vmatprep.subr.bf16.mxu0 %v3837
      %5221 = vmatpush1.bf16.msra.mxu0 %v3836
      %5222 = vmatprep.subr.bf16.mxu0 %v3869
      %5223 = vmatpush1.bf16.msra.mxu0 %v3868
      %5224 = vmatprep.subr.bf16.mxu0 %v3901
      %5225 = vmatpush1.bf16.msra.mxu0 %v3900
      %5226 = vmatprep.subr.bf16.mxu0 %v3933
      %5227 = vmatpush1.bf16.msra.mxu0 %v3932
      %5228 = vmatprep.subr.bf16.mxu0 %v3965
      %5229 = vmatpush1.bf16.msra.mxu0 %v3964
      %5230 = vmatprep.subr.bf16.mxu0 %v3997
      %5231 = vmatpush1.bf16.msra.mxu0 %v3996
      %5232 = vmatprep.subr.bf16.mxu0 %v4029
      %5233 = vmatpush1.bf16.msra.mxu0 %v4028
      %5234 = vmatprep.subr.bf16.mxu0 %v4061
      %5235 = vmatpush1.bf16.msra.mxu0 %v4060
      %5236 = vmatprep.subr.bf16.mxu0 %v4093
      %5237 = vmatpush1.bf16.msra.mxu0 %v4092
      %5238 = vmatprep.subr.bf16.mxu0 %v4125
      %5239 = vmatpush1.bf16.msra.mxu0 %v4124
      %5240 = vmatprep.subr.bf16.mxu0 %v4157
      %5241 = vmatpush1.bf16.msra.mxu0 %v4156
      %5242 = vmatprep.subr.bf16.mxu0 %v4189
      %5243 = vmatpush1.bf16.msra.mxu0 %v4188
      %5244 = vmatprep.subr.bf16.mxu0 %v4221
      %5245 = vmatpush1.bf16.msra.mxu0 %v4220
      %5246 = vmatprep.subr.bf16.mxu0 %v4253
      %5247 = vmatpush1.bf16.msra.mxu0 %v4252
      %5248 = vmatprep.subr.bf16.mxu0 %v4285
      %5249 = vmatpush1.bf16.msra.mxu0 %v4284
      %5250 = vmatprep.mubr.bf16.mxu0 %v1735
      %5251 = vmatmul.mubr.bf16.gmra.mrb[0].mxu0 %v1734
      %v5252 = vpop.f32.mrb[0].mxu0
      %v5253 = vadd.f32 0.0, %v5252
      %v5254 = vpop.f32.mrb[0].mxu0
      %v5255 = vadd.f32 0.0, %v5254
      %v5256 = vpop.f32.mrb[0].mxu0
      %v5257 = vpop.f32.mrb[0].mxu0
      %5258 = vdwg.mxu0
      %5259 = vmatprep.subr.bf16.mxu0 %v3807
      %5260 = vmatpush1.bf16.msra.mxu0 %v3806
      %5261 = vmatprep.subr.bf16.mxu0 %v3839
      %5262 = vmatpush1.bf16.msra.mxu0 %v3838
      %5263 = vmatprep.subr.bf16.mxu0 %v3871
      %5264 = vmatpush1.bf16.msra.mxu0 %v3870
      %5265 = vmatprep.subr.bf16.mxu0 %v3903
      %5266 = vmatpush1.bf16.msra.mxu0 %v3902
      %5267 = vmatprep.subr.bf16.mxu0 %v3935
      %5268 = vmatpush1.bf16.msra.mxu0 %v3934
      %5269 = vmatprep.subr.bf16.mxu0 %v3967
      %5270 = vmatpush1.bf16.msra.mxu0 %v3966
      %5271 = vmatprep.subr.bf16.mxu0 %v3999
      %5272 = vmatpush1.bf16.msra.mxu0 %v3998
      %5273 = vmatprep.subr.bf16.mxu0 %v4031
      %5274 = vmatpush1.bf16.msra.mxu0 %v4030
      %5275 = vmatprep.subr.bf16.mxu0 %v4063
      %5276 = vmatpush1.bf16.msra.mxu0 %v4062
      %5277 = vmatprep.subr.bf16.mxu0 %v4095
      %5278 = vmatpush1.bf16.msra.mxu0 %v4094
      %5279 = vmatprep.subr.bf16.mxu0 %v4127
      %5280 = vmatpush1.bf16.msra.mxu0 %v4126
      %5281 = vmatprep.subr.bf16.mxu0 %v4159
      %5282 = vmatpush1.bf16.msra.mxu0 %v4158
      %5283 = vmatprep.subr.bf16.mxu0 %v4191
      %5284 = vmatpush1.bf16.msra.mxu0 %v4190
      %5285 = vmatprep.subr.bf16.mxu0 %v4223
      %5286 = vmatpush1.bf16.msra.mxu0 %v4222
      %5287 = vmatprep.subr.bf16.mxu0 %v4255
      %5288 = vmatpush1.bf16.msra.mxu0 %v4254
      %5289 = vmatprep.subr.bf16.mxu0 %v4287
      %5290 = vmatpush1.bf16.msra.mxu0 %v4286
      %5291 = vmatprep.mubr.bf16.mxu0 %v1735
      %5292 = vmatmul.mubr.bf16.gmra.mrb[0].mxu0 %v1734
      %v5293 = vpop.f32.mrb[0].mxu0
      %v5294 = vadd.f32 0.0, %v5293
      %v5295 = vpop.f32.mrb[0].mxu0
      %v5296 = vadd.f32 0.0, %v5295
      %v5297 = vpop.f32.mrb[0].mxu0
      %v5298 = vpop.f32.mrb[0].mxu0
      %5299 = vdwg.mxu0
      %5300 = vmatprep.subr.bf16.mxu0 %v3809
      %5301 = vmatpush1.bf16.msra.mxu0 %v3808
      %5302 = vmatprep.subr.bf16.mxu0 %v3841
      %5303 = vmatpush1.bf16.msra.mxu0 %v3840
      %5304 = vmatprep.subr.bf16.mxu0 %v3873
      %5305 = vmatpush1.bf16.msra.mxu0 %v3872
      %5306 = vmatprep.subr.bf16.mxu0 %v3905
      %5307 = vmatpush1.bf16.msra.mxu0 %v3904
      %5308 = vmatprep.subr.bf16.mxu0 %v3937
      %5309 = vmatpush1.bf16.msra.mxu0 %v3936
      %5310 = vmatprep.subr.bf16.mxu0 %v3969
      %5311 = vmatpush1.bf16.msra.mxu0 %v3968
      %5312 = vmatprep.subr.bf16.mxu0 %v4001
      %5313 = vmatpush1.bf16.msra.mxu0 %v4000
      %5314 = vmatprep.subr.bf16.mxu0 %v4033
      %5315 = vmatpush1.bf16.msra.mxu0 %v4032
      %5316 = vmatprep.subr.bf16.mxu0 %v4065
      %5317 = vmatpush1.bf16.msra.mxu0 %v4064
      %5318 = vmatprep.subr.bf16.mxu0 %v4097
      %5319 = vmatpush1.bf16.msra.mxu0 %v4096
      %5320 = vmatprep.subr.bf16.mxu0 %v4129
      %5321 = vmatpush1.bf16.msra.mxu0 %v4128
      %5322 = vmatprep.subr.bf16.mxu0 %v4161
      %5323 = vmatpush1.bf16.msra.mxu0 %v4160
      %5324 = vmatprep.subr.bf16.mxu0 %v4193
      %5325 = vmatpush1.bf16.msra.mxu0 %v4192
      %5326 = vmatprep.subr.bf16.mxu0 %v4225
      %5327 = vmatpush1.bf16.msra.mxu0 %v4224
      %5328 = vmatprep.subr.bf16.mxu0 %v4257
      %5329 = vmatpush1.bf16.msra.mxu0 %v4256
      %5330 = vmatprep.subr.bf16.mxu0 %v4289
      %5331 = vmatpush1.bf16.msra.mxu0 %v4288
      %5332 = vmatprep.mubr.bf16.mxu0 %v1735
      %5333 = vmatmul.mubr.bf16.gmra.mrb[0].mxu0 %v1734
      %v5334 = vpop.f32.mrb[0].mxu0
      %v5335 = vadd.f32 0.0, %v5334
      %v5336 = vpop.f32.mrb[0].mxu0
      %v5337 = vadd.f32 0.0, %v5336
      %v5338 = vpop.f32.mrb[0].mxu0
      %v5339 = vpop.f32.mrb[0].mxu0
      %5340 = vdwg.mxu0
      %5341 = vmatprep.subr.bf16.mxu0 %v3811
      %5342 = vmatpush1.bf16.msra.mxu0 %v3810
      %5343 = vmatprep.subr.bf16.mxu0 %v3843
      %5344 = vmatpush1.bf16.msra.mxu0 %v3842
      %5345 = vmatprep.subr.bf16.mxu0 %v3875
      %5346 = vmatpush1.bf16.msra.mxu0 %v3874
      %5347 = vmatprep.subr.bf16.mxu0 %v3907
      %5348 = vmatpush1.bf16.msra.mxu0 %v3906
      %5349 = vmatprep.subr.bf16.mxu0 %v3939
      %5350 = vmatpush1.bf16.msra.mxu0 %v3938
      %5351 = vmatprep.subr.bf16.mxu0 %v3971
      %5352 = vmatpush1.bf16.msra.mxu0 %v3970
      %5353 = vmatprep.subr.bf16.mxu0 %v4003
      %5354 = vmatpush1.bf16.msra.mxu0 %v4002
      %5355 = vmatprep.subr.bf16.mxu0 %v4035
      %5356 = vmatpush1.bf16.msra.mxu0 %v4034
      %5357 = vmatprep.subr.bf16.mxu0 %v4067
      %5358 = vmatpush1.bf16.msra.mxu0 %v4066
      %5359 = vmatprep.subr.bf16.mxu0 %v4099
      %5360 = vmatpush1.bf16.msra.mxu0 %v4098
      %5361 = vmatprep.subr.bf16.mxu0 %v4131
      %5362 = vmatpush1.bf16.msra.mxu0 %v4130
      %5363 = vmatprep.subr.bf16.mxu0 %v4163
      %5364 = vmatpush1.bf16.msra.mxu0 %v4162
      %5365 = vmatprep.subr.bf16.mxu0 %v4195
      %5366 = vmatpush1.bf16.msra.mxu0 %v4194
      %5367 = vmatprep.subr.bf16.mxu0 %v4227
      %5368 = vmatpush1.bf16.msra.mxu0 %v4226
      %5369 = vmatprep.subr.bf16.mxu0 %v4259
      %5370 = vmatpush1.bf16.msra.mxu0 %v4258
      %5371 = vmatprep.subr.bf16.mxu0 %v4291
      %5372 = vmatpush1.bf16.msra.mxu0 %v4290
      %5373 = vmatprep.mubr.bf16.mxu0 %v1735
      %5374 = vmatmul.mubr.bf16.gmra.mrb[0].mxu0 %v1734
      %v5375 = vpop.f32.mrb[0].mxu0
      %v5376 = vadd.f32 0.0, %v5375
      %v5377 = vpop.f32.mrb[0].mxu0
      %v5378 = vadd.f32 0.0, %v5377
      %v5379 = vpop.f32.mrb[0].mxu0
      %v5380 = vpop.f32.mrb[0].mxu0
      %5381 = vdwg.mxu0
      %5382 = vmatprep.subr.bf16.mxu0 %v3813
      %5383 = vmatpush1.bf16.msra.mxu0 %v3812
      %5384 = vmatprep.subr.bf16.mxu0 %v3845
      %5385 = vmatpush1.bf16.msra.mxu0 %v3844
      %5386 = vmatprep.subr.bf16.mxu0 %v3877
      %5387 = vmatpush1.bf16.msra.mxu0 %v3876
      %5388 = vmatprep.subr.bf16.mxu0 %v3909
      %5389 = vmatpush1.bf16.msra.mxu0 %v3908
      %5390 = vmatprep.subr.bf16.mxu0 %v3941
      %5391 = vmatpush1.bf16.msra.mxu0 %v3940
      %5392 = vmatprep.subr.bf16.mxu0 %v3973
      %5393 = vmatpush1.bf16.msra.mxu0 %v3972
      %5394 = vmatprep.subr.bf16.mxu0 %v4005
      %5395 = vmatpush1.bf16.msra.mxu0 %v4004
      %5396 = vmatprep.subr.bf16.mxu0 %v4037
      %5397 = vmatpush1.bf16.msra.mxu0 %v4036
      %5398 = vmatprep.subr.bf16.mxu0 %v4069
      %5399 = vmatpush1.bf16.msra.mxu0 %v4068
      %5400 = vmatprep.subr.bf16.mxu0 %v4101
      %5401 = vmatpush1.bf16.msra.mxu0 %v4100
      %5402 = vmatprep.subr.bf16.mxu0 %v4133
      %5403 = vmatpush1.bf16.msra.mxu0 %v4132
      %5404 = vmatprep.subr.bf16.mxu0 %v4165
      %5405 = vmatpush1.bf16.msra.mxu0 %v4164
      %5406 = vmatprep.subr.bf16.mxu0 %v4197
      %5407 = vmatpush1.bf16.msra.mxu0 %v4196
      %5408 = vmatprep.subr.bf16.mxu0 %v4229
      %5409 = vmatpush1.bf16.msra.mxu0 %v4228
      %5410 = vmatprep.subr.bf16.mxu0 %v4261
      %5411 = vmatpush1.bf16.msra.mxu0 %v4260
      %5412 = vmatprep.subr.bf16.mxu0 %v4293
      %5413 = vmatpush1.bf16.msra.mxu0 %v4292
      %5414 = vmatprep.mubr.bf16.mxu0 %v1735
      %5415 = vmatmul.mubr.bf16.gmra.mrb[0].mxu0 %v1734
      %v5416 = vpop.f32.mrb[0].mxu0
      %v5417 = vadd.f32 0.0, %v5416
      %v5418 = vpop.f32.mrb[0].mxu0
      %v5419 = vadd.f32 0.0, %v5418
      %v5420 = vpop.f32.mrb[0].mxu0
      %v5421 = vpop.f32.mrb[0].mxu0
      %5422 = vdwg.mxu0
      %5423 = vmatprep.subr.bf16.mxu0 %v3815
      %5424 = vmatpush1.bf16.msra.mxu0 %v3814
      %5425 = vmatprep.subr.bf16.mxu0 %v3847
      %5426 = vmatpush1.bf16.msra.mxu0 %v3846
      %5427 = vmatprep.subr.bf16.mxu0 %v3879
      %5428 = vmatpush1.bf16.msra.mxu0 %v3878
      %5429 = vmatprep.subr.bf16.mxu0 %v3911
      %5430 = vmatpush1.bf16.msra.mxu0 %v3910
      %5431 = vmatprep.subr.bf16.mxu0 %v3943
      %5432 = vmatpush1.bf16.msra.mxu0 %v3942
      %5433 = vmatprep.subr.bf16.mxu0 %v3975
      %5434 = vmatpush1.bf16.msra.mxu0 %v3974
      %5435 = vmatprep.subr.bf16.mxu0 %v4007
      %5436 = vmatpush1.bf16.msra.mxu0 %v4006
      %5437 = vmatprep.subr.bf16.mxu0 %v4039
      %5438 = vmatpush1.bf16.msra.mxu0 %v4038
      %5439 = vmatprep.subr.bf16.mxu0 %v4071
      %5440 = vmatpush1.bf16.msra.mxu0 %v4070
      %5441 = vmatprep.subr.bf16.mxu0 %v4103
      %5442 = vmatpush1.bf16.msra.mxu0 %v4102
      %5443 = vmatprep.subr.bf16.mxu0 %v4135
      %5444 = vmatpush1.bf16.msra.mxu0 %v4134
      %5445 = vmatprep.subr.bf16.mxu0 %v4167
      %5446 = vmatpush1.bf16.msra.mxu0 %v4166
      %5447 = vmatprep.subr.bf16.mxu0 %v4199
      %5448 = vmatpush1.bf16.msra.mxu0 %v4198
      %5449 = vmatprep.subr.bf16.mxu0 %v4231
      %5450 = vmatpush1.bf16.msra.mxu0 %v4230
      %5451 = vmatprep.subr.bf16.mxu0 %v4263
      %5452 = vmatpush1.bf16.msra.mxu0 %v4262
      %5453 = vmatprep.subr.bf16.mxu0 %v4295
      %5454 = vmatpush1.bf16.msra.mxu0 %v4294
      %5455 = vmatprep.mubr.bf16.mxu0 %v1735
      %5456 = vmatmul.mubr.bf16.gmra.mrb[0].mxu0 %v1734
      %v5457 = vpop.f32.mrb[0].mxu0
      %v5458 = vadd.f32 0.0, %v5457
      %v5459 = vpop.f32.mrb[0].mxu0
      %v5460 = vadd.f32 0.0, %v5459
      %v5461 = vpop.f32.mrb[0].mxu0
      %v5462 = vpop.f32.mrb[0].mxu0
      %5463 = vdwg.mxu0
      %5464 = vst [vmem:[%s251] sm:$0xff] %v4843
      %5465 = vst [vmem:[%s251 + $0x8] sm:$0xff] %v4845
      %5466 = vst [vmem:[%s251 + $0x10] sm:$0xff] %v4884
      %5467 = vst [vmem:[%s251 + $0x18] sm:$0xff] %v4886
      %5468 = vst [vmem:[%s251 + $0x20] sm:$0xff] %v4925
      %5469 = vst [vmem:[%s251 + $0x28] sm:$0xff] %v4927
      %5470 = vst [vmem:[%s251 + $0x30] sm:$0xff] %v4966
      %5471 = vst [vmem:[%s251 + $0x38] sm:$0xff] %v4968
      %5472 = vst [vmem:[%s251 + $0x40] sm:$0xff] %v5007
      %5473 = vst [vmem:[%s251 + $0x48] sm:$0xff] %v5009
      %5474 = vst [vmem:[%s251 + $0x50] sm:$0xff] %v5048
      %5475 = vst [vmem:[%s251 + $0x58] sm:$0xff] %v5050
      %5476 = vst [vmem:[%s251 + $0x60] sm:$0xff] %v5089
      %5477 = vst [vmem:[%s251 + $0x68] sm:$0xff] %v5091
      %5478 = vst [vmem:[%s251 + $0x70] sm:$0xff] %v5130
      %5479 = vst [vmem:[%s251 + $0x78] sm:$0xff] %v5132
      %5480 = vst [vmem:[%s251 + $0x80] sm:$0xff] %v5171
      %5481 = vst [vmem:[%s251 + $0x88] sm:$0xff] %v5173
      %5482 = vst [vmem:[%s251 + $0x90] sm:$0xff] %v5212
      %5483 = vst [vmem:[%s251 + $0x98] sm:$0xff] %v5214
      %5484 = vst [vmem:[%s251 + $0xa0] sm:$0xff] %v5253
      %5485 = vst [vmem:[%s251 + $0xa8] sm:$0xff] %v5255
      %5486 = vst [vmem:[%s251 + $0xb0] sm:$0xff] %v5294
      %5487 = vst [vmem:[%s251 + $0xb8] sm:$0xff] %v5296
      %5488 = vst [vmem:[%s251 + $0xc0] sm:$0xff] %v5335
      %5489 = vst [vmem:[%s251 + $0xc8] sm:$0xff] %v5337
      %5490 = vst [vmem:[%s251 + $0xd0] sm:$0xff] %v5376
      %5491 = vst [vmem:[%s251 + $0xd8] sm:$0xff] %v5378
      %5492 = vst [vmem:[%s251 + $0xe0] sm:$0xff] %v5417
      %5493 = vst [vmem:[%s251 + $0xe8] sm:$0xff] %v5419
      %5494 = vst [vmem:[%s251 + $0xf0] sm:$0xff] %v5458
      %5495 = vst [vmem:[%s251 + $0xf8] sm:$0xff] %v5460
      %p5496 = scmp.lt.s32.totalorder %s17, 1
      %s5497 = scalar_select %p5496, %s17, 1
      %s5498 = smul.addr %s5497, 32
      %s5499 = smul.addr %s5498, 8
      %s5500 = scalar_lea.vmem %s6, %s5499
      // Predicated region
      $region45: #{danet_head_forward.1} parent=43 // pred_check
        %p5501 = pneg %p166
      $region46: #{danet_head_forward.1} parent=43 // pred_check_branch
        %5503 = sbr.rel (%p5501) target = $region48
      $region47: #{danet_head_forward.1} parent=43 // pred_region
        _
      $region48: #{danet_head_forward.1} parent=43 // pred_fallthru
        _
    $region44: #{danet_head_forward.1} parent=5 // pred_fallthru
      _
    %p5504 = scmp.le.s32.totalorder 2, %s12
    // Predicated region
    $region49: #{danet_head_forward.1} parent=5 // pred_check
      %p5505 = pneg %p5504
    $region50: #{danet_head_forward.1} parent=5 // pred_check_branch
      %5507 = sbr.rel (%p5505) target = $region52
    $region51: #{danet_head_forward.1} parent=5 // pred_region
      %s5508 = ssub.s32 %s12, 2
      // Predicated region
      $region53: #{danet_head_forward.1} parent=51 // pred_check
        %p5509 = pneg %p172
      $region54: #{danet_head_forward.1} parent=51 // pred_check_branch
        %5511 = sbr.rel (%p5509) target = $region56
      $region55: #{danet_head_forward.1} parent=51 // pred_region
        %p5512 = scmp.lt.s32.totalorder %s18, 1
        %s5513 = scalar_select %p5512, %s18, 1
        %s5514 = smul.addr %s5513, 32
        %s5515 = smul.addr %s5514, 8
        %s5516 = scalar_lea.vmem %s6, %s5515
      $region56: #{danet_head_forward.1} parent=51 // pred_fallthru
        _
    $region52: #{danet_head_forward.1} parent=5 // pred_fallthru
      _
  $region6: #{danet_head_forward.1} parent=0 // loop_footer
    %s16 = sadd.s32 1, %s12
  $region7: #{danet_head_forward.1} parent=0 // loop_footer_branch
    %11 = sbr.rel target = $region3
  $region8: #{danet_head_forward.1} parent=0 // loop_exit
    _

</llo_original>
